<compile_context>
chip_gen: v6e
topology: v6e:2x2x1
jax: 0.10.0
libtpu: 0.0.40
codegen_flags: <defaults>
</compile_context>

<pallas_src>
import functools

import jax
import jax.numpy as jnp
from jax.experimental import pallas as pl
from jax.experimental.pallas import tpu as pltpu

# ---------------- configuration (small, shapes consistent with the module) ----
BATCH = 2           # batch_size
MAX_EP_LEN = 8      # args.max_episode_length  (sequence length L)
HIDDEN = 32         # args.hidden_size == args.k_hidden_size == args.embedding_size
N_HEADS = 4         # args.k_n_heads
FFN = 64            # args.k_ffn_size
N_LAYERS = 2        # args.k_n_layers
HEAD_DIM = HIDDEN // N_HEADS
LN_EPS = 1e-5


# ---------------------------- in-kernel helpers --------------------------------
def _layer_norm(x, g, b):
    mu = jnp.mean(x, axis=-1, keepdims=True)
    var = jnp.mean((x - mu) * (x - mu), axis=-1, keepdims=True)
    return (x - mu) * jax.lax.rsqrt(var + LN_EPS) * g + b


def _gelu(x):
    # TODO(synk): PyTorch F.gelu uses the exact erf form; tanh approximation is used
    # here (erf is not guaranteed to lower in Mosaic); numerical diff is ~1e-3.
    c = 0.7978845608028654  # sqrt(2/pi)
    return 0.5 * x * (1.0 + jnp.tanh(c * (x + 0.044715 * x * x * x)))


# ------------------------------- the kernel ------------------------------------
def discriminator_kernel(
    x_ref, mask_ref, ctx_ref, user_ref, sys_ref,
    wqkv_ref, bqkv_ref, wo_ref, bo_ref,
    w1_ref, b1_ref, w2_ref, b2_ref,
    ln_ref, enc_norm_ref, wproj_ref, bproj_ref,
    out_ref,
    attn_ctx_ref,                       # VMEM scratch (L, H)
    *, n_heads, n_layers,
):
    H = x_ref.shape[-1]
    dh = H // n_heads

    x = x_ref[...]            # (L, H)  transformer input embeddings for one episode
    mask = mask_ref[...]      # (L, L)  additive causal mask (0 / -1e9)

    for l in range(n_layers):
        # fused QKV projection: one MXU push, 96-lane output.
        # (the 1/sqrt(dh) scale is pre-folded into the Q columns in glue)
        qkv = jnp.dot(x, wqkv_ref[l], preferred_element_type=jnp.float32) + bqkv_ref[l]
        q = qkv[:, :H]
        k = qkv[:, H:2 * H]
        v = qkv[:, 2 * H:]

        # multi-head causal self-attention; head outputs written straight into
        # VMEM scratch (no list building / concatenation).
        for h in range(n_heads):
            c0 = h * dh
            qh = q[:, c0:c0 + dh]
            kh = k[:, c0:c0 + dh]
            vh = v[:, c0:c0 + dh]
            s = jax.lax.dot_general(
                qh, kh, (((1,), (1,)), ((), ())),
                preferred_element_type=jnp.float32) + mask
            m = jnp.max(s, axis=-1, keepdims=True)
            e = jnp.exp(s - m)
            p = e * pl.reciprocal(jnp.sum(e, axis=-1, keepdims=True), approx=True)
            attn_ctx_ref[:, c0:c0 + dh] = jnp.dot(
                p, vh, preferred_element_type=jnp.float32)

        attn_out = jnp.dot(attn_ctx_ref[...], wo_ref[l],
                           preferred_element_type=jnp.float32) + bo_ref[l]
        ln = ln_ref[l]                                            # (4, H): g1,b1,g2,b2
        x = _layer_norm(x + attn_out, ln[0], ln[1])

        hmid = _gelu(jnp.dot(x, w1_ref[l],
                             preferred_element_type=jnp.float32) + b1_ref[l])
        ffn = jnp.dot(hmid, w2_ref[l],
                      preferred_element_type=jnp.float32) + b2_ref[l]
        x = _layer_norm(x + ffn, ln[2], ln[3])

    # final encoder norm (LayerNorm(hidden_size) passed as `norm=` to the encoder)
    enc = enc_norm_ref[...]                                       # (2, H)
    state = _layer_norm(x, enc[0], enc[1])                        # (L, H)

    # fusion + project_f as VPU multiply + lane reduce.  wproj_ref rows are the
    # effective blocks [w_state, w_ctx, w_user + w_diff, w_sys - w_diff], so the
    # (u - sv) concat term is already folded in (done once in glue).
    wp = wproj_ref[...]                                           # (4, H)
    z = (state * wp[0] + ctx_ref[...] * wp[1]
         + user_ref[...] * wp[2] + sys_ref[...] * wp[3])          # (L, H)
    logit = jnp.sum(z, axis=-1, keepdims=True) + bproj_ref[...]   # (L, 1)

    # lane-dense output slab (unmasked stores); glue slices lane 0.
    out_ref[...] = jnp.broadcast_to(logit, out_ref.shape)


# ------------------------------- wrapper (glue) ---------------------------------
def student_initiative_discriminator(params, context_pooling, knowledge_pooling_use,
                                     episode_mask, user_attention_vector,
                                     system_attention_vector):
    B, L = episode_mask.shape
    H = params["turn_emb"].shape[-1]
    dh = H // N_HEADS

    # start token + shifted knowledge pooling, plus turn embeddings (glue)
    start = jnp.broadcast_to(params["start_emb"][0][None, None, :], (B, 1, H))
    input_embedding = jnp.concatenate([start, knowledge_pooling_use[:, :L - 1]], axis=1)
    input_embedding = input_embedding + params["turn_emb"][:L][None, :, :]   # (B, L, H)
    x2 = input_embedding.reshape(B * L, H).astype(jnp.float32)

    # _generate_square_subsequent_mask: 0 on/below diagonal, -inf above (here -1e9,
    # which underflows to exactly 0 probability in fp32 softmax — identical result).
    row = jnp.arange(L)
    mask = jnp.where(row[None, :] > row[:, None], -1e9, 0.0).astype(jnp.float32)

    # fold the 1/sqrt(dh) attention scale into the Q columns of the fused QKV params
    scale = 1.0 / (dh ** 0.5)
    col_scale = jnp.concatenate(
        [jnp.full((H,), scale, jnp.float32), jnp.ones((2 * H,), jnp.float32)])
    wqkv = params["wqkv"] * col_scale[None, None, :]      # (Lyr, H, 3H)
    bqkv = params["bqkv"] * col_scale[None, :]            # (Lyr, 3H)

    # split project_f weight (5H, 1) into 4 effective (H,) blocks; fold the
    # (user - system) term into the user / system blocks.
    wp = params["wproj"][:, 0]
    w_state, w_ctx, w_user, w_sys, w_diff = jnp.split(wp, 5)
    wproj_folded = jnp.stack(
        [w_state, w_ctx, w_user + w_diff, w_sys - w_diff]).astype(jnp.float32)

    kernel = functools.partial(discriminator_kernel,
                               n_heads=N_HEADS, n_layers=N_LAYERS)

    def full(*shape):
        return pl.BlockSpec(shape, lambda b: (0,) * len(shape))

    rowblk = pl.BlockSpec((L, H), lambda b: (b, 0))

    logits_slab = pl.pallas_call(
        kernel,
        out_shape=jax.ShapeDtypeStruct((B * L, 128), jnp.float32),
        grid_spec=pltpu.PrefetchScalarGridSpec(
            num_scalar_prefetch=0,
            grid=(B,),
            in_specs=[
                rowblk,                       # x2 (per-episode rows)
                full(L, L),                   # causal mask (shared)
                rowblk, rowblk, rowblk,       # context / user / system pooling
                full(N_LAYERS, H, 3 * H),     # fused Wqkv
                full(N_LAYERS, 3 * H),        # fused bqkv
                full(N_LAYERS, H, H),         # Wo
                full(N_LAYERS, H),            # bo
                full(N_LAYERS, H, FFN),       # W1
                full(N_LAYERS, FFN),          # b1
                full(N_LAYERS, FFN, H),       # W2
                full(N_LAYERS, H),            # b2
                full(N_LAYERS, 4, H),         # per-layer LN params
                full(2, H),                   # final encoder LN
                full(4, H),                   # folded project_f weight blocks
                full(1, 1),                   # project_f bias
            ],
            out_specs=pl.BlockSpec((L, 128), lambda b: (b, 0)),
            scratch_shapes=[pltpu.VMEM((L, H), jnp.float32)],
        ),
        compiler_params=pltpu.CompilerParams(
            dimension_semantics=("parallel",)),   # 2-TC split on v7x, neutral elsewhere
    )(
        x2, mask,
        context_pooling.astype(jnp.float32),
        user_attention_vector.astype(jnp.float32),
        system_attention_vector.astype(jnp.float32),
        wqkv, bqkv, params["wo"], params["bo"],
        params["w1"], params["b1"], params["w2"], params["b2"],
        params["ln"], params["enc_norm"], wproj_folded, params["bproj"],
    )

    fusion_pro = logits_slab[:, :1]               # (B*L, 1) logits
    user_prob = jax.nn.sigmoid(fusion_pro)        # sigmoid in glue (cheaper than a
    return user_prob, fusion_pro                  # second masked kernel output)


# ------------------------------- parameter init ----------------------------------
def init_params(key):
    ks = jax.random.split(key, 12)
    n = lambda k, shape, s=0.02: (s * jax.random.normal(k, shape)).astype(jnp.float32)
    params = {
        # transformer layer weights, stored (in, out) for right-multiplication;
        # QKV pre-concatenated along the output dim (q | k | v).
        "wqkv": n(ks[0], (N_LAYERS, HIDDEN, 3 * HIDDEN)),
        "bqkv": n(ks[1], (N_LAYERS, 3 * HIDDEN)),
        "wo":   n(ks[2], (N_LAYERS, HIDDEN, HIDDEN)),
        "bo":   n(ks[3], (N_LAYERS, HIDDEN)),
        "w1":   n(ks[4], (N_LAYERS, HIDDEN, FFN)),
        "b1":   n(ks[5], (N_LAYERS, FFN)),
        "w2":   n(ks[6], (N_LAYERS, FFN, HIDDEN)),
        "b2":   n(ks[7], (N_LAYERS, HIDDEN)),
        # per-layer LayerNorms: rows [gamma1, beta1, gamma2, beta2]
        "ln": jnp.zeros((N_LAYERS, 4, HIDDEN), jnp.float32)
                 .at[:, 0].set(1.0).at[:, 2].set(1.0),
        # final encoder LayerNorm: rows [gamma, beta]
        "enc_norm": jnp.zeros((2, HIDDEN), jnp.float32).at[0].set(1.0),
        # project_f: Linear(5*H, 1), stored (5H, 1)
        "wproj": n(ks[8], (5 * HIDDEN, 1)),
        "bproj": jnp.zeros((1, 1), jnp.float32),
        # embeddings
        "turn_emb":  n(ks[9], (MAX_EP_LEN, HIDDEN), 1.0),
        "start_emb": n(ks[10], (1, HIDDEN), 1.0),
    }
    return params


# ------------------------------------ main ---------------------------------------
if __name__ == "__main__":
    key = jax.random.PRNGKey(0)
    kp, k1, k2, k3, k4 = jax.random.split(key, 5)

    params = init_params(kp)

    B, L, H = BATCH, MAX_EP_LEN, HIDDEN
    knowledge_pooling_use = jax.random.normal(k1, (B, L, H), jnp.float32)
    context_pooling = jax.random.normal(k2, (B * L, H), jnp.float32)
    user_attention_vector = jax.random.normal(k3, (B * L, H), jnp.float32)
    system_attention_vector = jax.random.normal(k4, (B * L, H), jnp.float32)
    episode_mask = jnp.ones((B, L), jnp.float32)   # only its shape is used

    fwd = jax.jit(student_initiative_discriminator)
    user_prob, fusion_pro = fwd(params, context_pooling, knowledge_pooling_use,
                                episode_mask, user_attention_vector,
                                system_attention_vector)
    jax.block_until_ready((user_prob, fusion_pro))

    assert user_prob.shape == (B * L, 1) and fusion_pro.shape == (B * L, 1)
    assert bool(jnp.all(jnp.isfinite(user_prob))) and bool(jnp.all(jnp.isfinite(fusion_pro)))
    print("KERNEL_OK")
</pallas_src>

<mosaic_0001>
module attributes {stable_mosaic.version = 11 : i64} {
  func.func @discriminator_kernel(%arg0: i32, %arg1: memref<8x32xf32, #tpu.memory_space<vmem>>, %arg2: memref<8x8xf32, #tpu.memory_space<vmem>>, %arg3: memref<8x32xf32, #tpu.memory_space<vmem>>, %arg4: memref<8x32xf32, #tpu.memory_space<vmem>>, %arg5: memref<8x32xf32, #tpu.memory_space<vmem>>, %arg6: memref<2x32x96xf32, #tpu.memory_space<vmem>>, %arg7: memref<2x96xf32, #tpu.memory_space<vmem>>, %arg8: memref<2x32x32xf32, #tpu.memory_space<vmem>>, %arg9: memref<2x32xf32, #tpu.memory_space<vmem>>, %arg10: memref<2x32x64xf32, #tpu.memory_space<vmem>>, %arg11: memref<2x64xf32, #tpu.memory_space<vmem>>, %arg12: memref<2x64x32xf32, #tpu.memory_space<vmem>>, %arg13: memref<2x32xf32, #tpu.memory_space<vmem>>, %arg14: memref<2x4x32xf32, #tpu.memory_space<vmem>>, %arg15: memref<2x32xf32, #tpu.memory_space<vmem>>, %arg16: memref<4x32xf32, #tpu.memory_space<vmem>>, %arg17: memref<1x1xf32, #tpu.memory_space<vmem>>, %arg18: memref<8x128xf32, #tpu.memory_space<vmem>>, %arg19: memref<8x32xf32, #tpu.memory_space<vmem>>) attributes {dimension_semantics = [#tpu.dimension_semantics<parallel>], iteration_bounds = array<i64: 2>, scalar_prefetch = 0 : i64, scratch_operands = 1 : i64, tpu.core_type = #tpu.core_type<tc>, window_params = [{transform_indices = @transform_0, window_bounds = array<i64: 8, 32>}, {pipeline_mode = #tpu.pipeline_mode<synchronous>, transform_indices = @transform_1, window_bounds = array<i64: 8, 8>}, {transform_indices = @transform_2, window_bounds = array<i64: 8, 32>}, {transform_indices = @transform_3, window_bounds = array<i64: 8, 32>}, {transform_indices = @transform_4, window_bounds = array<i64: 8, 32>}, {pipeline_mode = #tpu.pipeline_mode<synchronous>, transform_indices = @transform_5, window_bounds = array<i64: 2, 32, 96>}, {pipeline_mode = #tpu.pipeline_mode<synchronous>, transform_indices = @transform_6, window_bounds = array<i64: 2, 96>}, {pipeline_mode = #tpu.pipeline_mode<synchronous>, transform_indices = @transform_7, window_bounds = array<i64: 2, 32, 32>}, {pipeline_mode = #tpu.pipeline_mode<synchronous>, transform_indices = @transform_8, window_bounds = array<i64: 2, 32>}, {pipeline_mode = #tpu.pipeline_mode<synchronous>, transform_indices = @transform_9, window_bounds = array<i64: 2, 32, 64>}, {pipeline_mode = #tpu.pipeline_mode<synchronous>, transform_indices = @transform_10, window_bounds = array<i64: 2, 64>}, {pipeline_mode = #tpu.pipeline_mode<synchronous>, transform_indices = @transform_11, window_bounds = array<i64: 2, 64, 32>}, {pipeline_mode = #tpu.pipeline_mode<synchronous>, transform_indices = @transform_12, window_bounds = array<i64: 2, 32>}, {pipeline_mode = #tpu.pipeline_mode<synchronous>, transform_indices = @transform_13, window_bounds = array<i64: 2, 4, 32>}, {pipeline_mode = #tpu.pipeline_mode<synchronous>, transform_indices = @transform_14, window_bounds = array<i64: 2, 32>}, {pipeline_mode = #tpu.pipeline_mode<synchronous>, transform_indices = @transform_15, window_bounds = array<i64: 4, 32>}, {pipeline_mode = #tpu.pipeline_mode<synchronous>, transform_indices = @transform_16, window_bounds = array<i64: 1, 1>}, {transform_indices = @transform_17, window_bounds = array<i64: 8, 128>}]} {
    %c0 = arith.constant 0 : index
    %c0_0 = arith.constant 0 : index
    %0 = vector.load %arg1[%c0, %c0_0] : memref<8x32xf32, #tpu.memory_space<vmem>>, vector<8x32xf32>
    %c0_1 = arith.constant 0 : index
    %c0_2 = arith.constant 0 : index
    %1 = vector.load %arg2[%c0_1, %c0_2] : memref<8x8xf32, #tpu.memory_space<vmem>>, vector<8x8xf32>
    %c0_3 = arith.constant 0 : index
    %c0_4 = arith.constant 0 : index
    %c0_5 = arith.constant 0 : index
    %2 = vector.load %arg6[%c0_3, %c0_4, %c0_5] : memref<2x32x96xf32, #tpu.memory_space<vmem>>, vector<1x32x96xf32>
    %3 = vector.shape_cast %2 : vector<1x32x96xf32> to vector<32x96xf32>
    %cst = arith.constant dense<0.000000e+00> : vector<8x96xf32>
    %4 = tpu.matmul %0, %3, %cst {dimension_numbers = #tpu.dot_dimension_numbers<[1], [0], [0], [1], [0, 0, 1, 1], [], []>} : vector<8x32xf32>, vector<32x96xf32>, vector<8x96xf32> -> vector<8x96xf32>
    %c0_6 = arith.constant 0 : index
    %c0_7 = arith.constant 0 : index
    %5 = vector.load %arg7[%c0_6, %c0_7] : memref<2x96xf32, #tpu.memory_space<vmem>>, vector<1x96xf32>
    %6 = vector.shape_cast %5 : vector<1x96xf32> to vector<96xf32>
    %7 = vector.shape_cast %6 : vector<96xf32> to vector<1x96xf32>
    %8 = vector.broadcast %7 : vector<1x96xf32> to vector<8x96xf32>
    %9 = arith.addf %4, %8 : vector<8x96xf32>
    %10 = vector.extract_strided_slice %9 {offsets = [0, 0], sizes = [8, 32], strides = [1, 1]} : vector<8x96xf32> to vector<8x32xf32>
    %11 = vector.extract_strided_slice %9 {offsets = [0, 32], sizes = [8, 32], strides = [1, 1]} : vector<8x96xf32> to vector<8x32xf32>
    %12 = vector.extract_strided_slice %9 {offsets = [0, 64], sizes = [8, 32], strides = [1, 1]} : vector<8x96xf32> to vector<8x32xf32>
    %13 = vector.extract_strided_slice %10 {offsets = [0, 0], sizes = [8, 8], strides = [1, 1]} : vector<8x32xf32> to vector<8x8xf32>
    %14 = vector.extract_strided_slice %11 {offsets = [0, 0], sizes = [8, 8], strides = [1, 1]} : vector<8x32xf32> to vector<8x8xf32>
    %15 = vector.extract_strided_slice %12 {offsets = [0, 0], sizes = [8, 8], strides = [1, 1]} : vector<8x32xf32> to vector<8x8xf32>
    %cst_8 = arith.constant dense<0.000000e+00> : vector<8x8xf32>
    %16 = tpu.matmul %13, %14, %cst_8 {dimension_numbers = #tpu.dot_dimension_numbers<[1], [1], [0], [0], [0, 0, 1, 0], [], []>} : vector<8x8xf32>, vector<8x8xf32>, vector<8x8xf32> -> vector<8x8xf32>
    %17 = arith.addf %16, %1 : vector<8x8xf32>
    %cst_9 = arith.constant dense<0xFF800000> : vector<8xf32>
    %18 = vector.multi_reduction <maximumf>, %17, %cst_9 [1] : vector<8x8xf32> to vector<8xf32>
    %19 = vector.shape_cast %18 : vector<8xf32> to vector<8x1xf32>
    %20 = vector.broadcast %19 : vector<8x1xf32> to vector<8x8xf32>
    %21 = arith.subf %17, %20 : vector<8x8xf32>
    %22 = math.exp %21 : vector<8x8xf32>
    %cst_10 = arith.constant dense<0.000000e+00> : vector<8xf32>
    %23 = vector.multi_reduction <add>, %22, %cst_10 [1] : vector<8x8xf32> to vector<8xf32>
    %24 = vector.shape_cast %23 : vector<8xf32> to vector<8x1xf32>
    %25 = tpu.reciprocal %24 {approx = true} : vector<8x1xf32> -> vector<8x1xf32>
    %26 = vector.broadcast %25 : vector<8x1xf32> to vector<8x8xf32>
    %27 = arith.mulf %22, %26 : vector<8x8xf32>
    %cst_11 = arith.constant dense<0.000000e+00> : vector<8x8xf32>
    %28 = tpu.matmul %27, %15, %cst_11 {dimension_numbers = #tpu.dot_dimension_numbers<[1], [0], [0], [1], [0, 0, 1, 1], [], []>} : vector<8x8xf32>, vector<8x8xf32>, vector<8x8xf32> -> vector<8x8xf32>
    %c0_12 = arith.constant 0 : index
    %c0_13 = arith.constant 0 : index
    %29 = vector.load %arg19[%c0_12, %c0_13] : memref<8x32xf32, #tpu.memory_space<vmem>>, vector<8x8xf32>
    tpu.vector_store %arg19[%c0_12, %c0_13], %28 {strides = array<i32>} : memref<8x32xf32, #tpu.memory_space<vmem>>, vector<8x8xf32>,
    %30 = vector.extract_strided_slice %10 {offsets = [0, 8], sizes = [8, 8], strides = [1, 1]} : vector<8x32xf32> to vector<8x8xf32>
    %31 = vector.extract_strided_slice %11 {offsets = [0, 8], sizes = [8, 8], strides = [1, 1]} : vector<8x32xf32> to vector<8x8xf32>
    %32 = vector.extract_strided_slice %12 {offsets = [0, 8], sizes = [8, 8], strides = [1, 1]} : vector<8x32xf32> to vector<8x8xf32>
    %cst_14 = arith.constant dense<0.000000e+00> : vector<8x8xf32>
    %33 = tpu.matmul %30, %31, %cst_14 {dimension_numbers = #tpu.dot_dimension_numbers<[1], [1], [0], [0], [0, 0, 1, 0], [], []>} : vector<8x8xf32>, vector<8x8xf32>, vector<8x8xf32> -> vector<8x8xf32>
    %34 = arith.addf %33, %1 : vector<8x8xf32>
    %cst_15 = arith.constant dense<0xFF800000> : vector<8xf32>
    %35 = vector.multi_reduction <maximumf>, %34, %cst_15 [1] : vector<8x8xf32> to vector<8xf32>
    %36 = vector.shape_cast %35 : vector<8xf32> to vector<8x1xf32>
    %37 = vector.broadcast %36 : vector<8x1xf32> to vector<8x8xf32>
    %38 = arith.subf %34, %37 : vector<8x8xf32>
    %39 = math.exp %38 : vector<8x8xf32>
    %cst_16 = arith.constant dense<0.000000e+00> : vector<8xf32>
    %40 = vector.multi_reduction <add>, %39, %cst_16 [1] : vector<8x8xf32> to vector<8xf32>
    %41 = vector.shape_cast %40 : vector<8xf32> to vector<8x1xf32>
    %42 = tpu.reciprocal %41 {approx = true} : vector<8x1xf32> -> vector<8x1xf32>
    %43 = vector.broadcast %42 : vector<8x1xf32> to vector<8x8xf32>
    %44 = arith.mulf %39, %43 : vector<8x8xf32>
    %cst_17 = arith.constant dense<0.000000e+00> : vector<8x8xf32>
    %45 = tpu.matmul %44, %32, %cst_17 {dimension_numbers = #tpu.dot_dimension_numbers<[1], [0], [0], [1], [0, 0, 1, 1], [], []>} : vector<8x8xf32>, vector<8x8xf32>, vector<8x8xf32> -> vector<8x8xf32>
    %c0_18 = arith.constant 0 : index
    %c8 = arith.constant 8 : index
    %46 = vector.load %arg19[%c0_18, %c8] : memref<8x32xf32, #tpu.memory_space<vmem>>, vector<8x8xf32>
    tpu.vector_store %arg19[%c0_18, %c8], %45 {strides = array<i32>} : memref<8x32xf32, #tpu.memory_space<vmem>>, vector<8x8xf32>,
    %47 = vector.extract_strided_slice %10 {offsets = [0, 16], sizes = [8, 8], strides = [1, 1]} : vector<8x32xf32> to vector<8x8xf32>
    %48 = vector.extract_strided_slice %11 {offsets = [0, 16], sizes = [8, 8], strides = [1, 1]} : vector<8x32xf32> to vector<8x8xf32>
    %49 = vector.extract_strided_slice %12 {offsets = [0, 16], sizes = [8, 8], strides = [1, 1]} : vector<8x32xf32> to vector<8x8xf32>
    %cst_19 = arith.constant dense<0.000000e+00> : vector<8x8xf32>
    %50 = tpu.matmul %47, %48, %cst_19 {dimension_numbers = #tpu.dot_dimension_numbers<[1], [1], [0], [0], [0, 0, 1, 0], [], []>} : vector<8x8xf32>, vector<8x8xf32>, vector<8x8xf32> -> vector<8x8xf32>
    %51 = arith.addf %50, %1 : vector<8x8xf32>
    %cst_20 = arith.constant dense<0xFF800000> : vector<8xf32>
    %52 = vector.multi_reduction <maximumf>, %51, %cst_20 [1] : vector<8x8xf32> to vector<8xf32>
    %53 = vector.shape_cast %52 : vector<8xf32> to vector<8x1xf32>
    %54 = vector.broadcast %53 : vector<8x1xf32> to vector<8x8xf32>
    %55 = arith.subf %51, %54 : vector<8x8xf32>
    %56 = math.exp %55 : vector<8x8xf32>
    %cst_21 = arith.constant dense<0.000000e+00> : vector<8xf32>
    %57 = vector.multi_reduction <add>, %56, %cst_21 [1] : vector<8x8xf32> to vector<8xf32>
    %58 = vector.shape_cast %57 : vector<8xf32> to vector<8x1xf32>
    %59 = tpu.reciprocal %58 {approx = true} : vector<8x1xf32> -> vector<8x1xf32>
    %60 = vector.broadcast %59 : vector<8x1xf32> to vector<8x8xf32>
    %61 = arith.mulf %56, %60 : vector<8x8xf32>
    %cst_22 = arith.constant dense<0.000000e+00> : vector<8x8xf32>
    %62 = tpu.matmul %61, %49, %cst_22 {dimension_numbers = #tpu.dot_dimension_numbers<[1], [0], [0], [1], [0, 0, 1, 1], [], []>} : vector<8x8xf32>, vector<8x8xf32>, vector<8x8xf32> -> vector<8x8xf32>
    %c0_23 = arith.constant 0 : index
    %c16 = arith.constant 16 : index
    %63 = vector.load %arg19[%c0_23, %c16] : memref<8x32xf32, #tpu.memory_space<vmem>>, vector<8x8xf32>
    tpu.vector_store %arg19[%c0_23, %c16], %62 {strides = array<i32>} : memref<8x32xf32, #tpu.memory_space<vmem>>, vector<8x8xf32>,
    %64 = vector.extract_strided_slice %10 {offsets = [0, 24], sizes = [8, 8], strides = [1, 1]} : vector<8x32xf32> to vector<8x8xf32>
    %65 = vector.extract_strided_slice %11 {offsets = [0, 24], sizes = [8, 8], strides = [1, 1]} : vector<8x32xf32> to vector<8x8xf32>
    %66 = vector.extract_strided_slice %12 {offsets = [0, 24], sizes = [8, 8], strides = [1, 1]} : vector<8x32xf32> to vector<8x8xf32>
    %cst_24 = arith.constant dense<0.000000e+00> : vector<8x8xf32>
    %67 = tpu.matmul %64, %65, %cst_24 {dimension_numbers = #tpu.dot_dimension_numbers<[1], [1], [0], [0], [0, 0, 1, 0], [], []>} : vector<8x8xf32>, vector<8x8xf32>, vector<8x8xf32> -> vector<8x8xf32>
    %68 = arith.addf %67, %1 : vector<8x8xf32>
    %cst_25 = arith.constant dense<0xFF800000> : vector<8xf32>
    %69 = vector.multi_reduction <maximumf>, %68, %cst_25 [1] : vector<8x8xf32> to vector<8xf32>
    %70 = vector.shape_cast %69 : vector<8xf32> to vector<8x1xf32>
    %71 = vector.broadcast %70 : vector<8x1xf32> to vector<8x8xf32>
    %72 = arith.subf %68, %71 : vector<8x8xf32>
    %73 = math.exp %72 : vector<8x8xf32>
    %cst_26 = arith.constant dense<0.000000e+00> : vector<8xf32>
    %74 = vector.multi_reduction <add>, %73, %cst_26 [1] : vector<8x8xf32> to vector<8xf32>
    %75 = vector.shape_cast %74 : vector<8xf32> to vector<8x1xf32>
    %76 = tpu.reciprocal %75 {approx = true} : vector<8x1xf32> -> vector<8x1xf32>
    %77 = vector.broadcast %76 : vector<8x1xf32> to vector<8x8xf32>
    %78 = arith.mulf %73, %77 : vector<8x8xf32>
    %cst_27 = arith.constant dense<0.000000e+00> : vector<8x8xf32>
    %79 = tpu.matmul %78, %66, %cst_27 {dimension_numbers = #tpu.dot_dimension_numbers<[1], [0], [0], [1], [0, 0, 1, 1], [], []>} : vector<8x8xf32>, vector<8x8xf32>, vector<8x8xf32> -> vector<8x8xf32>
    %c0_28 = arith.constant 0 : index
    %c24 = arith.constant 24 : index
    %80 = vector.load %arg19[%c0_28, %c24] : memref<8x32xf32, #tpu.memory_space<vmem>>, vector<8x8xf32>
    tpu.vector_store %arg19[%c0_28, %c24], %79 {strides = array<i32>} : memref<8x32xf32, #tpu.memory_space<vmem>>, vector<8x8xf32>,
    %c0_29 = arith.constant 0 : index
    %c0_30 = arith.constant 0 : index
    %81 = vector.load %arg19[%c0_29, %c0_30] : memref<8x32xf32, #tpu.memory_space<vmem>>, vector<8x32xf32>
    %c0_31 = arith.constant 0 : index
    %c0_32 = arith.constant 0 : index
    %c0_33 = arith.constant 0 : index
    %82 = vector.load %arg8[%c0_31, %c0_32, %c0_33] : memref<2x32x32xf32, #tpu.memory_space<vmem>>, vector<1x32x32xf32>
    %83 = vector.shape_cast %82 : vector<1x32x32xf32> to vector<32x32xf32>
    %cst_34 = arith.constant dense<0.000000e+00> : vector<8x32xf32>
    %84 = tpu.matmul %81, %83, %cst_34 {dimension_numbers = #tpu.dot_dimension_numbers<[1], [0], [0], [1], [0, 0, 1, 1], [], []>} : vector<8x32xf32>, vector<32x32xf32>, vector<8x32xf32> -> vector<8x32xf32>
    %c0_35 = arith.constant 0 : index
    %c0_36 = arith.constant 0 : index
    %85 = vector.load %arg9[%c0_35, %c0_36] : memref<2x32xf32, #tpu.memory_space<vmem>>, vector<1x32xf32>
    %86 = vector.shape_cast %85 : vector<1x32xf32> to vector<32xf32>
    %87 = vector.shape_cast %86 : vector<32xf32> to vector<1x32xf32>
    %88 = vector.broadcast %87 : vector<1x32xf32> to vector<8x32xf32>
    %89 = arith.addf %84, %88 : vector<8x32xf32>
    %c0_37 = arith.constant 0 : index
    %c0_38 = arith.constant 0 : index
    %c0_39 = arith.constant 0 : index
    %90 = vector.load %arg14[%c0_37, %c0_38, %c0_39] : memref<2x4x32xf32, #tpu.memory_space<vmem>>, vector<1x4x32xf32>
    %91 = vector.shape_cast %90 : vector<1x4x32xf32> to vector<4x32xf32>
    %92 = arith.addf %0, %89 : vector<8x32xf32>
    %93 = vector.extract_strided_slice %91 {offsets = [0, 0], sizes = [1, 32], strides = [1, 1]} : vector<4x32xf32> to vector<1x32xf32>
    %94 = vector.shape_cast %93 : vector<1x32xf32> to vector<32xf32>
    %95 = vector.extract_strided_slice %91 {offsets = [1, 0], sizes = [1, 32], strides = [1, 1]} : vector<4x32xf32> to vector<1x32xf32>
    %96 = vector.shape_cast %95 : vector<1x32xf32> to vector<32xf32>
    %cst_40 = arith.constant dense<0.000000e+00> : vector<8xf32>
    %97 = vector.multi_reduction <add>, %92, %cst_40 [1] : vector<8x32xf32> to vector<8xf32>
    %98 = vector.shape_cast %97 : vector<8xf32> to vector<8x1xf32>
    %cst_41 = arith.constant 3.200000e+01 : f32
    %99 = vector.broadcast %cst_41 : f32 to vector<8x1xf32>
    %100 = arith.divf %98, %99 : vector<8x1xf32>
    %101 = vector.broadcast %100 : vector<8x1xf32> to vector<8x32xf32>
    %102 = arith.subf %92, %101 : vector<8x32xf32>
    %103 = vector.broadcast %100 : vector<8x1xf32> to vector<8x32xf32>
    %104 = arith.subf %92, %103 : vector<8x32xf32>
    %105 = arith.mulf %102, %104 : vector<8x32xf32>
    %cst_42 = arith.constant dense<0.000000e+00> : vector<8xf32>
    %106 = vector.multi_reduction <add>, %105, %cst_42 [1] : vector<8x32xf32> to vector<8xf32>
    %107 = vector.shape_cast %106 : vector<8xf32> to vector<8x1xf32>
    %cst_43 = arith.constant 3.200000e+01 : f32
    %108 = vector.broadcast %cst_43 : f32 to vector<8x1xf32>
    %109 = arith.divf %107, %108 : vector<8x1xf32>
    %110 = vector.broadcast %100 : vector<8x1xf32> to vector<8x32xf32>
    %111 = arith.subf %92, %110 : vector<8x32xf32>
    %cst_44 = arith.constant 9.99999974E-6 : f32
    %112 = vector.broadcast %cst_44 : f32 to vector<8x1xf32>
    %113 = arith.addf %109, %112 : vector<8x1xf32>
    %114 = math.rsqrt %113 : vector<8x1xf32>
    %115 = vector.broadcast %114 : vector<8x1xf32> to vector<8x32xf32>
    %116 = arith.mulf %111, %115 : vector<8x32xf32>
    %117 = vector.shape_cast %94 : vector<32xf32> to vector<1x32xf32>
    %118 = vector.broadcast %117 : vector<1x32xf32> to vector<8x32xf32>
    %119 = arith.mulf %116, %118 : vector<8x32xf32>
    %120 = vector.shape_cast %96 : vector<32xf32> to vector<1x32xf32>
    %121 = vector.broadcast %120 : vector<1x32xf32> to vector<8x32xf32>
    %122 = arith.addf %119, %121 : vector<8x32xf32>
    %c0_45 = arith.constant 0 : index
    %c0_46 = arith.constant 0 : index
    %c0_47 = arith.constant 0 : index
    %123 = vector.load %arg10[%c0_45, %c0_46, %c0_47] : memref<2x32x64xf32, #tpu.memory_space<vmem>>, vector<1x32x64xf32>
    %124 = vector.shape_cast %123 : vector<1x32x64xf32> to vector<32x64xf32>
    %cst_48 = arith.constant dense<0.000000e+00> : vector<8x64xf32>
    %125 = tpu.matmul %122, %124, %cst_48 {dimension_numbers = #tpu.dot_dimension_numbers<[1], [0], [0], [1], [0, 0, 1, 1], [], []>} : vector<8x32xf32>, vector<32x64xf32>, vector<8x64xf32> -> vector<8x64xf32>
    %c0_49 = arith.constant 0 : index
    %c0_50 = arith.constant 0 : index
    %126 = vector.load %arg11[%c0_49, %c0_50] : memref<2x64xf32, #tpu.memory_space<vmem>>, vector<1x64xf32>
    %127 = vector.shape_cast %126 : vector<1x64xf32> to vector<64xf32>
    %128 = vector.shape_cast %127 : vector<64xf32> to vector<1x64xf32>
    %129 = vector.broadcast %128 : vector<1x64xf32> to vector<8x64xf32>
    %130 = arith.addf %125, %129 : vector<8x64xf32>
    %cst_51 = arith.constant 5.000000e-01 : f32
    %131 = vector.broadcast %cst_51 : f32 to vector<8x64xf32>
    %132 = arith.mulf %131, %130 : vector<8x64xf32>
    %cst_52 = arith.constant 4.471500e-02 : f32
    %133 = vector.broadcast %cst_52 : f32 to vector<8x64xf32>
    %134 = arith.mulf %133, %130 : vector<8x64xf32>
    %135 = arith.mulf %134, %130 : vector<8x64xf32>
    %136 = arith.mulf %135, %130 : vector<8x64xf32>
    %137 = arith.addf %130, %136 : vector<8x64xf32>
    %cst_53 = arith.constant 0.797884583 : f32
    %138 = vector.broadcast %cst_53 : f32 to vector<8x64xf32>
    %139 = arith.mulf %138, %137 : vector<8x64xf32>
    %140 = math.tanh %139 : vector<8x64xf32>
    %cst_54 = arith.constant 1.000000e+00 : f32
    %141 = vector.broadcast %cst_54 : f32 to vector<8x64xf32>
    %142 = arith.addf %141, %140 : vector<8x64xf32>
    %143 = arith.mulf %132, %142 : vector<8x64xf32>
    %c0_55 = arith.constant 0 : index
    %c0_56 = arith.constant 0 : index
    %c0_57 = arith.constant 0 : index
    %144 = vector.load %arg12[%c0_55, %c0_56, %c0_57] : memref<2x64x32xf32, #tpu.memory_space<vmem>>, vector<1x64x32xf32>
    %145 = vector.shape_cast %144 : vector<1x64x32xf32> to vector<64x32xf32>
    %cst_58 = arith.constant dense<0.000000e+00> : vector<8x32xf32>
    %146 = tpu.matmul %143, %145, %cst_58 {dimension_numbers = #tpu.dot_dimension_numbers<[1], [0], [0], [1], [0, 0, 1, 1], [], []>} : vector<8x64xf32>, vector<64x32xf32>, vector<8x32xf32> -> vector<8x32xf32>
    %c0_59 = arith.constant 0 : index
    %c0_60 = arith.constant 0 : index
    %147 = vector.load %arg13[%c0_59, %c0_60] : memref<2x32xf32, #tpu.memory_space<vmem>>, vector<1x32xf32>
    %148 = vector.shape_cast %147 : vector<1x32xf32> to vector<32xf32>
    %149 = vector.shape_cast %148 : vector<32xf32> to vector<1x32xf32>
    %150 = vector.broadcast %149 : vector<1x32xf32> to vector<8x32xf32>
    %151 = arith.addf %146, %150 : vector<8x32xf32>
    %152 = arith.addf %122, %151 : vector<8x32xf32>
    %153 = vector.extract_strided_slice %91 {offsets = [2, 0], sizes = [1, 32], strides = [1, 1]} : vector<4x32xf32> to vector<1x32xf32>
    %154 = vector.shape_cast %153 : vector<1x32xf32> to vector<32xf32>
    %155 = vector.extract_strided_slice %91 {offsets = [3, 0], sizes = [1, 32], strides = [1, 1]} : vector<4x32xf32> to vector<1x32xf32>
    %156 = vector.shape_cast %155 : vector<1x32xf32> to vector<32xf32>
    %cst_61 = arith.constant dense<0.000000e+00> : vector<8xf32>
    %157 = vector.multi_reduction <add>, %152, %cst_61 [1] : vector<8x32xf32> to vector<8xf32>
    %158 = vector.shape_cast %157 : vector<8xf32> to vector<8x1xf32>
    %cst_62 = arith.constant 3.200000e+01 : f32
    %159 = vector.broadcast %cst_62 : f32 to vector<8x1xf32>
    %160 = arith.divf %158, %159 : vector<8x1xf32>
    %161 = vector.broadcast %160 : vector<8x1xf32> to vector<8x32xf32>
    %162 = arith.subf %152, %161 : vector<8x32xf32>
    %163 = vector.broadcast %160 : vector<8x1xf32> to vector<8x32xf32>
    %164 = arith.subf %152, %163 : vector<8x32xf32>
    %165 = arith.mulf %162, %164 : vector<8x32xf32>
    %cst_63 = arith.constant dense<0.000000e+00> : vector<8xf32>
    %166 = vector.multi_reduction <add>, %165, %cst_63 [1] : vector<8x32xf32> to vector<8xf32>
    %167 = vector.shape_cast %166 : vector<8xf32> to vector<8x1xf32>
    %cst_64 = arith.constant 3.200000e+01 : f32
    %168 = vector.broadcast %cst_64 : f32 to vector<8x1xf32>
    %169 = arith.divf %167, %168 : vector<8x1xf32>
    %170 = vector.broadcast %160 : vector<8x1xf32> to vector<8x32xf32>
    %171 = arith.subf %152, %170 : vector<8x32xf32>
    %cst_65 = arith.constant 9.99999974E-6 : f32
    %172 = vector.broadcast %cst_65 : f32 to vector<8x1xf32>
    %173 = arith.addf %169, %172 : vector<8x1xf32>
    %174 = math.rsqrt %173 : vector<8x1xf32>
    %175 = vector.broadcast %174 : vector<8x1xf32> to vector<8x32xf32>
    %176 = arith.mulf %171, %175 : vector<8x32xf32>
    %177 = vector.shape_cast %154 : vector<32xf32> to vector<1x32xf32>
    %178 = vector.broadcast %177 : vector<1x32xf32> to vector<8x32xf32>
    %179 = arith.mulf %176, %178 : vector<8x32xf32>
    %180 = vector.shape_cast %156 : vector<32xf32> to vector<1x32xf32>
    %181 = vector.broadcast %180 : vector<1x32xf32> to vector<8x32xf32>
    %182 = arith.addf %179, %181 : vector<8x32xf32>
    %c1 = arith.constant 1 : index
    %c0_66 = arith.constant 0 : index
    %c0_67 = arith.constant 0 : index
    %183 = vector.load %arg6[%c1, %c0_66, %c0_67] : memref<2x32x96xf32, #tpu.memory_space<vmem>>, vector<1x32x96xf32>
    %184 = vector.shape_cast %183 : vector<1x32x96xf32> to vector<32x96xf32>
    %cst_68 = arith.constant dense<0.000000e+00> : vector<8x96xf32>
    %185 = tpu.matmul %182, %184, %cst_68 {dimension_numbers = #tpu.dot_dimension_numbers<[1], [0], [0], [1], [0, 0, 1, 1], [], []>} : vector<8x32xf32>, vector<32x96xf32>, vector<8x96xf32> -> vector<8x96xf32>
    %c1_69 = arith.constant 1 : index
    %c0_70 = arith.constant 0 : index
    %186 = vector.load %arg7[%c1_69, %c0_70] : memref<2x96xf32, #tpu.memory_space<vmem>>, vector<1x96xf32>
    %187 = vector.shape_cast %186 : vector<1x96xf32> to vector<96xf32>
    %188 = vector.shape_cast %187 : vector<96xf32> to vector<1x96xf32>
    %189 = vector.broadcast %188 : vector<1x96xf32> to vector<8x96xf32>
    %190 = arith.addf %185, %189 : vector<8x96xf32>
    %191 = vector.extract_strided_slice %190 {offsets = [0, 0], sizes = [8, 32], strides = [1, 1]} : vector<8x96xf32> to vector<8x32xf32>
    %192 = vector.extract_strided_slice %190 {offsets = [0, 32], sizes = [8, 32], strides = [1, 1]} : vector<8x96xf32> to vector<8x32xf32>
    %193 = vector.extract_strided_slice %190 {offsets = [0, 64], sizes = [8, 32], strides = [1, 1]} : vector<8x96xf32> to vector<8x32xf32>
    %194 = vector.extract_strided_slice %191 {offsets = [0, 0], sizes = [8, 8], strides = [1, 1]} : vector<8x32xf32> to vector<8x8xf32>
    %195 = vector.extract_strided_slice %192 {offsets = [0, 0], sizes = [8, 8], strides = [1, 1]} : vector<8x32xf32> to vector<8x8xf32>
    %196 = vector.extract_strided_slice %193 {offsets = [0, 0], sizes = [8, 8], strides = [1, 1]} : vector<8x32xf32> to vector<8x8xf32>
    %cst_71 = arith.constant dense<0.000000e+00> : vector<8x8xf32>
    %197 = tpu.matmul %194, %195, %cst_71 {dimension_numbers = #tpu.dot_dimension_numbers<[1], [1], [0], [0], [0, 0, 1, 0], [], []>} : vector<8x8xf32>, vector<8x8xf32>, vector<8x8xf32> -> vector<8x8xf32>
    %198 = arith.addf %197, %1 : vector<8x8xf32>
    %cst_72 = arith.constant dense<0xFF800000> : vector<8xf32>
    %199 = vector.multi_reduction <maximumf>, %198, %cst_72 [1] : vector<8x8xf32> to vector<8xf32>
    %200 = vector.shape_cast %199 : vector<8xf32> to vector<8x1xf32>
    %201 = vector.broadcast %200 : vector<8x1xf32> to vector<8x8xf32>
    %202 = arith.subf %198, %201 : vector<8x8xf32>
    %203 = math.exp %202 : vector<8x8xf32>
    %cst_73 = arith.constant dense<0.000000e+00> : vector<8xf32>
    %204 = vector.multi_reduction <add>, %203, %cst_73 [1] : vector<8x8xf32> to vector<8xf32>
    %205 = vector.shape_cast %204 : vector<8xf32> to vector<8x1xf32>
    %206 = tpu.reciprocal %205 {approx = true} : vector<8x1xf32> -> vector<8x1xf32>
    %207 = vector.broadcast %206 : vector<8x1xf32> to vector<8x8xf32>
    %208 = arith.mulf %203, %207 : vector<8x8xf32>
    %cst_74 = arith.constant dense<0.000000e+00> : vector<8x8xf32>
    %209 = tpu.matmul %208, %196, %cst_74 {dimension_numbers = #tpu.dot_dimension_numbers<[1], [0], [0], [1], [0, 0, 1, 1], [], []>} : vector<8x8xf32>, vector<8x8xf32>, vector<8x8xf32> -> vector<8x8xf32>
    %c0_75 = arith.constant 0 : index
    %c0_76 = arith.constant 0 : index
    %210 = vector.load %arg19[%c0_75, %c0_76] : memref<8x32xf32, #tpu.memory_space<vmem>>, vector<8x8xf32>
    tpu.vector_store %arg19[%c0_75, %c0_76], %209 {strides = array<i32>} : memref<8x32xf32, #tpu.memory_space<vmem>>, vector<8x8xf32>,
    %211 = vector.extract_strided_slice %191 {offsets = [0, 8], sizes = [8, 8], strides = [1, 1]} : vector<8x32xf32> to vector<8x8xf32>
    %212 = vector.extract_strided_slice %192 {offsets = [0, 8], sizes = [8, 8], strides = [1, 1]} : vector<8x32xf32> to vector<8x8xf32>
    %213 = vector.extract_strided_slice %193 {offsets = [0, 8], sizes = [8, 8], strides = [1, 1]} : vector<8x32xf32> to vector<8x8xf32>
    %cst_77 = arith.constant dense<0.000000e+00> : vector<8x8xf32>
    %214 = tpu.matmul %211, %212, %cst_77 {dimension_numbers = #tpu.dot_dimension_numbers<[1], [1], [0], [0], [0, 0, 1, 0], [], []>} : vector<8x8xf32>, vector<8x8xf32>, vector<8x8xf32> -> vector<8x8xf32>
    %215 = arith.addf %214, %1 : vector<8x8xf32>
    %cst_78 = arith.constant dense<0xFF800000> : vector<8xf32>
    %216 = vector.multi_reduction <maximumf>, %215, %cst_78 [1] : vector<8x8xf32> to vector<8xf32>
    %217 = vector.shape_cast %216 : vector<8xf32> to vector<8x1xf32>
    %218 = vector.broadcast %217 : vector<8x1xf32> to vector<8x8xf32>
    %219 = arith.subf %215, %218 : vector<8x8xf32>
    %220 = math.exp %219 : vector<8x8xf32>
    %cst_79 = arith.constant dense<0.000000e+00> : vector<8xf32>
    %221 = vector.multi_reduction <add>, %220, %cst_79 [1] : vector<8x8xf32> to vector<8xf32>
    %222 = vector.shape_cast %221 : vector<8xf32> to vector<8x1xf32>
    %223 = tpu.reciprocal %222 {approx = true} : vector<8x1xf32> -> vector<8x1xf32>
    %224 = vector.broadcast %223 : vector<8x1xf32> to vector<8x8xf32>
    %225 = arith.mulf %220, %224 : vector<8x8xf32>
    %cst_80 = arith.constant dense<0.000000e+00> : vector<8x8xf32>
    %226 = tpu.matmul %225, %213, %cst_80 {dimension_numbers = #tpu.dot_dimension_numbers<[1], [0], [0], [1], [0, 0, 1, 1], [], []>} : vector<8x8xf32>, vector<8x8xf32>, vector<8x8xf32> -> vector<8x8xf32>
    %c0_81 = arith.constant 0 : index
    %c8_82 = arith.constant 8 : index
    %227 = vector.load %arg19[%c0_81, %c8_82] : memref<8x32xf32, #tpu.memory_space<vmem>>, vector<8x8xf32>
    tpu.vector_store %arg19[%c0_81, %c8_82], %226 {strides = array<i32>} : memref<8x32xf32, #tpu.memory_space<vmem>>, vector<8x8xf32>,
    %228 = vector.extract_strided_slice %191 {offsets = [0, 16], sizes = [8, 8], strides = [1, 1]} : vector<8x32xf32> to vector<8x8xf32>
    %229 = vector.extract_strided_slice %192 {offsets = [0, 16], sizes = [8, 8], strides = [1, 1]} : vector<8x32xf32> to vector<8x8xf32>
    %230 = vector.extract_strided_slice %193 {offsets = [0, 16], sizes = [8, 8], strides = [1, 1]} : vector<8x32xf32> to vector<8x8xf32>
    %cst_83 = arith.constant dense<0.000000e+00> : vector<8x8xf32>
    %231 = tpu.matmul %228, %229, %cst_83 {dimension_numbers = #tpu.dot_dimension_numbers<[1], [1], [0], [0], [0, 0, 1, 0], [], []>} : vector<8x8xf32>, vector<8x8xf32>, vector<8x8xf32> -> vector<8x8xf32>
    %232 = arith.addf %231, %1 : vector<8x8xf32>
    %cst_84 = arith.constant dense<0xFF800000> : vector<8xf32>
    %233 = vector.multi_reduction <maximumf>, %232, %cst_84 [1] : vector<8x8xf32> to vector<8xf32>
    %234 = vector.shape_cast %233 : vector<8xf32> to vector<8x1xf32>
    %235 = vector.broadcast %234 : vector<8x1xf32> to vector<8x8xf32>
    %236 = arith.subf %232, %235 : vector<8x8xf32>
    %237 = math.exp %236 : vector<8x8xf32>
    %cst_85 = arith.constant dense<0.000000e+00> : vector<8xf32>
    %238 = vector.multi_reduction <add>, %237, %cst_85 [1] : vector<8x8xf32> to vector<8xf32>
    %239 = vector.shape_cast %238 : vector<8xf32> to vector<8x1xf32>
    %240 = tpu.reciprocal %239 {approx = true} : vector<8x1xf32> -> vector<8x1xf32>
    %241 = vector.broadcast %240 : vector<8x1xf32> to vector<8x8xf32>
    %242 = arith.mulf %237, %241 : vector<8x8xf32>
    %cst_86 = arith.constant dense<0.000000e+00> : vector<8x8xf32>
    %243 = tpu.matmul %242, %230, %cst_86 {dimension_numbers = #tpu.dot_dimension_numbers<[1], [0], [0], [1], [0, 0, 1, 1], [], []>} : vector<8x8xf32>, vector<8x8xf32>, vector<8x8xf32> -> vector<8x8xf32>
    %c0_87 = arith.constant 0 : index
    %c16_88 = arith.constant 16 : index
    %244 = vector.load %arg19[%c0_87, %c16_88] : memref<8x32xf32, #tpu.memory_space<vmem>>, vector<8x8xf32>
    tpu.vector_store %arg19[%c0_87, %c16_88], %243 {strides = array<i32>} : memref<8x32xf32, #tpu.memory_space<vmem>>, vector<8x8xf32>,
    %245 = vector.extract_strided_slice %191 {offsets = [0, 24], sizes = [8, 8], strides = [1, 1]} : vector<8x32xf32> to vector<8x8xf32>
    %246 = vector.extract_strided_slice %192 {offsets = [0, 24], sizes = [8, 8], strides = [1, 1]} : vector<8x32xf32> to vector<8x8xf32>
    %247 = vector.extract_strided_slice %193 {offsets = [0, 24], sizes = [8, 8], strides = [1, 1]} : vector<8x32xf32> to vector<8x8xf32>
    %cst_89 = arith.constant dense<0.000000e+00> : vector<8x8xf32>
    %248 = tpu.matmul %245, %246, %cst_89 {dimension_numbers = #tpu.dot_dimension_numbers<[1], [1], [0], [0], [0, 0, 1, 0], [], []>} : vector<8x8xf32>, vector<8x8xf32>, vector<8x8xf32> -> vector<8x8xf32>
    %249 = arith.addf %248, %1 : vector<8x8xf32>
    %cst_90 = arith.constant dense<0xFF800000> : vector<8xf32>
    %250 = vector.multi_reduction <maximumf>, %249, %cst_90 [1] : vector<8x8xf32> to vector<8xf32>
    %251 = vector.shape_cast %250 : vector<8xf32> to vector<8x1xf32>
    %252 = vector.broadcast %251 : vector<8x1xf32> to vector<8x8xf32>
    %253 = arith.subf %249, %252 : vector<8x8xf32>
    %254 = math.exp %253 : vector<8x8xf32>
    %cst_91 = arith.constant dense<0.000000e+00> : vector<8xf32>
    %255 = vector.multi_reduction <add>, %254, %cst_91 [1] : vector<8x8xf32> to vector<8xf32>
    %256 = vector.shape_cast %255 : vector<8xf32> to vector<8x1xf32>
    %257 = tpu.reciprocal %256 {approx = true} : vector<8x1xf32> -> vector<8x1xf32>
    %258 = vector.broadcast %257 : vector<8x1xf32> to vector<8x8xf32>
    %259 = arith.mulf %254, %258 : vector<8x8xf32>
    %cst_92 = arith.constant dense<0.000000e+00> : vector<8x8xf32>
    %260 = tpu.matmul %259, %247, %cst_92 {dimension_numbers = #tpu.dot_dimension_numbers<[1], [0], [0], [1], [0, 0, 1, 1], [], []>} : vector<8x8xf32>, vector<8x8xf32>, vector<8x8xf32> -> vector<8x8xf32>
    %c0_93 = arith.constant 0 : index
    %c24_94 = arith.constant 24 : index
    %261 = vector.load %arg19[%c0_93, %c24_94] : memref<8x32xf32, #tpu.memory_space<vmem>>, vector<8x8xf32>
    tpu.vector_store %arg19[%c0_93, %c24_94], %260 {strides = array<i32>} : memref<8x32xf32, #tpu.memory_space<vmem>>, vector<8x8xf32>,
    %c0_95 = arith.constant 0 : index
    %c0_96 = arith.constant 0 : index
    %262 = vector.load %arg19[%c0_95, %c0_96] : memref<8x32xf32, #tpu.memory_space<vmem>>, vector<8x32xf32>
    %c1_97 = arith.constant 1 : index
    %c0_98 = arith.constant 0 : index
    %c0_99 = arith.constant 0 : index
    %263 = vector.load %arg8[%c1_97, %c0_98, %c0_99] : memref<2x32x32xf32, #tpu.memory_space<vmem>>, vector<1x32x32xf32>
    %264 = vector.shape_cast %263 : vector<1x32x32xf32> to vector<32x32xf32>
    %cst_100 = arith.constant dense<0.000000e+00> : vector<8x32xf32>
    %265 = tpu.matmul %262, %264, %cst_100 {dimension_numbers = #tpu.dot_dimension_numbers<[1], [0], [0], [1], [0, 0, 1, 1], [], []>} : vector<8x32xf32>, vector<32x32xf32>, vector<8x32xf32> -> vector<8x32xf32>
    %c1_101 = arith.constant 1 : index
    %c0_102 = arith.constant 0 : index
    %266 = vector.load %arg9[%c1_101, %c0_102] : memref<2x32xf32, #tpu.memory_space<vmem>>, vector<1x32xf32>
    %267 = vector.shape_cast %266 : vector<1x32xf32> to vector<32xf32>
    %268 = vector.shape_cast %267 : vector<32xf32> to vector<1x32xf32>
    %269 = vector.broadcast %268 : vector<1x32xf32> to vector<8x32xf32>
    %270 = arith.addf %265, %269 : vector<8x32xf32>
    %c1_103 = arith.constant 1 : index
    %c0_104 = arith.constant 0 : index
    %c0_105 = arith.constant 0 : index
    %271 = vector.load %arg14[%c1_103, %c0_104, %c0_105] : memref<2x4x32xf32, #tpu.memory_space<vmem>>, vector<1x4x32xf32>
    %272 = vector.shape_cast %271 : vector<1x4x32xf32> to vector<4x32xf32>
    %273 = arith.addf %182, %270 : vector<8x32xf32>
    %274 = vector.extract_strided_slice %272 {offsets = [0, 0], sizes = [1, 32], strides = [1, 1]} : vector<4x32xf32> to vector<1x32xf32>
    %275 = vector.shape_cast %274 : vector<1x32xf32> to vector<32xf32>
    %276 = vector.extract_strided_slice %272 {offsets = [1, 0], sizes = [1, 32], strides = [1, 1]} : vector<4x32xf32> to vector<1x32xf32>
    %277 = vector.shape_cast %276 : vector<1x32xf32> to vector<32xf32>
    %cst_106 = arith.constant dense<0.000000e+00> : vector<8xf32>
    %278 = vector.multi_reduction <add>, %273, %cst_106 [1] : vector<8x32xf32> to vector<8xf32>
    %279 = vector.shape_cast %278 : vector<8xf32> to vector<8x1xf32>
    %cst_107 = arith.constant 3.200000e+01 : f32
    %280 = vector.broadcast %cst_107 : f32 to vector<8x1xf32>
    %281 = arith.divf %279, %280 : vector<8x1xf32>
    %282 = vector.broadcast %281 : vector<8x1xf32> to vector<8x32xf32>
    %283 = arith.subf %273, %282 : vector<8x32xf32>
    %284 = vector.broadcast %281 : vector<8x1xf32> to vector<8x32xf32>
    %285 = arith.subf %273, %284 : vector<8x32xf32>
    %286 = arith.mulf %283, %285 : vector<8x32xf32>
    %cst_108 = arith.constant dense<0.000000e+00> : vector<8xf32>
    %287 = vector.multi_reduction <add>, %286, %cst_108 [1] : vector<8x32xf32> to vector<8xf32>
    %288 = vector.shape_cast %287 : vector<8xf32> to vector<8x1xf32>
    %cst_109 = arith.constant 3.200000e+01 : f32
    %289 = vector.broadcast %cst_109 : f32 to vector<8x1xf32>
    %290 = arith.divf %288, %289 : vector<8x1xf32>
    %291 = vector.broadcast %281 : vector<8x1xf32> to vector<8x32xf32>
    %292 = arith.subf %273, %291 : vector<8x32xf32>
    %cst_110 = arith.constant 9.99999974E-6 : f32
    %293 = vector.broadcast %cst_110 : f32 to vector<8x1xf32>
    %294 = arith.addf %290, %293 : vector<8x1xf32>
    %295 = math.rsqrt %294 : vector<8x1xf32>
    %296 = vector.broadcast %295 : vector<8x1xf32> to vector<8x32xf32>
    %297 = arith.mulf %292, %296 : vector<8x32xf32>
    %298 = vector.shape_cast %275 : vector<32xf32> to vector<1x32xf32>
    %299 = vector.broadcast %298 : vector<1x32xf32> to vector<8x32xf32>
    %300 = arith.mulf %297, %299 : vector<8x32xf32>
    %301 = vector.shape_cast %277 : vector<32xf32> to vector<1x32xf32>
    %302 = vector.broadcast %301 : vector<1x32xf32> to vector<8x32xf32>
    %303 = arith.addf %300, %302 : vector<8x32xf32>
    %c1_111 = arith.constant 1 : index
    %c0_112 = arith.constant 0 : index
    %c0_113 = arith.constant 0 : index
    %304 = vector.load %arg10[%c1_111, %c0_112, %c0_113] : memref<2x32x64xf32, #tpu.memory_space<vmem>>, vector<1x32x64xf32>
    %305 = vector.shape_cast %304 : vector<1x32x64xf32> to vector<32x64xf32>
    %cst_114 = arith.constant dense<0.000000e+00> : vector<8x64xf32>
    %306 = tpu.matmul %303, %305, %cst_114 {dimension_numbers = #tpu.dot_dimension_numbers<[1], [0], [0], [1], [0, 0, 1, 1], [], []>} : vector<8x32xf32>, vector<32x64xf32>, vector<8x64xf32> -> vector<8x64xf32>
    %c1_115 = arith.constant 1 : index
    %c0_116 = arith.constant 0 : index
    %307 = vector.load %arg11[%c1_115, %c0_116] : memref<2x64xf32, #tpu.memory_space<vmem>>, vector<1x64xf32>
    %308 = vector.shape_cast %307 : vector<1x64xf32> to vector<64xf32>
    %309 = vector.shape_cast %308 : vector<64xf32> to vector<1x64xf32>
    %310 = vector.broadcast %309 : vector<1x64xf32> to vector<8x64xf32>
    %311 = arith.addf %306, %310 : vector<8x64xf32>
    %cst_117 = arith.constant 5.000000e-01 : f32
    %312 = vector.broadcast %cst_117 : f32 to vector<8x64xf32>
    %313 = arith.mulf %312, %311 : vector<8x64xf32>
    %cst_118 = arith.constant 4.471500e-02 : f32
    %314 = vector.broadcast %cst_118 : f32 to vector<8x64xf32>
    %315 = arith.mulf %314, %311 : vector<8x64xf32>
    %316 = arith.mulf %315, %311 : vector<8x64xf32>
    %317 = arith.mulf %316, %311 : vector<8x64xf32>
    %318 = arith.addf %311, %317 : vector<8x64xf32>
    %cst_119 = arith.constant 0.797884583 : f32
    %319 = vector.broadcast %cst_119 : f32 to vector<8x64xf32>
    %320 = arith.mulf %319, %318 : vector<8x64xf32>
    %321 = math.tanh %320 : vector<8x64xf32>
    %cst_120 = arith.constant 1.000000e+00 : f32
    %322 = vector.broadcast %cst_120 : f32 to vector<8x64xf32>
    %323 = arith.addf %322, %321 : vector<8x64xf32>
    %324 = arith.mulf %313, %323 : vector<8x64xf32>
    %c1_121 = arith.constant 1 : index
    %c0_122 = arith.constant 0 : index
    %c0_123 = arith.constant 0 : index
    %325 = vector.load %arg12[%c1_121, %c0_122, %c0_123] : memref<2x64x32xf32, #tpu.memory_space<vmem>>, vector<1x64x32xf32>
    %326 = vector.shape_cast %325 : vector<1x64x32xf32> to vector<64x32xf32>
    %cst_124 = arith.constant dense<0.000000e+00> : vector<8x32xf32>
    %327 = tpu.matmul %324, %326, %cst_124 {dimension_numbers = #tpu.dot_dimension_numbers<[1], [0], [0], [1], [0, 0, 1, 1], [], []>} : vector<8x64xf32>, vector<64x32xf32>, vector<8x32xf32> -> vector<8x32xf32>
    %c1_125 = arith.constant 1 : index
    %c0_126 = arith.constant 0 : index
    %328 = vector.load %arg13[%c1_125, %c0_126] : memref<2x32xf32, #tpu.memory_space<vmem>>, vector<1x32xf32>
    %329 = vector.shape_cast %328 : vector<1x32xf32> to vector<32xf32>
    %330 = vector.shape_cast %329 : vector<32xf32> to vector<1x32xf32>
    %331 = vector.broadcast %330 : vector<1x32xf32> to vector<8x32xf32>
    %332 = arith.addf %327, %331 : vector<8x32xf32>
    %333 = arith.addf %303, %332 : vector<8x32xf32>
    %334 = vector.extract_strided_slice %272 {offsets = [2, 0], sizes = [1, 32], strides = [1, 1]} : vector<4x32xf32> to vector<1x32xf32>
    %335 = vector.shape_cast %334 : vector<1x32xf32> to vector<32xf32>
    %336 = vector.extract_strided_slice %272 {offsets = [3, 0], sizes = [1, 32], strides = [1, 1]} : vector<4x32xf32> to vector<1x32xf32>
    %337 = vector.shape_cast %336 : vector<1x32xf32> to vector<32xf32>
    %cst_127 = arith.constant dense<0.000000e+00> : vector<8xf32>
    %338 = vector.multi_reduction <add>, %333, %cst_127 [1] : vector<8x32xf32> to vector<8xf32>
    %339 = vector.shape_cast %338 : vector<8xf32> to vector<8x1xf32>
    %cst_128 = arith.constant 3.200000e+01 : f32
    %340 = vector.broadcast %cst_128 : f32 to vector<8x1xf32>
    %341 = arith.divf %339, %340 : vector<8x1xf32>
    %342 = vector.broadcast %341 : vector<8x1xf32> to vector<8x32xf32>
    %343 = arith.subf %333, %342 : vector<8x32xf32>
    %344 = vector.broadcast %341 : vector<8x1xf32> to vector<8x32xf32>
    %345 = arith.subf %333, %344 : vector<8x32xf32>
    %346 = arith.mulf %343, %345 : vector<8x32xf32>
    %cst_129 = arith.constant dense<0.000000e+00> : vector<8xf32>
    %347 = vector.multi_reduction <add>, %346, %cst_129 [1] : vector<8x32xf32> to vector<8xf32>
    %348 = vector.shape_cast %347 : vector<8xf32> to vector<8x1xf32>
    %cst_130 = arith.constant 3.200000e+01 : f32
    %349 = vector.broadcast %cst_130 : f32 to vector<8x1xf32>
    %350 = arith.divf %348, %349 : vector<8x1xf32>
    %351 = vector.broadcast %341 : vector<8x1xf32> to vector<8x32xf32>
    %352 = arith.subf %333, %351 : vector<8x32xf32>
    %cst_131 = arith.constant 9.99999974E-6 : f32
    %353 = vector.broadcast %cst_131 : f32 to vector<8x1xf32>
    %354 = arith.addf %350, %353 : vector<8x1xf32>
    %355 = math.rsqrt %354 : vector<8x1xf32>
    %356 = vector.broadcast %355 : vector<8x1xf32> to vector<8x32xf32>
    %357 = arith.mulf %352, %356 : vector<8x32xf32>
    %358 = vector.shape_cast %335 : vector<32xf32> to vector<1x32xf32>
    %359 = vector.broadcast %358 : vector<1x32xf32> to vector<8x32xf32>
    %360 = arith.mulf %357, %359 : vector<8x32xf32>
    %361 = vector.shape_cast %337 : vector<32xf32> to vector<1x32xf32>
    %362 = vector.broadcast %361 : vector<1x32xf32> to vector<8x32xf32>
    %363 = arith.addf %360, %362 : vector<8x32xf32>
    %c0_132 = arith.constant 0 : index
    %c0_133 = arith.constant 0 : index
    %364 = vector.load %arg15[%c0_132, %c0_133] : memref<2x32xf32, #tpu.memory_space<vmem>>, vector<2x32xf32>
    %365 = vector.extract_strided_slice %364 {offsets = [0, 0], sizes = [1, 32], strides = [1, 1]} : vector<2x32xf32> to vector<1x32xf32>
    %366 = vector.shape_cast %365 : vector<1x32xf32> to vector<32xf32>
    %367 = vector.extract_strided_slice %364 {offsets = [1, 0], sizes = [1, 32], strides = [1, 1]} : vector<2x32xf32> to vector<1x32xf32>
    %368 = vector.shape_cast %367 : vector<1x32xf32> to vector<32xf32>
    %cst_134 = arith.constant dense<0.000000e+00> : vector<8xf32>
    %369 = vector.multi_reduction <add>, %363, %cst_134 [1] : vector<8x32xf32> to vector<8xf32>
    %370 = vector.shape_cast %369 : vector<8xf32> to vector<8x1xf32>
    %cst_135 = arith.constant 3.200000e+01 : f32
    %371 = vector.broadcast %cst_135 : f32 to vector<8x1xf32>
    %372 = arith.divf %370, %371 : vector<8x1xf32>
    %373 = vector.broadcast %372 : vector<8x1xf32> to vector<8x32xf32>
    %374 = arith.subf %363, %373 : vector<8x32xf32>
    %375 = vector.broadcast %372 : vector<8x1xf32> to vector<8x32xf32>
    %376 = arith.subf %363, %375 : vector<8x32xf32>
    %377 = arith.mulf %374, %376 : vector<8x32xf32>
    %cst_136 = arith.constant dense<0.000000e+00> : vector<8xf32>
    %378 = vector.multi_reduction <add>, %377, %cst_136 [1] : vector<8x32xf32> to vector<8xf32>
    %379 = vector.shape_cast %378 : vector<8xf32> to vector<8x1xf32>
    %cst_137 = arith.constant 3.200000e+01 : f32
    %380 = vector.broadcast %cst_137 : f32 to vector<8x1xf32>
    %381 = arith.divf %379, %380 : vector<8x1xf32>
    %382 = vector.broadcast %372 : vector<8x1xf32> to vector<8x32xf32>
    %383 = arith.subf %363, %382 : vector<8x32xf32>
    %cst_138 = arith.constant 9.99999974E-6 : f32
    %384 = vector.broadcast %cst_138 : f32 to vector<8x1xf32>
    %385 = arith.addf %381, %384 : vector<8x1xf32>
    %386 = math.rsqrt %385 : vector<8x1xf32>
    %387 = vector.broadcast %386 : vector<8x1xf32> to vector<8x32xf32>
    %388 = arith.mulf %383, %387 : vector<8x32xf32>
    %389 = vector.shape_cast %366 : vector<32xf32> to vector<1x32xf32>
    %390 = vector.broadcast %389 : vector<1x32xf32> to vector<8x32xf32>
    %391 = arith.mulf %388, %390 : vector<8x32xf32>
    %392 = vector.shape_cast %368 : vector<32xf32> to vector<1x32xf32>
    %393 = vector.broadcast %392 : vector<1x32xf32> to vector<8x32xf32>
    %394 = arith.addf %391, %393 : vector<8x32xf32>
    %c0_139 = arith.constant 0 : index
    %c0_140 = arith.constant 0 : index
    %395 = vector.load %arg16[%c0_139, %c0_140] : memref<4x32xf32, #tpu.memory_space<vmem>>, vector<4x32xf32>
    %396 = vector.extract_strided_slice %395 {offsets = [0, 0], sizes = [1, 32], strides = [1, 1]} : vector<4x32xf32> to vector<1x32xf32>
    %397 = vector.shape_cast %396 : vector<1x32xf32> to vector<32xf32>
    %398 = vector.shape_cast %397 : vector<32xf32> to vector<1x32xf32>
    %399 = vector.broadcast %398 : vector<1x32xf32> to vector<8x32xf32>
    %400 = arith.mulf %394, %399 : vector<8x32xf32>
    %c0_141 = arith.constant 0 : index
    %c0_142 = arith.constant 0 : index
    %401 = vector.load %arg3[%c0_141, %c0_142] : memref<8x32xf32, #tpu.memory_space<vmem>>, vector<8x32xf32>
    %402 = vector.extract_strided_slice %395 {offsets = [1, 0], sizes = [1, 32], strides = [1, 1]} : vector<4x32xf32> to vector<1x32xf32>
    %403 = vector.shape_cast %402 : vector<1x32xf32> to vector<32xf32>
    %404 = vector.shape_cast %403 : vector<32xf32> to vector<1x32xf32>
    %405 = vector.broadcast %404 : vector<1x32xf32> to vector<8x32xf32>
    %406 = arith.mulf %401, %405 : vector<8x32xf32>
    %407 = arith.addf %400, %406 : vector<8x32xf32>
    %c0_143 = arith.constant 0 : index
    %c0_144 = arith.constant 0 : index
    %408 = vector.load %arg4[%c0_143, %c0_144] : memref<8x32xf32, #tpu.memory_space<vmem>>, vector<8x32xf32>
    %409 = vector.extract_strided_slice %395 {offsets = [2, 0], sizes = [1, 32], strides = [1, 1]} : vector<4x32xf32> to vector<1x32xf32>
    %410 = vector.shape_cast %409 : vector<1x32xf32> to vector<32xf32>
    %411 = vector.shape_cast %410 : vector<32xf32> to vector<1x32xf32>
    %412 = vector.broadcast %411 : vector<1x32xf32> to vector<8x32xf32>
    %413 = arith.mulf %408, %412 : vector<8x32xf32>
    %414 = arith.addf %407, %413 : vector<8x32xf32>
    %c0_145 = arith.constant 0 : index
    %c0_146 = arith.constant 0 : index
    %415 = vector.load %arg5[%c0_145, %c0_146] : memref<8x32xf32, #tpu.memory_space<vmem>>, vector<8x32xf32>
    %416 = vector.extract_strided_slice %395 {offsets = [3, 0], sizes = [1, 32], strides = [1, 1]} : vector<4x32xf32> to vector<1x32xf32>
    %417 = vector.shape_cast %416 : vector<1x32xf32> to vector<32xf32>
    %418 = vector.shape_cast %417 : vector<32xf32> to vector<1x32xf32>
    %419 = vector.broadcast %418 : vector<1x32xf32> to vector<8x32xf32>
    %420 = arith.mulf %415, %419 : vector<8x32xf32>
    %421 = arith.addf %414, %420 : vector<8x32xf32>
    %cst_147 = arith.constant dense<0.000000e+00> : vector<8xf32>
    %422 = vector.multi_reduction <add>, %421, %cst_147 [1] : vector<8x32xf32> to vector<8xf32>
    %423 = vector.shape_cast %422 : vector<8xf32> to vector<8x1xf32>
    %c0_148 = arith.constant 0 : index
    %c0_149 = arith.constant 0 : index
    %424 = vector.load %arg17[%c0_148, %c0_149] : memref<1x1xf32, #tpu.memory_space<vmem>>, vector<1x1xf32>
    %425 = vector.broadcast %424 : vector<1x1xf32> to vector<8x1xf32>
    %426 = arith.addf %423, %425 : vector<8x1xf32>
    %427 = vector.shape_cast %426 : vector<8x1xf32> to vector<8x1xf32>
    %428 = vector.broadcast %427 : vector<8x1xf32> to vector<8x128xf32>
    %c0_150 = arith.constant 0 : index
    %c0_151 = arith.constant 0 : index
    %429 = vector.load %arg18[%c0_150, %c0_151] : memref<8x128xf32, #tpu.memory_space<vmem>>, vector<8x128xf32>
    tpu.vector_store %arg18[%c0_150, %c0_151], %428 {strides = array<i32>} : memref<8x128xf32, #tpu.memory_space<vmem>>, vector<8x128xf32>,
    return
  }
  func.func @transform_0(%arg0: i32) -> (i32, i32) {
    %c0_i32 = arith.constant 0 : i32
    %c0_i32_0 = arith.constant 0 : i32
    return %arg0, %c0_i32 : i32, i32
  }
  func.func @transform_1(%arg0: i32) -> (i32, i32) {
    %c0_i32 = arith.constant 0 : i32
    %c0_i32_0 = arith.constant 0 : i32
    %c0_i32_1 = arith.constant 0 : i32
    return %c0_i32, %c0_i32_0 : i32, i32
  }
  func.func @transform_2(%arg0: i32) -> (i32, i32) {
    %c0_i32 = arith.constant 0 : i32
    %c0_i32_0 = arith.constant 0 : i32
    return %arg0, %c0_i32 : i32, i32
  }
  func.func @transform_3(%arg0: i32) -> (i32, i32) {
    %c0_i32 = arith.constant 0 : i32
    %c0_i32_0 = arith.constant 0 : i32
    return %arg0, %c0_i32 : i32, i32
  }
  func.func @transform_4(%arg0: i32) -> (i32, i32) {
    %c0_i32 = arith.constant 0 : i32
    %c0_i32_0 = arith.constant 0 : i32
    return %arg0, %c0_i32 : i32, i32
  }
  func.func @transform_5(%arg0: i32) -> (i32, i32, i32) {
    %c0_i32 = arith.constant 0 : i32
    %c0_i32_0 = arith.constant 0 : i32
    %c0_i32_1 = arith.constant 0 : i32
    %c0_i32_2 = arith.constant 0 : i32
    return %c0_i32, %c0_i32_0, %c0_i32_1 : i32, i32, i32
  }
  func.func @transform_6(%arg0: i32) -> (i32, i32) {
    %c0_i32 = arith.constant 0 : i32
    %c0_i32_0 = arith.constant 0 : i32
    %c0_i32_1 = arith.constant 0 : i32
    return %c0_i32, %c0_i32_0 : i32, i32
  }
  func.func @transform_7(%arg0: i32) -> (i32, i32, i32) {
    %c0_i32 = arith.constant 0 : i32
    %c0_i32_0 = arith.constant 0 : i32
    %c0_i32_1 = arith.constant 0 : i32
    %c0_i32_2 = arith.constant 0 : i32
    return %c0_i32, %c0_i32_0, %c0_i32_1 : i32, i32, i32
  }
  func.func @transform_8(%arg0: i32) -> (i32, i32) {
    %c0_i32 = arith.constant 0 : i32
    %c0_i32_0 = arith.constant 0 : i32
    %c0_i32_1 = arith.constant 0 : i32
    return %c0_i32, %c0_i32_0 : i32, i32
  }
  func.func @transform_9(%arg0: i32) -> (i32, i32, i32) {
    %c0_i32 = arith.constant 0 : i32
    %c0_i32_0 = arith.constant 0 : i32
    %c0_i32_1 = arith.constant 0 : i32
    %c0_i32_2 = arith.constant 0 : i32
    return %c0_i32, %c0_i32_0, %c0_i32_1 : i32, i32, i32
  }
  func.func @transform_10(%arg0: i32) -> (i32, i32) {
    %c0_i32 = arith.constant 0 : i32
    %c0_i32_0 = arith.constant 0 : i32
    %c0_i32_1 = arith.constant 0 : i32
    return %c0_i32, %c0_i32_0 : i32, i32
  }
  func.func @transform_11(%arg0: i32) -> (i32, i32, i32) {
    %c0_i32 = arith.constant 0 : i32
    %c0_i32_0 = arith.constant 0 : i32
    %c0_i32_1 = arith.constant 0 : i32
    %c0_i32_2 = arith.constant 0 : i32
    return %c0_i32, %c0_i32_0, %c0_i32_1 : i32, i32, i32
  }
  func.func @transform_12(%arg0: i32) -> (i32, i32) {
    %c0_i32 = arith.constant 0 : i32
    %c0_i32_0 = arith.constant 0 : i32
    %c0_i32_1 = arith.constant 0 : i32
    return %c0_i32, %c0_i32_0 : i32, i32
  }
  func.func @transform_13(%arg0: i32) -> (i32, i32, i32) {
    %c0_i32 = arith.constant 0 : i32
    %c0_i32_0 = arith.constant 0 : i32
    %c0_i32_1 = arith.constant 0 : i32
    %c0_i32_2 = arith.constant 0 : i32
    return %c0_i32, %c0_i32_0, %c0_i32_1 : i32, i32, i32
  }
  func.func @transform_14(%arg0: i32) -> (i32, i32) {
    %c0_i32 = arith.constant 0 : i32
    %c0_i32_0 = arith.constant 0 : i32
    %c0_i32_1 = arith.constant 0 : i32
    return %c0_i32, %c0_i32_0 : i32, i32
  }
  func.func @transform_15(%arg0: i32) -> (i32, i32) {
    %c0_i32 = arith.constant 0 : i32
    %c0_i32_0 = arith.constant 0 : i32
    %c0_i32_1 = arith.constant 0 : i32
    return %c0_i32, %c0_i32_0 : i32, i32
  }
  func.func @transform_16(%arg0: i32) -> (i32, i32) {
    %c0_i32 = arith.constant 0 : i32
    %c0_i32_0 = arith.constant 0 : i32
    %c0_i32_1 = arith.constant 0 : i32
    return %c0_i32, %c0_i32_0 : i32, i32
  }
  func.func @transform_17(%arg0: i32) -> (i32, i32) {
    %c0_i32 = arith.constant 0 : i32
    %c0_i32_0 = arith.constant 0 : i32
    return %arg0, %c0_i32 : i32, i32
  }
}

</mosaic_0001>

<llo_original>
// kernel: student_initiative_discriminator.1
$region0: #{student_initiative_discriminator.1}
  #allocation0 [shape = 'u32[]', space=smem, size = 0x4, offset = 0x4, fixed_abs, tag = 'smem constant byte address 0x4 - core index']
  #allocation1 [shape = 'u32[144,128]{1,0:T(1,128)}', space=vmem, size = 0x12000, scoped, tag = 'internal scratch']
  #allocation2 [shape = 'f32[8,32]{1,0:T(8,128)}', space=vmem, size = 0x1000, scoped, tag = 'scratch operand']
  #allocation3 [shape = 'f32[1,1]{1,0:T(1,128)S(1)}', space=vmem, size = 0x200, scoped, tag = 'scoped memory for student_initiative_discriminator.1']
  %s0 = inlined_call_operand.vmem [shape: f32[16,32], index: 0, kind: input, shape index: {}]
  %s1 = inlined_call_operand.vmem [shape: f32[8,8], index: 1, kind: input, shape index: {}]
  %s2 = inlined_call_operand.vmem [shape: f32[16,32], index: 2, kind: input, shape index: {}]
  %s3 = inlined_call_operand.vmem [shape: f32[16,32], index: 3, kind: input, shape index: {}]
  %s4 = inlined_call_operand.vmem [shape: f32[16,32], index: 4, kind: input, shape index: {}]
  %s5 = inlined_call_operand.vmem [shape: f32[2,32,96], index: 5, kind: input, shape index: {}]
  %s6 = inlined_call_operand.vmem [shape: f32[2,96], index: 6, kind: input, shape index: {}]
  %s7 = inlined_call_operand.vmem [shape: f32[2,32,32], index: 7, kind: input, shape index: {}]
  %s8 = inlined_call_operand.vmem [shape: f32[2,32], index: 8, kind: input, shape index: {}]
  %s9 = inlined_call_operand.vmem [shape: f32[2,32,64], index: 9, kind: input, shape index: {}]
  %s10 = inlined_call_operand.vmem [shape: f32[2,64], index: 10, kind: input, shape index: {}]
  %s11 = inlined_call_operand.vmem [shape: f32[2,64,32], index: 11, kind: input, shape index: {}]
  %s12 = inlined_call_operand.vmem [shape: f32[2,32], index: 12, kind: input, shape index: {}]
  %s13 = inlined_call_operand.vmem [shape: f32[2,4,32], index: 13, kind: input, shape index: {}]
  %s14 = inlined_call_operand.vmem [shape: f32[2,32], index: 14, kind: input, shape index: {}]
  %s15 = inlined_call_operand.vmem [shape: f32[4,32], index: 15, kind: input, shape index: {}]
  %s16 = inlined_call_operand.<no memory space> [shape: f32[1,1], index: 16, kind: input, shape index: {}]
  %s17 = inlined_call_operand.vmem [shape: f32[16,128], index: 17, kind: output, shape index: {}]
  %s18 = sld [smem:[#allocation0]]
  $region101: #{student_initiative_discriminator.1} parent=0
    _
  %s20 = ssub.s32 1, %s18
  %s21 = scalar_select 0, %s20, %s18
  %v22 = vstv %s16
  %23 = vst [vmem:[#allocation3] sm:$0x1] %v22
  loop: start=0, step=1, limit=4
  $region2: #{student_initiative_discriminator.1} parent=0 // loop_pre_header
    _
  $region3: #{student_initiative_discriminator.1} parent=0 // loop_header
    %s25 = sphi 0, %s29
    %p26 = scmp.ge.s32.totalorder %s25, 4
    %s35 = sphi 0, %s37
    %s38 = sphi 0, %s35
    %s39 = sphi 0, %s38
    %s55 = sphi 0, %s39
    %s59 = sphi 0, %s59
    %s61 = sphi 0, %s59
    %s62 = sphi 0, %s61
    %s76 = sphi 0, %s62
    %s82 = sphi 0, %s84
    %s85 = sphi 0, %s82
    %s86 = sphi 0, %s85
    %s102 = sphi 0, %s86
    %s108 = sphi 0, %s110
    %s111 = sphi 0, %s108
    %s112 = sphi 0, %s111
    %s128 = sphi 0, %s112
    %s134 = sphi 0, %s136
    %s137 = sphi 0, %s134
    %s138 = sphi 0, %s137
    %s154 = sphi 0, %s138
    %s158 = sphi 0, %s158
    %s160 = sphi 0, %s158
    %s161 = sphi 0, %s160
    %s175 = sphi 0, %s161
    %s179 = sphi 0, %s179
    %s181 = sphi 0, %s179
    %s182 = sphi 0, %s181
    %s196 = sphi 0, %s182
    %s200 = sphi 0, %s200
    %s202 = sphi 0, %s200
    %s203 = sphi 0, %s202
    %s217 = sphi 0, %s203
    %s221 = sphi 0, %s221
    %s223 = sphi 0, %s221
    %s224 = sphi 0, %s223
    %s238 = sphi 0, %s224
    %s242 = sphi 0, %s242
    %s244 = sphi 0, %s242
    %s245 = sphi 0, %s244
    %s259 = sphi 0, %s245
    %s263 = sphi 0, %s263
    %s265 = sphi 0, %s263
    %s266 = sphi 0, %s265
    %s280 = sphi 0, %s266
    %s284 = sphi 0, %s284
    %s286 = sphi 0, %s284
    %s287 = sphi 0, %s286
    %s301 = sphi 0, %s287
    %s305 = sphi 0, %s305
    %s307 = sphi 0, %s305
    %s308 = sphi 0, %s307
    %s322 = sphi 0, %s308
    %s326 = sphi 0, %s326
    %s328 = sphi 0, %s326
    %s329 = sphi 0, %s328
    %s343 = sphi 0, %s329
    %s347 = sphi 0, %s347
    %s349 = sphi 0, %s347
    %s350 = sphi 0, %s349
    %s364 = sphi 0, %s350
    %s368 = sphi 0, %s368
    %s370 = sphi 0, %s368
    %s371 = sphi 0, %s370
    %s385 = sphi 0, %s371
    %s389 = sphi 0, %s389
    %s391 = sphi 0, %s389
    %s392 = sphi 0, %s391
    %s406 = sphi 0, %s392
    %s412 = sphi 0, %s414
    %s415 = sphi 0, %s412
    %s416 = sphi 0, %s415
    %s432 = sphi 0, %s416
  $region4: #{student_initiative_discriminator.1} parent=0 // loop_header_branch
    %28 = sbr.rel (%p26) target = $region8
  $region5: #{student_initiative_discriminator.1} parent=0 // loop_body
    %s30 = ssub.s32 %s25, 1
    %s31 = ssub.s32 %s25, 2
    %s32 = sadd.s32 %s25, 1
    %s33 = ssub.s32 %s25, %s32
    %p34 = scmp.eq.s32.totalorder %s33, 0
    %s36 = sadd.s32 %s35, 1
    %s37 = scalar_select %p34, %s35, %s36
    %p40 = pneg %p34
    %p41 = scmp.eq.s32.totalorder %s25, 1
    %p42 = por %p40, %p41
    %p43 = scmp.ne.s32.totalorder %s35, %s38
    %p44 = scmp.eq.s32.totalorder %s25, 0
    %p45 = por %p43, %p44
    %p46 = scmp.ne.s32.totalorder %s35, %s38
    %p47 = scmp.eq.s32.totalorder %s30, 1
    %p48 = por %p46, %p47
    %p49 = scmp.ne.s32.totalorder %s38, %s39
    %p50 = scmp.eq.s32.totalorder %s30, 0
    %p51 = por %p49, %p50
    %p52 = scmp.ne.s32.totalorder %s38, %s39
    %p53 = scmp.eq.s32.totalorder %s31, 1
    %p54 = por %p52, %p53
    %p56 = scmp.ne.s32.totalorder %s39, %s55
    %p57 = scmp.eq.s32.totalorder %s31, 0
    %p58 = por %p56, %p57
    %s60 = sadd.s32 %s59, 1
    %p63 = scmp.eq.s32.totalorder %s25, 1
    %p64 = scmp.ne.s32.totalorder %s59, %s61
    %p65 = scmp.eq.s32.totalorder %s25, 0
    %p66 = por %p64, %p65
    %p67 = scmp.ne.s32.totalorder %s59, %s61
    %p68 = scmp.eq.s32.totalorder %s30, 1
    %p69 = por %p67, %p68
    %p70 = scmp.ne.s32.totalorder %s61, %s62
    %p71 = scmp.eq.s32.totalorder %s30, 0
    %p72 = por %p70, %p71
    %p73 = scmp.ne.s32.totalorder %s61, %s62
    %p74 = scmp.eq.s32.totalorder %s31, 1
    %p75 = por %p73, %p74
    %p77 = scmp.ne.s32.totalorder %s62, %s76
    %p78 = scmp.eq.s32.totalorder %s31, 0
    %p79 = por %p77, %p78
    %s80 = ssub.s32 %s25, %s32
    %p81 = scmp.eq.s32.totalorder %s80, 0
    %s83 = sadd.s32 %s82, 1
    %s84 = scalar_select %p81, %s82, %s83
    %p87 = pneg %p81
    %p88 = scmp.eq.s32.totalorder %s25, 1
    %p89 = por %p87, %p88
    %p90 = scmp.ne.s32.totalorder %s82, %s85
    %p91 = scmp.eq.s32.totalorder %s25, 0
    %p92 = por %p90, %p91
    %p93 = scmp.ne.s32.totalorder %s82, %s85
    %p94 = scmp.eq.s32.totalorder %s30, 1
    %p95 = por %p93, %p94
    %p96 = scmp.ne.s32.totalorder %s85, %s86
    %p97 = scmp.eq.s32.totalorder %s30, 0
    %p98 = por %p96, %p97
    %p99 = scmp.ne.s32.totalorder %s85, %s86
    %p100 = scmp.eq.s32.totalorder %s31, 1
    %p101 = por %p99, %p100
    %p103 = scmp.ne.s32.totalorder %s86, %s102
    %p104 = scmp.eq.s32.totalorder %s31, 0
    %p105 = por %p103, %p104
    %s106 = ssub.s32 %s25, %s32
    %p107 = scmp.eq.s32.totalorder %s106, 0
    %s109 = sadd.s32 %s108, 1
    %s110 = scalar_select %p107, %s108, %s109
    %p113 = pneg %p107
    %p114 = scmp.eq.s32.totalorder %s25, 1
    %p115 = por %p113, %p114
    %p116 = scmp.ne.s32.totalorder %s108, %s111
    %p117 = scmp.eq.s32.totalorder %s25, 0
    %p118 = por %p116, %p117
    %p119 = scmp.ne.s32.totalorder %s108, %s111
    %p120 = scmp.eq.s32.totalorder %s30, 1
    %p121 = por %p119, %p120
    %p122 = scmp.ne.s32.totalorder %s111, %s112
    %p123 = scmp.eq.s32.totalorder %s30, 0
    %p124 = por %p122, %p123
    %p125 = scmp.ne.s32.totalorder %s111, %s112
    %p126 = scmp.eq.s32.totalorder %s31, 1
    %p127 = por %p125, %p126
    %p129 = scmp.ne.s32.totalorder %s112, %s128
    %p130 = scmp.eq.s32.totalorder %s31, 0
    %p131 = por %p129, %p130
    %s132 = ssub.s32 %s25, %s32
    %p133 = scmp.eq.s32.totalorder %s132, 0
    %s135 = sadd.s32 %s134, 1
    %s136 = scalar_select %p133, %s134, %s135
    %p139 = pneg %p133
    %p140 = scmp.eq.s32.totalorder %s25, 1
    %p141 = por %p139, %p140
    %p142 = scmp.ne.s32.totalorder %s134, %s137
    %p143 = scmp.eq.s32.totalorder %s25, 0
    %p144 = por %p142, %p143
    %p145 = scmp.ne.s32.totalorder %s134, %s137
    %p146 = scmp.eq.s32.totalorder %s30, 1
    %p147 = por %p145, %p146
    %p148 = scmp.ne.s32.totalorder %s137, %s138
    %p149 = scmp.eq.s32.totalorder %s30, 0
    %p150 = por %p148, %p149
    %p151 = scmp.ne.s32.totalorder %s137, %s138
    %p152 = scmp.eq.s32.totalorder %s31, 1
    %p153 = por %p151, %p152
    %p155 = scmp.ne.s32.totalorder %s138, %s154
    %p156 = scmp.eq.s32.totalorder %s31, 0
    %p157 = por %p155, %p156
    %s159 = sadd.s32 %s158, 1
    %p162 = scmp.eq.s32.totalorder %s25, 1
    %p163 = scmp.ne.s32.totalorder %s158, %s160
    %p164 = scmp.eq.s32.totalorder %s25, 0
    %p165 = por %p163, %p164
    %p166 = scmp.ne.s32.totalorder %s158, %s160
    %p167 = scmp.eq.s32.totalorder %s30, 1
    %p168 = por %p166, %p167
    %p169 = scmp.ne.s32.totalorder %s160, %s161
    %p170 = scmp.eq.s32.totalorder %s30, 0
    %p171 = por %p169, %p170
    %p172 = scmp.ne.s32.totalorder %s160, %s161
    %p173 = scmp.eq.s32.totalorder %s31, 1
    %p174 = por %p172, %p173
    %p176 = scmp.ne.s32.totalorder %s161, %s175
    %p177 = scmp.eq.s32.totalorder %s31, 0
    %p178 = por %p176, %p177
    %s180 = sadd.s32 %s179, 1
    %p183 = scmp.eq.s32.totalorder %s25, 1
    %p184 = scmp.ne.s32.totalorder %s179, %s181
    %p185 = scmp.eq.s32.totalorder %s25, 0
    %p186 = por %p184, %p185
    %p187 = scmp.ne.s32.totalorder %s179, %s181
    %p188 = scmp.eq.s32.totalorder %s30, 1
    %p189 = por %p187, %p188
    %p190 = scmp.ne.s32.totalorder %s181, %s182
    %p191 = scmp.eq.s32.totalorder %s30, 0
    %p192 = por %p190, %p191
    %p193 = scmp.ne.s32.totalorder %s181, %s182
    %p194 = scmp.eq.s32.totalorder %s31, 1
    %p195 = por %p193, %p194
    %p197 = scmp.ne.s32.totalorder %s182, %s196
    %p198 = scmp.eq.s32.totalorder %s31, 0
    %p199 = por %p197, %p198
    %s201 = sadd.s32 %s200, 1
    %p204 = scmp.eq.s32.totalorder %s25, 1
    %p205 = scmp.ne.s32.totalorder %s200, %s202
    %p206 = scmp.eq.s32.totalorder %s25, 0
    %p207 = por %p205, %p206
    %p208 = scmp.ne.s32.totalorder %s200, %s202
    %p209 = scmp.eq.s32.totalorder %s30, 1
    %p210 = por %p208, %p209
    %p211 = scmp.ne.s32.totalorder %s202, %s203
    %p212 = scmp.eq.s32.totalorder %s30, 0
    %p213 = por %p211, %p212
    %p214 = scmp.ne.s32.totalorder %s202, %s203
    %p215 = scmp.eq.s32.totalorder %s31, 1
    %p216 = por %p214, %p215
    %p218 = scmp.ne.s32.totalorder %s203, %s217
    %p219 = scmp.eq.s32.totalorder %s31, 0
    %p220 = por %p218, %p219
    %s222 = sadd.s32 %s221, 1
    %p225 = scmp.eq.s32.totalorder %s25, 1
    %p226 = scmp.ne.s32.totalorder %s221, %s223
    %p227 = scmp.eq.s32.totalorder %s25, 0
    %p228 = por %p226, %p227
    %p229 = scmp.ne.s32.totalorder %s221, %s223
    %p230 = scmp.eq.s32.totalorder %s30, 1
    %p231 = por %p229, %p230
    %p232 = scmp.ne.s32.totalorder %s223, %s224
    %p233 = scmp.eq.s32.totalorder %s30, 0
    %p234 = por %p232, %p233
    %p235 = scmp.ne.s32.totalorder %s223, %s224
    %p236 = scmp.eq.s32.totalorder %s31, 1
    %p237 = por %p235, %p236
    %p239 = scmp.ne.s32.totalorder %s224, %s238
    %p240 = scmp.eq.s32.totalorder %s31, 0
    %p241 = por %p239, %p240
    %s243 = sadd.s32 %s242, 1
    %p246 = scmp.eq.s32.totalorder %s25, 1
    %p247 = scmp.ne.s32.totalorder %s242, %s244
    %p248 = scmp.eq.s32.totalorder %s25, 0
    %p249 = por %p247, %p248
    %p250 = scmp.ne.s32.totalorder %s242, %s244
    %p251 = scmp.eq.s32.totalorder %s30, 1
    %p252 = por %p250, %p251
    %p253 = scmp.ne.s32.totalorder %s244, %s245
    %p254 = scmp.eq.s32.totalorder %s30, 0
    %p255 = por %p253, %p254
    %p256 = scmp.ne.s32.totalorder %s244, %s245
    %p257 = scmp.eq.s32.totalorder %s31, 1
    %p258 = por %p256, %p257
    %p260 = scmp.ne.s32.totalorder %s245, %s259
    %p261 = scmp.eq.s32.totalorder %s31, 0
    %p262 = por %p260, %p261
    %s264 = sadd.s32 %s263, 1
    %p267 = scmp.eq.s32.totalorder %s25, 1
    %p268 = scmp.ne.s32.totalorder %s263, %s265
    %p269 = scmp.eq.s32.totalorder %s25, 0
    %p270 = por %p268, %p269
    %p271 = scmp.ne.s32.totalorder %s263, %s265
    %p272 = scmp.eq.s32.totalorder %s30, 1
    %p273 = por %p271, %p272
    %p274 = scmp.ne.s32.totalorder %s265, %s266
    %p275 = scmp.eq.s32.totalorder %s30, 0
    %p276 = por %p274, %p275
    %p277 = scmp.ne.s32.totalorder %s265, %s266
    %p278 = scmp.eq.s32.totalorder %s31, 1
    %p279 = por %p277, %p278
    %p281 = scmp.ne.s32.totalorder %s266, %s280
    %p282 = scmp.eq.s32.totalorder %s31, 0
    %p283 = por %p281, %p282
    %s285 = sadd.s32 %s284, 1
    %p288 = scmp.eq.s32.totalorder %s25, 1
    %p289 = scmp.ne.s32.totalorder %s284, %s286
    %p290 = scmp.eq.s32.totalorder %s25, 0
    %p291 = por %p289, %p290
    %p292 = scmp.ne.s32.totalorder %s284, %s286
    %p293 = scmp.eq.s32.totalorder %s30, 1
    %p294 = por %p292, %p293
    %p295 = scmp.ne.s32.totalorder %s286, %s287
    %p296 = scmp.eq.s32.totalorder %s30, 0
    %p297 = por %p295, %p296
    %p298 = scmp.ne.s32.totalorder %s286, %s287
    %p299 = scmp.eq.s32.totalorder %s31, 1
    %p300 = por %p298, %p299
    %p302 = scmp.ne.s32.totalorder %s287, %s301
    %p303 = scmp.eq.s32.totalorder %s31, 0
    %p304 = por %p302, %p303
    %s306 = sadd.s32 %s305, 1
    %p309 = scmp.eq.s32.totalorder %s25, 1
    %p310 = scmp.ne.s32.totalorder %s305, %s307
    %p311 = scmp.eq.s32.totalorder %s25, 0
    %p312 = por %p310, %p311
    %p313 = scmp.ne.s32.totalorder %s305, %s307
    %p314 = scmp.eq.s32.totalorder %s30, 1
    %p315 = por %p313, %p314
    %p316 = scmp.ne.s32.totalorder %s307, %s308
    %p317 = scmp.eq.s32.totalorder %s30, 0
    %p318 = por %p316, %p317
    %p319 = scmp.ne.s32.totalorder %s307, %s308
    %p320 = scmp.eq.s32.totalorder %s31, 1
    %p321 = por %p319, %p320
    %p323 = scmp.ne.s32.totalorder %s308, %s322
    %p324 = scmp.eq.s32.totalorder %s31, 0
    %p325 = por %p323, %p324
    %s327 = sadd.s32 %s326, 1
    %p330 = scmp.eq.s32.totalorder %s25, 1
    %p331 = scmp.ne.s32.totalorder %s326, %s328
    %p332 = scmp.eq.s32.totalorder %s25, 0
    %p333 = por %p331, %p332
    %p334 = scmp.ne.s32.totalorder %s326, %s328
    %p335 = scmp.eq.s32.totalorder %s30, 1
    %p336 = por %p334, %p335
    %p337 = scmp.ne.s32.totalorder %s328, %s329
    %p338 = scmp.eq.s32.totalorder %s30, 0
    %p339 = por %p337, %p338
    %p340 = scmp.ne.s32.totalorder %s328, %s329
    %p341 = scmp.eq.s32.totalorder %s31, 1
    %p342 = por %p340, %p341
    %p344 = scmp.ne.s32.totalorder %s329, %s343
    %p345 = scmp.eq.s32.totalorder %s31, 0
    %p346 = por %p344, %p345
    %s348 = sadd.s32 %s347, 1
    %p351 = scmp.eq.s32.totalorder %s25, 1
    %p352 = scmp.ne.s32.totalorder %s347, %s349
    %p353 = scmp.eq.s32.totalorder %s25, 0
    %p354 = por %p352, %p353
    %p355 = scmp.ne.s32.totalorder %s347, %s349
    %p356 = scmp.eq.s32.totalorder %s30, 1
    %p357 = por %p355, %p356
    %p358 = scmp.ne.s32.totalorder %s349, %s350
    %p359 = scmp.eq.s32.totalorder %s30, 0
    %p360 = por %p358, %p359
    %p361 = scmp.ne.s32.totalorder %s349, %s350
    %p362 = scmp.eq.s32.totalorder %s31, 1
    %p363 = por %p361, %p362
    %p365 = scmp.ne.s32.totalorder %s350, %s364
    %p366 = scmp.eq.s32.totalorder %s31, 0
    %p367 = por %p365, %p366
    %s369 = sadd.s32 %s368, 1
    %p372 = scmp.eq.s32.totalorder %s25, 1
    %p373 = scmp.ne.s32.totalorder %s368, %s370
    %p374 = scmp.eq.s32.totalorder %s25, 0
    %p375 = por %p373, %p374
    %p376 = scmp.ne.s32.totalorder %s368, %s370
    %p377 = scmp.eq.s32.totalorder %s30, 1
    %p378 = por %p376, %p377
    %p379 = scmp.ne.s32.totalorder %s370, %s371
    %p380 = scmp.eq.s32.totalorder %s30, 0
    %p381 = por %p379, %p380
    %p382 = scmp.ne.s32.totalorder %s370, %s371
    %p383 = scmp.eq.s32.totalorder %s31, 1
    %p384 = por %p382, %p383
    %p386 = scmp.ne.s32.totalorder %s371, %s385
    %p387 = scmp.eq.s32.totalorder %s31, 0
    %p388 = por %p386, %p387
    %s390 = sadd.s32 %s389, 1
    %p393 = scmp.eq.s32.totalorder %s25, 1
    %p394 = scmp.ne.s32.totalorder %s389, %s391
    %p395 = scmp.eq.s32.totalorder %s25, 0
    %p396 = por %p394, %p395
    %p397 = scmp.ne.s32.totalorder %s389, %s391
    %p398 = scmp.eq.s32.totalorder %s30, 1
    %p399 = por %p397, %p398
    %p400 = scmp.ne.s32.totalorder %s391, %s392
    %p401 = scmp.eq.s32.totalorder %s30, 0
    %p402 = por %p400, %p401
    %p403 = scmp.ne.s32.totalorder %s391, %s392
    %p404 = scmp.eq.s32.totalorder %s31, 1
    %p405 = por %p403, %p404
    %p407 = scmp.ne.s32.totalorder %s392, %s406
    %p408 = scmp.eq.s32.totalorder %s31, 0
    %p409 = por %p407, %p408
    %s410 = ssub.s32 %s25, %s32
    %p411 = scmp.eq.s32.totalorder %s410, 0
    %s413 = sadd.s32 %s412, 1
    %s414 = scalar_select %p411, %s412, %s413
    %p417 = pneg %p411
    %p418 = scmp.eq.s32.totalorder %s25, 1
    %p419 = por %p417, %p418
    %p420 = scmp.ne.s32.totalorder %s412, %s415
    %p421 = scmp.eq.s32.totalorder %s25, 0
    %p422 = por %p420, %p421
    %p423 = scmp.ne.s32.totalorder %s412, %s415
    %p424 = scmp.eq.s32.totalorder %s30, 1
    %p425 = por %p423, %p424
    %p426 = scmp.ne.s32.totalorder %s415, %s416
    %p427 = scmp.eq.s32.totalorder %s30, 0
    %p428 = por %p426, %p427
    %p429 = scmp.ne.s32.totalorder %s415, %s416
    %p430 = scmp.eq.s32.totalorder %s31, 1
    %p431 = por %p429, %p430
    %p433 = scmp.ne.s32.totalorder %s416, %s432
    %p434 = scmp.eq.s32.totalorder %s31, 0
    %p435 = por %p433, %p434
    %p436 = scmp.le.s32.totalorder 1, %s25
    %p437 = scmp.lt.s32.totalorder %s25, 3
    %p438 = pnand %p436, %p437
    %p439 = pneg %p438
    // Predicated region
    $region9: #{student_initiative_discriminator.1} parent=5 // pred_check
      _
    $region10: #{student_initiative_discriminator.1} parent=5 // pred_check_branch
      %441 = sbr.rel (%p438) target = $region12
    $region11: #{student_initiative_discriminator.1} parent=5 // pred_region
      %s442 = ssub.s32 %s25, 1
      // Predicated region
      $region13: #{student_initiative_discriminator.1} parent=11 // pred_check
        %p443 = pneg %p72
      $region14: #{student_initiative_discriminator.1} parent=11 // pred_check_branch
        %445 = sbr.rel (%p443) target = $region16
      $region15: #{student_initiative_discriminator.1} parent=11 // pred_region
        _
      $region16: #{student_initiative_discriminator.1} parent=11 // pred_fallthru
        _
      // Predicated region
      $region17: #{student_initiative_discriminator.1} parent=11 // pred_check
        %p446 = pneg %p171
      $region18: #{student_initiative_discriminator.1} parent=11 // pred_check_branch
        %448 = sbr.rel (%p446) target = $region20
      $region19: #{student_initiative_discriminator.1} parent=11 // pred_region
        _
      $region20: #{student_initiative_discriminator.1} parent=11 // pred_fallthru
        _
      // Predicated region
      $region21: #{student_initiative_discriminator.1} parent=11 // pred_check
        %p449 = pneg %p192
      $region22: #{student_initiative_discriminator.1} parent=11 // pred_check_branch
        %451 = sbr.rel (%p449) target = $region24
      $region23: #{student_initiative_discriminator.1} parent=11 // pred_region
        _
      $region24: #{student_initiative_discriminator.1} parent=11 // pred_fallthru
        _
      // Predicated region
      $region25: #{student_initiative_discriminator.1} parent=11 // pred_check
        %p452 = pneg %p213
      $region26: #{student_initiative_discriminator.1} parent=11 // pred_check_branch
        %454 = sbr.rel (%p452) target = $region28
      $region27: #{student_initiative_discriminator.1} parent=11 // pred_region
        _
      $region28: #{student_initiative_discriminator.1} parent=11 // pred_fallthru
        _
      // Predicated region
      $region29: #{student_initiative_discriminator.1} parent=11 // pred_check
        %p455 = pneg %p234
      $region30: #{student_initiative_discriminator.1} parent=11 // pred_check_branch
        %457 = sbr.rel (%p455) target = $region32
      $region31: #{student_initiative_discriminator.1} parent=11 // pred_region
        _
      $region32: #{student_initiative_discriminator.1} parent=11 // pred_fallthru
        _
      // Predicated region
      $region33: #{student_initiative_discriminator.1} parent=11 // pred_check
        %p458 = pneg %p255
      $region34: #{student_initiative_discriminator.1} parent=11 // pred_check_branch
        %460 = sbr.rel (%p458) target = $region36
      $region35: #{student_initiative_discriminator.1} parent=11 // pred_region
        _
      $region36: #{student_initiative_discriminator.1} parent=11 // pred_fallthru
        _
      // Predicated region
      $region37: #{student_initiative_discriminator.1} parent=11 // pred_check
        %p461 = pneg %p276
      $region38: #{student_initiative_discriminator.1} parent=11 // pred_check_branch
        %463 = sbr.rel (%p461) target = $region40
      $region39: #{student_initiative_discriminator.1} parent=11 // pred_region
        _
      $region40: #{student_initiative_discriminator.1} parent=11 // pred_fallthru
        _
      // Predicated region
      $region41: #{student_initiative_discriminator.1} parent=11 // pred_check
        %p464 = pneg %p297
      $region42: #{student_initiative_discriminator.1} parent=11 // pred_check_branch
        %466 = sbr.rel (%p464) target = $region44
      $region43: #{student_initiative_discriminator.1} parent=11 // pred_region
        _
      $region44: #{student_initiative_discriminator.1} parent=11 // pred_fallthru
        _
      // Predicated region
      $region45: #{student_initiative_discriminator.1} parent=11 // pred_check
        %p467 = pneg %p318
      $region46: #{student_initiative_discriminator.1} parent=11 // pred_check_branch
        %469 = sbr.rel (%p467) target = $region48
      $region47: #{student_initiative_discriminator.1} parent=11 // pred_region
        _
      $region48: #{student_initiative_discriminator.1} parent=11 // pred_fallthru
        _
      // Predicated region
      $region49: #{student_initiative_discriminator.1} parent=11 // pred_check
        %p470 = pneg %p339
      $region50: #{student_initiative_discriminator.1} parent=11 // pred_check_branch
        %472 = sbr.rel (%p470) target = $region52
      $region51: #{student_initiative_discriminator.1} parent=11 // pred_region
        _
      $region52: #{student_initiative_discriminator.1} parent=11 // pred_fallthru
        _
      // Predicated region
      $region53: #{student_initiative_discriminator.1} parent=11 // pred_check
        %p473 = pneg %p360
      $region54: #{student_initiative_discriminator.1} parent=11 // pred_check_branch
        %475 = sbr.rel (%p473) target = $region56
      $region55: #{student_initiative_discriminator.1} parent=11 // pred_region
        _
      $region56: #{student_initiative_discriminator.1} parent=11 // pred_fallthru
        _
      // Predicated region
      $region57: #{student_initiative_discriminator.1} parent=11 // pred_check
        %p476 = pneg %p381
      $region58: #{student_initiative_discriminator.1} parent=11 // pred_check_branch
        %478 = sbr.rel (%p476) target = $region60
      $region59: #{student_initiative_discriminator.1} parent=11 // pred_region
        _
      $region60: #{student_initiative_discriminator.1} parent=11 // pred_fallthru
        _
      // Predicated region
      $region61: #{student_initiative_discriminator.1} parent=11 // pred_check
        %p479 = pneg %p402
      $region62: #{student_initiative_discriminator.1} parent=11 // pred_check_branch
        %481 = sbr.rel (%p479) target = $region64
      $region63: #{student_initiative_discriminator.1} parent=11 // pred_region
        _
      $region64: #{student_initiative_discriminator.1} parent=11 // pred_fallthru
        _
    $region12: #{student_initiative_discriminator.1} parent=5 // pred_fallthru
      _
    %p482 = scmp.lt.s32.totalorder %s25, 2
    // Predicated region
    $region65: #{student_initiative_discriminator.1} parent=5 // pred_check
      %p483 = pneg %p482
    $region66: #{student_initiative_discriminator.1} parent=5 // pred_check_branch
      %485 = sbr.rel (%p483) target = $region68
    $region67: #{student_initiative_discriminator.1} parent=5 // pred_region
      // Predicated region
      $region69: #{student_initiative_discriminator.1} parent=67 // pred_check
        %p486 = pneg %p45
      $region70: #{student_initiative_discriminator.1} parent=67 // pred_check_branch
        %488 = sbr.rel (%p486) target = $region72
      $region71: #{student_initiative_discriminator.1} parent=67 // pred_region
        %p489 = scmp.lt.s32.totalorder %s25, 1
        %s490 = scalar_select %p489, %s25, 1
        %s491 = smul.addr %s490, 8
        %s492 = scalar_lea.vmem %s0, %s491
      $region72: #{student_initiative_discriminator.1} parent=67 // pred_fallthru
        _
      // Predicated region
      $region73: #{student_initiative_discriminator.1} parent=67 // pred_check
        %p493 = pneg %p92
      $region74: #{student_initiative_discriminator.1} parent=67 // pred_check_branch
        %495 = sbr.rel (%p493) target = $region76
      $region75: #{student_initiative_discriminator.1} parent=67 // pred_region
        %p496 = scmp.lt.s32.totalorder %s25, 1
        %s497 = scalar_select %p496, %s25, 1
        %s498 = smul.addr %s497, 8
        %s499 = scalar_lea.vmem %s2, %s498
      $region76: #{student_initiative_discriminator.1} parent=67 // pred_fallthru
        _
      // Predicated region
      $region77: #{student_initiative_discriminator.1} parent=67 // pred_check
        %p500 = pneg %p118
      $region78: #{student_initiative_discriminator.1} parent=67 // pred_check_branch
        %502 = sbr.rel (%p500) target = $region80
      $region79: #{student_initiative_discriminator.1} parent=67 // pred_region
        %p503 = scmp.lt.s32.totalorder %s25, 1
        %s504 = scalar_select %p503, %s25, 1
        %s505 = smul.addr %s504, 8
        %s506 = scalar_lea.vmem %s3, %s505
      $region80: #{student_initiative_discriminator.1} parent=67 // pred_fallthru
        _
      // Predicated region
      $region81: #{student_initiative_discriminator.1} parent=67 // pred_check
        %p507 = pneg %p144
      $region82: #{student_initiative_discriminator.1} parent=67 // pred_check_branch
        %509 = sbr.rel (%p507) target = $region84
      $region83: #{student_initiative_discriminator.1} parent=67 // pred_region
        %p510 = scmp.lt.s32.totalorder %s25, 1
        %s511 = scalar_select %p510, %s25, 1
        %s512 = smul.addr %s511, 8
        %s513 = scalar_lea.vmem %s4, %s512
      $region84: #{student_initiative_discriminator.1} parent=67 // pred_fallthru
        _
    $region68: #{student_initiative_discriminator.1} parent=5 // pred_fallthru
      _
    %p514 = scmp.le.s32.totalorder 1, %s25
    %p515 = scmp.lt.s32.totalorder %s25, 3
    %p516 = pnand %p514, %p515
    %p517 = pneg %p516
    // Predicated region
    $region85: #{student_initiative_discriminator.1} parent=5 // pred_check
      _
    $region86: #{student_initiative_discriminator.1} parent=5 // pred_check_branch
      %519 = sbr.rel (%p516) target = $region88
    $region87: #{student_initiative_discriminator.1} parent=5 // pred_region
      %s520 = ssub.s32 %s25, 1
      %p521 = scmp.lt.s32.totalorder %s30, 1
      %s522 = scalar_select %p521, %s30, 1
      %s523 = smul.addr %s522, 8
      %s524 = scalar_lea.vmem %s0, %s523
      %p525 = pneg %p51
      %p526 = pneg %p48
      %p527 = pneg %p72
      %p528 = pneg %p69
      %p529 = scmp.lt.s32.totalorder %s30, 1
      %s530 = scalar_select %p529, %s30, 1
      %s531 = smul.addr %s530, 8
      %s532 = scalar_lea.vmem %s2, %s531
      %p533 = pneg %p98
      %p534 = pneg %p95
      %p535 = scmp.lt.s32.totalorder %s30, 1
      %s536 = scalar_select %p535, %s30, 1
      %s537 = smul.addr %s536, 8
      %s538 = scalar_lea.vmem %s3, %s537
      %p539 = pneg %p124
      %p540 = pneg %p121
      %p541 = scmp.lt.s32.totalorder %s30, 1
      %s542 = scalar_select %p541, %s30, 1
      %s543 = smul.addr %s542, 8
      %s544 = scalar_lea.vmem %s4, %s543
      %p545 = pneg %p150
      %p546 = pneg %p147
      %p547 = pneg %p171
      %p548 = pneg %p168
      %p549 = pneg %p192
      %p550 = pneg %p189
      %p551 = pneg %p213
      %p552 = pneg %p210
      %p553 = pneg %p234
      %p554 = pneg %p231
      %p555 = pneg %p255
      %p556 = pneg %p252
      %p557 = pneg %p276
      %p558 = pneg %p273
      %p559 = pneg %p297
      %p560 = pneg %p294
      %p561 = pneg %p318
      %p562 = pneg %p315
      %p563 = pneg %p339
      %p564 = pneg %p336
      %p565 = pneg %p360
      %p566 = pneg %p357
      %p567 = pneg %p381
      %p568 = pneg %p378
      %p569 = pneg %p402
      %p570 = pneg %p399
      %p571 = pneg %p428
      %p572 = pneg %p425
      %p573 = scmp.lt.s32.totalorder %s30, 1
      %s574 = scalar_select %p573, %s30, 1
      %s575 = smul.addr %s574, 8
      %s576 = scalar_lea.vmem %s17, %s575
      %p577 = scmp.lt.s32.totalorder %s30, 1
      %s578 = scalar_select %p577, %s30, 1
      %s579 = smul.addr %s578, 8
      %s580 = scalar_lea.vmem %s0, %s579
      %p581 = scmp.lt.s32.totalorder %s30, 1
      %s582 = scalar_select %p581, %s30, 1
      %s583 = smul.addr %s582, 8
      %s584 = scalar_lea.vmem %s2, %s583
      %p585 = scmp.lt.s32.totalorder %s30, 1
      %s586 = scalar_select %p585, %s30, 1
      %s587 = smul.addr %s586, 8
      %s588 = scalar_lea.vmem %s3, %s587
      %p589 = scmp.lt.s32.totalorder %s30, 1
      %s590 = scalar_select %p589, %s30, 1
      %s591 = smul.addr %s590, 8
      %s592 = scalar_lea.vmem %s4, %s591
      %p593 = scmp.lt.s32.totalorder %s30, 1
      %s594 = scalar_select %p593, %s30, 1
      %s595 = smul.addr %s594, 8
      %s596 = scalar_lea.vmem %s17, %s595
      %v597 = vld [vmem:[%s580] sm:$0xff]
      %v598 = vld [vmem:[%s1] sm:$0xff]
      %v599 = vld [vmem:[%s5] sm:$0xff]
      %v600 = vld [vmem:[%s5 + $0x8] sm:$0xff]
      %v601 = vld [vmem:[%s5 + $0x10] sm:$0xff]
      %v602 = vld [vmem:[%s5 + $0x18] sm:$0xff]
      %v603 = vld [vmem:[%s6] sm:$0x1]
      %v604 = vlaneseq
      %v605 = vshrl.u32 %v604, 7
      %v606 = vsub.s32 0, %v605
      %v607 = vrot.slane %v603, %v606
      %vm608 = vcmask 261120
      %v610 = vsel %vm608, %v597, 0
      %612 = vmatprep.subr.mxu0 0.0
      %613 = vmatpush1.msra.mxu0 0.0
      %614 = vmatprep.subr.mxu0 0.0
      %615 = vmatpush1.msra.mxu0 0.0
      %616 = vmatprep.subr.mxu0 0.0
      %617 = vmatpush1.msra.mxu0 0.0
      %618 = vmatprep.subr.mxu0 0.0
      %619 = vmatpush1.msra.mxu0 0.0
      %620 = vmatprep.subr.mxu0 0.0
      %621 = vmatpush1.msra.mxu0 0.0
      %622 = vmatprep.subr.mxu0 0.0
      %623 = vmatpush1.msra.mxu0 0.0
      %624 = vmatprep.subr.mxu0 0.0
      %625 = vmatpush1.msra.mxu0 0.0
      %626 = vmatprep.subr.mxu0 0.0
      %627 = vmatpush1.msra.mxu0 0.0
      %628 = vmatprep.subr.mxu0 0.0
      %629 = vmatpush1.msra.mxu0 0.0
      %630 = vmatprep.subr.mxu0 0.0
      %631 = vmatpush1.msra.mxu0 0.0
      %632 = vmatprep.subr.mxu0 0.0
      %633 = vmatpush1.msra.mxu0 0.0
      %634 = vmatprep.subr.mxu0 0.0
      %635 = vmatpush1.msra.mxu0 0.0
      %636 = vmatprep.subr.mxu0 0.0
      %637 = vmatpush1.msra.mxu0 %v602
      %638 = vmatprep.subr.mxu0 0.0
      %639 = vmatpush1.msra.mxu0 %v601
      %640 = vmatprep.subr.mxu0 0.0
      %641 = vmatpush1.msra.mxu0 %v600
      %642 = vmatprep.subr.mxu0 0.0
      %643 = vmatpush1.msra.mxu0 %v599
      %644 = vmatprep.subr.mxu0 0.0
      %645 = vmatpush2.msra.mxu0 0.0
      %646 = vmatprep.subr.mxu0 0.0
      %647 = vmatpush2.msra.mxu0 0.0
      %648 = vmatprep.subr.mxu0 0.0
      %649 = vmatpush2.msra.mxu0 0.0
      %650 = vmatprep.subr.mxu0 0.0
      %651 = vmatpush2.msra.mxu0 0.0
      %652 = vmatprep.subr.mxu0 0.0
      %653 = vmatpush2.msra.mxu0 0.0
      %654 = vmatprep.subr.mxu0 0.0
      %655 = vmatpush2.msra.mxu0 0.0
      %656 = vmatprep.subr.mxu0 0.0
      %657 = vmatpush2.msra.mxu0 0.0
      %658 = vmatprep.subr.mxu0 0.0
      %659 = vmatpush2.msra.mxu0 0.0
      %660 = vmatprep.subr.mxu0 0.0
      %661 = vmatpush2.msra.mxu0 0.0
      %662 = vmatprep.subr.mxu0 0.0
      %663 = vmatpush2.msra.mxu0 0.0
      %664 = vmatprep.subr.mxu0 0.0
      %665 = vmatpush2.msra.mxu0 0.0
      %666 = vmatprep.subr.mxu0 0.0
      %667 = vmatpush2.msra.mxu0 0.0
      %668 = vmatprep.subr.mxu0 0.0
      %669 = vmatpush2.msra.mxu0 0.0
      %670 = vmatprep.subr.mxu0 0.0
      %671 = vmatpush2.msra.mxu0 0.0
      %672 = vmatprep.subr.mxu0 0.0
      %673 = vmatpush2.msra.mxu0 0.0
      %674 = vmatprep.subr.mxu0 0.0
      %675 = vmatpush2.msra.mxu0 0.0
      %676 = vmatprep.mubr.f32.mxu0 0.0
      %677 = vmatmul.mubr.f32.gmra.mxu0 %v610
      %v678 = vpop.f32.mrf.mxu0
      %v679 = vadd.f32 %v607, %v678
      %v680 = vpop.f32.mrf.mxu0
      %681 = vdwg.mxu0
      %683 = vrot.lane.b32.xlu0 %v679, 96
      %v684 = vpop.permute.xlu0 %683
      %vm685 = vcmask 64512
      %v686 = vsel %vm685, %v679, 0
      %v688 = vsel %vm685, %v684, 0
      %690 = vmatprep.subr.mxu0 0.0
      %691 = vmatpush1.xpose.msra.mxu0 0.0
      %692 = vmatprep.subr.mxu0 0.0
      %693 = vmatpush1.xpose.msra.mxu0 0.0
      %694 = vmatprep.subr.mxu0 0.0
      %695 = vmatpush1.xpose.msra.mxu0 0.0
      %696 = vmatprep.subr.mxu0 0.0
      %697 = vmatpush1.xpose.msra.mxu0 0.0
      %698 = vmatprep.subr.mxu0 0.0
      %699 = vmatpush1.xpose.msra.mxu0 0.0
      %700 = vmatprep.subr.mxu0 0.0
      %701 = vmatpush1.xpose.msra.mxu0 0.0
      %702 = vmatprep.subr.mxu0 0.0
      %703 = vmatpush1.xpose.msra.mxu0 0.0
      %704 = vmatprep.subr.mxu0 0.0
      %705 = vmatpush1.xpose.msra.mxu0 0.0
      %706 = vmatprep.subr.mxu0 0.0
      %707 = vmatpush1.xpose.msra.mxu0 0.0
      %708 = vmatprep.subr.mxu0 0.0
      %709 = vmatpush1.xpose.msra.mxu0 0.0
      %710 = vmatprep.subr.mxu0 0.0
      %711 = vmatpush1.xpose.msra.mxu0 0.0
      %712 = vmatprep.subr.mxu0 0.0
      %713 = vmatpush1.xpose.msra.mxu0 0.0
      %714 = vmatprep.subr.mxu0 0.0
      %715 = vmatpush1.xpose.msra.mxu0 0.0
      %716 = vmatprep.subr.mxu0 0.0
      %717 = vmatpush1.xpose.msra.mxu0 0.0
      %718 = vmatprep.subr.mxu0 0.0
      %719 = vmatpush1.xpose.msra.mxu0 0.0
      %720 = vmatprep.subr.mxu0 0.0
      %721 = vmatpush1.xpose.msra.mxu0 %v688
      %722 = vmatprep.subr.mxu0 0.0
      %723 = vmatpush2.xpose.msra.mxu0 0.0
      %724 = vmatprep.subr.mxu0 0.0
      %725 = vmatpush2.xpose.msra.mxu0 0.0
      %726 = vmatprep.subr.mxu0 0.0
      %727 = vmatpush2.xpose.msra.mxu0 0.0
      %728 = vmatprep.subr.mxu0 0.0
      %729 = vmatpush2.xpose.msra.mxu0 0.0
      %730 = vmatprep.subr.mxu0 0.0
      %731 = vmatpush2.xpose.msra.mxu0 0.0
      %732 = vmatprep.subr.mxu0 0.0
      %733 = vmatpush2.xpose.msra.mxu0 0.0
      %734 = vmatprep.subr.mxu0 0.0
      %735 = vmatpush2.xpose.msra.mxu0 0.0
      %736 = vmatprep.subr.mxu0 0.0
      %737 = vmatpush2.xpose.msra.mxu0 0.0
      %738 = vmatprep.subr.mxu0 0.0
      %739 = vmatpush2.xpose.msra.mxu0 0.0
      %740 = vmatprep.subr.mxu0 0.0
      %741 = vmatpush2.xpose.msra.mxu0 0.0
      %742 = vmatprep.subr.mxu0 0.0
      %743 = vmatpush2.xpose.msra.mxu0 0.0
      %744 = vmatprep.subr.mxu0 0.0
      %745 = vmatpush2.xpose.msra.mxu0 0.0
      %746 = vmatprep.subr.mxu0 0.0
      %747 = vmatpush2.xpose.msra.mxu0 0.0
      %748 = vmatprep.subr.mxu0 0.0
      %749 = vmatpush2.xpose.msra.mxu0 0.0
      %750 = vmatprep.subr.mxu0 0.0
      %751 = vmatpush2.xpose.msra.mxu0 0.0
      %752 = vmatprep.subr.mxu0 0.0
      %753 = vmatpush2.xpose.msra.mxu0 0.0
      %754 = vmatprep.mubr.f32.mxu0 0.0
      %755 = vmatmul.mubr.f32.gmra.mxu0 %v686
      %v756 = vpop.f32.mrf.mxu0
      %v757 = vadd.f32 %v598, %v756
      %v758 = vpop.f32.mrf.mxu0
      %759 = vdwg.mxu0
      %v760 = vsel %vm685, %v757, -inf
      %761 = vmax.xlane.f32.xlu0 %v760
      %v762 = vpop.xlane.xlu0 %761
      %v763 = vsub.f32 %v757, %v762
      %v764 = vmul.f32 %v763, 1.442695
      %v765 = vpow.pop %v764
      %v766 = vsel %vm685, %v765, 0.0
      %767 = vadd.xlane.f32.xlu0 %v766
      %v768 = vpop.xlane.xlu0 %767
      %v769 = vrcp.pop %v768
      %v770 = vmul.f32 %v765, %v769
      %771 = vrot.lane.b32.xlu0 %v679, 64
      %v772 = vpop.permute.xlu0 %771
      %v775 = vsel %vm685, %v770, 0
      %777 = vmatprep.subr.mxu0 0.0
      %778 = vmatpush1.msra.mxu0 0.0
      %779 = vmatprep.subr.mxu0 0.0
      %780 = vmatpush1.msra.mxu0 0.0
      %781 = vmatprep.subr.mxu0 0.0
      %782 = vmatpush1.msra.mxu0 0.0
      %783 = vmatprep.subr.mxu0 0.0
      %784 = vmatpush1.msra.mxu0 0.0
      %785 = vmatprep.subr.mxu0 0.0
      %786 = vmatpush1.msra.mxu0 0.0
      %787 = vmatprep.subr.mxu0 0.0
      %788 = vmatpush1.msra.mxu0 0.0
      %789 = vmatprep.subr.mxu0 0.0
      %790 = vmatpush1.msra.mxu0 0.0
      %791 = vmatprep.subr.mxu0 0.0
      %792 = vmatpush1.msra.mxu0 0.0
      %793 = vmatprep.subr.mxu0 0.0
      %794 = vmatpush1.msra.mxu0 0.0
      %795 = vmatprep.subr.mxu0 0.0
      %796 = vmatpush1.msra.mxu0 0.0
      %797 = vmatprep.subr.mxu0 0.0
      %798 = vmatpush1.msra.mxu0 0.0
      %799 = vmatprep.subr.mxu0 0.0
      %800 = vmatpush1.msra.mxu0 0.0
      %801 = vmatprep.subr.mxu0 0.0
      %802 = vmatpush1.msra.mxu0 0.0
      %803 = vmatprep.subr.mxu0 0.0
      %804 = vmatpush1.msra.mxu0 0.0
      %805 = vmatprep.subr.mxu0 0.0
      %806 = vmatpush1.msra.mxu0 0.0
      %807 = vmatprep.subr.mxu0 0.0
      %808 = vmatpush1.msra.mxu0 %v772
      %809 = vmatprep.subr.mxu0 0.0
      %810 = vmatpush2.msra.mxu0 0.0
      %811 = vmatprep.subr.mxu0 0.0
      %812 = vmatpush2.msra.mxu0 0.0
      %813 = vmatprep.subr.mxu0 0.0
      %814 = vmatpush2.msra.mxu0 0.0
      %815 = vmatprep.subr.mxu0 0.0
      %816 = vmatpush2.msra.mxu0 0.0
      %817 = vmatprep.subr.mxu0 0.0
      %818 = vmatpush2.msra.mxu0 0.0
      %819 = vmatprep.subr.mxu0 0.0
      %820 = vmatpush2.msra.mxu0 0.0
      %821 = vmatprep.subr.mxu0 0.0
      %822 = vmatpush2.msra.mxu0 0.0
      %823 = vmatprep.subr.mxu0 0.0
      %824 = vmatpush2.msra.mxu0 0.0
      %825 = vmatprep.subr.mxu0 0.0
      %826 = vmatpush2.msra.mxu0 0.0
      %827 = vmatprep.subr.mxu0 0.0
      %828 = vmatpush2.msra.mxu0 0.0
      %829 = vmatprep.subr.mxu0 0.0
      %830 = vmatpush2.msra.mxu0 0.0
      %831 = vmatprep.subr.mxu0 0.0
      %832 = vmatpush2.msra.mxu0 0.0
      %833 = vmatprep.subr.mxu0 0.0
      %834 = vmatpush2.msra.mxu0 0.0
      %835 = vmatprep.subr.mxu0 0.0
      %836 = vmatpush2.msra.mxu0 0.0
      %837 = vmatprep.subr.mxu0 0.0
      %838 = vmatpush2.msra.mxu0 0.0
      %839 = vmatprep.subr.mxu0 0.0
      %840 = vmatpush2.msra.mxu0 0.0
      %841 = vmatprep.mubr.f32.mxu0 0.0
      %842 = vmatmul.mubr.f32.gmra.mxu0 %v775
      %v843 = vpop.f32.mrf.mxu0
      %v844 = vadd.f32 0.0, %v843
      %v845 = vpop.f32.mrf.mxu0
      %846 = vdwg.mxu0
      %847 = vst.msk [vmem:[#allocation2] sm:$0xff] %vm685, %v844
      %848 = vrot.lane.b32.xlu0 %v679, 120
      %v849 = vpop.permute.xlu0 %848
      %850 = vrot.lane.b32.xlu0 %v679, 88
      %v851 = vpop.permute.xlu0 %850
      %v852 = vsel %vm685, %v849, 0
      %v854 = vsel %vm685, %v851, 0
      %856 = vmatprep.subr.mxu0 0.0
      %857 = vmatpush1.xpose.msra.mxu0 0.0
      %858 = vmatprep.subr.mxu0 0.0
      %859 = vmatpush1.xpose.msra.mxu0 0.0
      %860 = vmatprep.subr.mxu0 0.0
      %861 = vmatpush1.xpose.msra.mxu0 0.0
      %862 = vmatprep.subr.mxu0 0.0
      %863 = vmatpush1.xpose.msra.mxu0 0.0
      %864 = vmatprep.subr.mxu0 0.0
      %865 = vmatpush1.xpose.msra.mxu0 0.0
      %866 = vmatprep.subr.mxu0 0.0
      %867 = vmatpush1.xpose.msra.mxu0 0.0
      %868 = vmatprep.subr.mxu0 0.0
      %869 = vmatpush1.xpose.msra.mxu0 0.0
      %870 = vmatprep.subr.mxu0 0.0
      %871 = vmatpush1.xpose.msra.mxu0 0.0
      %872 = vmatprep.subr.mxu0 0.0
      %873 = vmatpush1.xpose.msra.mxu0 0.0
      %874 = vmatprep.subr.mxu0 0.0
      %875 = vmatpush1.xpose.msra.mxu0 0.0
      %876 = vmatprep.subr.mxu0 0.0
      %877 = vmatpush1.xpose.msra.mxu0 0.0
      %878 = vmatprep.subr.mxu0 0.0
      %879 = vmatpush1.xpose.msra.mxu0 0.0
      %880 = vmatprep.subr.mxu0 0.0
      %881 = vmatpush1.xpose.msra.mxu0 0.0
      %882 = vmatprep.subr.mxu0 0.0
      %883 = vmatpush1.xpose.msra.mxu0 0.0
      %884 = vmatprep.subr.mxu0 0.0
      %885 = vmatpush1.xpose.msra.mxu0 0.0
      %886 = vmatprep.subr.mxu0 0.0
      %887 = vmatpush1.xpose.msra.mxu0 %v854
      %888 = vmatprep.subr.mxu0 0.0
      %889 = vmatpush2.xpose.msra.mxu0 0.0
      %890 = vmatprep.subr.mxu0 0.0
      %891 = vmatpush2.xpose.msra.mxu0 0.0
      %892 = vmatprep.subr.mxu0 0.0
      %893 = vmatpush2.xpose.msra.mxu0 0.0
      %894 = vmatprep.subr.mxu0 0.0
      %895 = vmatpush2.xpose.msra.mxu0 0.0
      %896 = vmatprep.subr.mxu0 0.0
      %897 = vmatpush2.xpose.msra.mxu0 0.0
      %898 = vmatprep.subr.mxu0 0.0
      %899 = vmatpush2.xpose.msra.mxu0 0.0
      %900 = vmatprep.subr.mxu0 0.0
      %901 = vmatpush2.xpose.msra.mxu0 0.0
      %902 = vmatprep.subr.mxu0 0.0
      %903 = vmatpush2.xpose.msra.mxu0 0.0
      %904 = vmatprep.subr.mxu0 0.0
      %905 = vmatpush2.xpose.msra.mxu0 0.0
      %906 = vmatprep.subr.mxu0 0.0
      %907 = vmatpush2.xpose.msra.mxu0 0.0
      %908 = vmatprep.subr.mxu0 0.0
      %909 = vmatpush2.xpose.msra.mxu0 0.0
      %910 = vmatprep.subr.mxu0 0.0
      %911 = vmatpush2.xpose.msra.mxu0 0.0
      %912 = vmatprep.subr.mxu0 0.0
      %913 = vmatpush2.xpose.msra.mxu0 0.0
      %914 = vmatprep.subr.mxu0 0.0
      %915 = vmatpush2.xpose.msra.mxu0 0.0
      %916 = vmatprep.subr.mxu0 0.0
      %917 = vmatpush2.xpose.msra.mxu0 0.0
      %918 = vmatprep.subr.mxu0 0.0
      %919 = vmatpush2.xpose.msra.mxu0 0.0
      %920 = vmatprep.mubr.f32.mxu0 0.0
      %921 = vmatmul.mubr.f32.gmra.mxu0 %v852
      %v922 = vpop.f32.mrf.mxu0
      %v923 = vadd.f32 %v598, %v922
      %v924 = vpop.f32.mrf.mxu0
      %925 = vdwg.mxu0
      %v926 = vsel %vm685, %v923, -inf
      %927 = vmax.xlane.f32.xlu0 %v926
      %v928 = vpop.xlane.xlu0 %927
      %v929 = vsub.f32 %v923, %v928
      %v930 = vmul.f32 %v929, 1.442695
      %v931 = vpow.pop %v930
      %v932 = vsel %vm685, %v931, 0.0
      %933 = vadd.xlane.f32.xlu0 %v932
      %v934 = vpop.xlane.xlu0 %933
      %v935 = vrcp.pop %v934
      %v936 = vmul.f32 %v931, %v935
      %937 = vrot.lane.b32.xlu0 %v679, 56
      %v938 = vpop.permute.xlu0 %937
      %v941 = vsel %vm685, %v936, 0
      %943 = vmatprep.subr.mxu0 0.0
      %944 = vmatpush1.msra.mxu0 0.0
      %945 = vmatprep.subr.mxu0 0.0
      %946 = vmatpush1.msra.mxu0 0.0
      %947 = vmatprep.subr.mxu0 0.0
      %948 = vmatpush1.msra.mxu0 0.0
      %949 = vmatprep.subr.mxu0 0.0
      %950 = vmatpush1.msra.mxu0 0.0
      %951 = vmatprep.subr.mxu0 0.0
      %952 = vmatpush1.msra.mxu0 0.0
      %953 = vmatprep.subr.mxu0 0.0
      %954 = vmatpush1.msra.mxu0 0.0
      %955 = vmatprep.subr.mxu0 0.0
      %956 = vmatpush1.msra.mxu0 0.0
      %957 = vmatprep.subr.mxu0 0.0
      %958 = vmatpush1.msra.mxu0 0.0
      %959 = vmatprep.subr.mxu0 0.0
      %960 = vmatpush1.msra.mxu0 0.0
      %961 = vmatprep.subr.mxu0 0.0
      %962 = vmatpush1.msra.mxu0 0.0
      %963 = vmatprep.subr.mxu0 0.0
      %964 = vmatpush1.msra.mxu0 0.0
      %965 = vmatprep.subr.mxu0 0.0
      %966 = vmatpush1.msra.mxu0 0.0
      %967 = vmatprep.subr.mxu0 0.0
      %968 = vmatpush1.msra.mxu0 0.0
      %969 = vmatprep.subr.mxu0 0.0
      %970 = vmatpush1.msra.mxu0 0.0
      %971 = vmatprep.subr.mxu0 0.0
      %972 = vmatpush1.msra.mxu0 0.0
      %973 = vmatprep.subr.mxu0 0.0
      %974 = vmatpush1.msra.mxu0 %v938
      %975 = vmatprep.subr.mxu0 0.0
      %976 = vmatpush2.msra.mxu0 0.0
      %977 = vmatprep.subr.mxu0 0.0
      %978 = vmatpush2.msra.mxu0 0.0
      %979 = vmatprep.subr.mxu0 0.0
      %980 = vmatpush2.msra.mxu0 0.0
      %981 = vmatprep.subr.mxu0 0.0
      %982 = vmatpush2.msra.mxu0 0.0
      %983 = vmatprep.subr.mxu0 0.0
      %984 = vmatpush2.msra.mxu0 0.0
      %985 = vmatprep.subr.mxu0 0.0
      %986 = vmatpush2.msra.mxu0 0.0
      %987 = vmatprep.subr.mxu0 0.0
      %988 = vmatpush2.msra.mxu0 0.0
      %989 = vmatprep.subr.mxu0 0.0
      %990 = vmatpush2.msra.mxu0 0.0
      %991 = vmatprep.subr.mxu0 0.0
      %992 = vmatpush2.msra.mxu0 0.0
      %993 = vmatprep.subr.mxu0 0.0
      %994 = vmatpush2.msra.mxu0 0.0
      %995 = vmatprep.subr.mxu0 0.0
      %996 = vmatpush2.msra.mxu0 0.0
      %997 = vmatprep.subr.mxu0 0.0
      %998 = vmatpush2.msra.mxu0 0.0
      %999 = vmatprep.subr.mxu0 0.0
      %1000 = vmatpush2.msra.mxu0 0.0
      %1001 = vmatprep.subr.mxu0 0.0
      %1002 = vmatpush2.msra.mxu0 0.0
      %1003 = vmatprep.subr.mxu0 0.0
      %1004 = vmatpush2.msra.mxu0 0.0
      %1005 = vmatprep.subr.mxu0 0.0
      %1006 = vmatpush2.msra.mxu0 0.0
      %1007 = vmatprep.mubr.f32.mxu0 0.0
      %1008 = vmatmul.mubr.f32.gmra.mxu0 %v941
      %v1009 = vpop.f32.mrf.mxu0
      %v1010 = vadd.f32 0.0, %v1009
      %v1011 = vpop.f32.mrf.mxu0
      %1012 = vdwg.mxu0
      %1014 = vrot.lane.b32.xlu0 %v1010, 8
      %v1015 = vpop.permute.xlu0 %1014
      %vm1017 = vcmask 130112
      %1018 = vst.msk [vmem:[#allocation2] sm:$0xff] %vm1017, %v1015
      %1019 = vrot.lane.b32.xlu0 %v679, 112
      %v1020 = vpop.permute.xlu0 %1019
      %1021 = vrot.lane.b32.xlu0 %v679, 80
      %v1022 = vpop.permute.xlu0 %1021
      %v1023 = vsel %vm685, %v1020, 0
      %v1025 = vsel %vm685, %v1022, 0
      %1027 = vmatprep.subr.mxu0 0.0
      %1028 = vmatpush1.xpose.msra.mxu0 0.0
      %1029 = vmatprep.subr.mxu0 0.0
      %1030 = vmatpush1.xpose.msra.mxu0 0.0
      %1031 = vmatprep.subr.mxu0 0.0
      %1032 = vmatpush1.xpose.msra.mxu0 0.0
      %1033 = vmatprep.subr.mxu0 0.0
      %1034 = vmatpush1.xpose.msra.mxu0 0.0
      %1035 = vmatprep.subr.mxu0 0.0
      %1036 = vmatpush1.xpose.msra.mxu0 0.0
      %1037 = vmatprep.subr.mxu0 0.0
      %1038 = vmatpush1.xpose.msra.mxu0 0.0
      %1039 = vmatprep.subr.mxu0 0.0
      %1040 = vmatpush1.xpose.msra.mxu0 0.0
      %1041 = vmatprep.subr.mxu0 0.0
      %1042 = vmatpush1.xpose.msra.mxu0 0.0
      %1043 = vmatprep.subr.mxu0 0.0
      %1044 = vmatpush1.xpose.msra.mxu0 0.0
      %1045 = vmatprep.subr.mxu0 0.0
      %1046 = vmatpush1.xpose.msra.mxu0 0.0
      %1047 = vmatprep.subr.mxu0 0.0
      %1048 = vmatpush1.xpose.msra.mxu0 0.0
      %1049 = vmatprep.subr.mxu0 0.0
      %1050 = vmatpush1.xpose.msra.mxu0 0.0
      %1051 = vmatprep.subr.mxu0 0.0
      %1052 = vmatpush1.xpose.msra.mxu0 0.0
      %1053 = vmatprep.subr.mxu0 0.0
      %1054 = vmatpush1.xpose.msra.mxu0 0.0
      %1055 = vmatprep.subr.mxu0 0.0
      %1056 = vmatpush1.xpose.msra.mxu0 0.0
      %1057 = vmatprep.subr.mxu0 0.0
      %1058 = vmatpush1.xpose.msra.mxu0 %v1025
      %1059 = vmatprep.subr.mxu0 0.0
      %1060 = vmatpush2.xpose.msra.mxu0 0.0
      %1061 = vmatprep.subr.mxu0 0.0
      %1062 = vmatpush2.xpose.msra.mxu0 0.0
      %1063 = vmatprep.subr.mxu0 0.0
      %1064 = vmatpush2.xpose.msra.mxu0 0.0
      %1065 = vmatprep.subr.mxu0 0.0
      %1066 = vmatpush2.xpose.msra.mxu0 0.0
      %1067 = vmatprep.subr.mxu0 0.0
      %1068 = vmatpush2.xpose.msra.mxu0 0.0
      %1069 = vmatprep.subr.mxu0 0.0
      %1070 = vmatpush2.xpose.msra.mxu0 0.0
      %1071 = vmatprep.subr.mxu0 0.0
      %1072 = vmatpush2.xpose.msra.mxu0 0.0
      %1073 = vmatprep.subr.mxu0 0.0
      %1074 = vmatpush2.xpose.msra.mxu0 0.0
      %1075 = vmatprep.subr.mxu0 0.0
      %1076 = vmatpush2.xpose.msra.mxu0 0.0
      %1077 = vmatprep.subr.mxu0 0.0
      %1078 = vmatpush2.xpose.msra.mxu0 0.0
      %1079 = vmatprep.subr.mxu0 0.0
      %1080 = vmatpush2.xpose.msra.mxu0 0.0
      %1081 = vmatprep.subr.mxu0 0.0
      %1082 = vmatpush2.xpose.msra.mxu0 0.0
      %1083 = vmatprep.subr.mxu0 0.0
      %1084 = vmatpush2.xpose.msra.mxu0 0.0
      %1085 = vmatprep.subr.mxu0 0.0
      %1086 = vmatpush2.xpose.msra.mxu0 0.0
      %1087 = vmatprep.subr.mxu0 0.0
      %1088 = vmatpush2.xpose.msra.mxu0 0.0
      %1089 = vmatprep.subr.mxu0 0.0
      %1090 = vmatpush2.xpose.msra.mxu0 0.0
      %1091 = vmatprep.mubr.f32.mxu0 0.0
      %1092 = vmatmul.mubr.f32.gmra.mxu0 %v1023
      %v1093 = vpop.f32.mrf.mxu0
      %v1094 = vadd.f32 %v598, %v1093
      %v1095 = vpop.f32.mrf.mxu0
      %1096 = vdwg.mxu0
      %v1097 = vsel %vm685, %v1094, -inf
      %1098 = vmax.xlane.f32.xlu0 %v1097
      %v1099 = vpop.xlane.xlu0 %1098
      %v1100 = vsub.f32 %v1094, %v1099
      %v1101 = vmul.f32 %v1100, 1.442695
      %v1102 = vpow.pop %v1101
      %v1103 = vsel %vm685, %v1102, 0.0
      %1104 = vadd.xlane.f32.xlu0 %v1103
      %v1105 = vpop.xlane.xlu0 %1104
      %v1106 = vrcp.pop %v1105
      %v1107 = vmul.f32 %v1102, %v1106
      %1108 = vrot.lane.b32.xlu0 %v679, 48
      %v1109 = vpop.permute.xlu0 %1108
      %v1112 = vsel %vm685, %v1107, 0
      %1114 = vmatprep.subr.mxu0 0.0
      %1115 = vmatpush1.msra.mxu0 0.0
      %1116 = vmatprep.subr.mxu0 0.0
      %1117 = vmatpush1.msra.mxu0 0.0
      %1118 = vmatprep.subr.mxu0 0.0
      %1119 = vmatpush1.msra.mxu0 0.0
      %1120 = vmatprep.subr.mxu0 0.0
      %1121 = vmatpush1.msra.mxu0 0.0
      %1122 = vmatprep.subr.mxu0 0.0
      %1123 = vmatpush1.msra.mxu0 0.0
      %1124 = vmatprep.subr.mxu0 0.0
      %1125 = vmatpush1.msra.mxu0 0.0
      %1126 = vmatprep.subr.mxu0 0.0
      %1127 = vmatpush1.msra.mxu0 0.0
      %1128 = vmatprep.subr.mxu0 0.0
      %1129 = vmatpush1.msra.mxu0 0.0
      %1130 = vmatprep.subr.mxu0 0.0
      %1131 = vmatpush1.msra.mxu0 0.0
      %1132 = vmatprep.subr.mxu0 0.0
      %1133 = vmatpush1.msra.mxu0 0.0
      %1134 = vmatprep.subr.mxu0 0.0
      %1135 = vmatpush1.msra.mxu0 0.0
      %1136 = vmatprep.subr.mxu0 0.0
      %1137 = vmatpush1.msra.mxu0 0.0
      %1138 = vmatprep.subr.mxu0 0.0
      %1139 = vmatpush1.msra.mxu0 0.0
      %1140 = vmatprep.subr.mxu0 0.0
      %1141 = vmatpush1.msra.mxu0 0.0
      %1142 = vmatprep.subr.mxu0 0.0
      %1143 = vmatpush1.msra.mxu0 0.0
      %1144 = vmatprep.subr.mxu0 0.0
      %1145 = vmatpush1.msra.mxu0 %v1109
      %1146 = vmatprep.subr.mxu0 0.0
      %1147 = vmatpush2.msra.mxu0 0.0
      %1148 = vmatprep.subr.mxu0 0.0
      %1149 = vmatpush2.msra.mxu0 0.0
      %1150 = vmatprep.subr.mxu0 0.0
      %1151 = vmatpush2.msra.mxu0 0.0
      %1152 = vmatprep.subr.mxu0 0.0
      %1153 = vmatpush2.msra.mxu0 0.0
      %1154 = vmatprep.subr.mxu0 0.0
      %1155 = vmatpush2.msra.mxu0 0.0
      %1156 = vmatprep.subr.mxu0 0.0
      %1157 = vmatpush2.msra.mxu0 0.0
      %1158 = vmatprep.subr.mxu0 0.0
      %1159 = vmatpush2.msra.mxu0 0.0
      %1160 = vmatprep.subr.mxu0 0.0
      %1161 = vmatpush2.msra.mxu0 0.0
      %1162 = vmatprep.subr.mxu0 0.0
      %1163 = vmatpush2.msra.mxu0 0.0
      %1164 = vmatprep.subr.mxu0 0.0
      %1165 = vmatpush2.msra.mxu0 0.0
      %1166 = vmatprep.subr.mxu0 0.0
      %1167 = vmatpush2.msra.mxu0 0.0
      %1168 = vmatprep.subr.mxu0 0.0
      %1169 = vmatpush2.msra.mxu0 0.0
      %1170 = vmatprep.subr.mxu0 0.0
      %1171 = vmatpush2.msra.mxu0 0.0
      %1172 = vmatprep.subr.mxu0 0.0
      %1173 = vmatpush2.msra.mxu0 0.0
      %1174 = vmatprep.subr.mxu0 0.0
      %1175 = vmatpush2.msra.mxu0 0.0
      %1176 = vmatprep.subr.mxu0 0.0
      %1177 = vmatpush2.msra.mxu0 0.0
      %1178 = vmatprep.mubr.f32.mxu0 0.0
      %1179 = vmatmul.mubr.f32.gmra.mxu0 %v1112
      %v1180 = vpop.f32.mrf.mxu0
      %v1181 = vadd.f32 0.0, %v1180
      %v1182 = vpop.f32.mrf.mxu0
      %1183 = vdwg.mxu0
      %1185 = vrot.lane.b32.xlu0 %v1181, 16
      %v1186 = vpop.permute.xlu0 %1185
      %vm1188 = vcmask 195712
      %1189 = vst.msk [vmem:[#allocation2] sm:$0xff] %vm1188, %v1186
      %1190 = vrot.lane.b32.xlu0 %v679, 104
      %v1191 = vpop.permute.xlu0 %1190
      %1192 = vrot.lane.b32.xlu0 %v679, 72
      %v1193 = vpop.permute.xlu0 %1192
      %v1194 = vsel %vm685, %v1191, 0
      %v1196 = vsel %vm685, %v1193, 0
      %1198 = vmatprep.subr.mxu0 0.0
      %1199 = vmatpush1.xpose.msra.mxu0 0.0
      %1200 = vmatprep.subr.mxu0 0.0
      %1201 = vmatpush1.xpose.msra.mxu0 0.0
      %1202 = vmatprep.subr.mxu0 0.0
      %1203 = vmatpush1.xpose.msra.mxu0 0.0
      %1204 = vmatprep.subr.mxu0 0.0
      %1205 = vmatpush1.xpose.msra.mxu0 0.0
      %1206 = vmatprep.subr.mxu0 0.0
      %1207 = vmatpush1.xpose.msra.mxu0 0.0
      %1208 = vmatprep.subr.mxu0 0.0
      %1209 = vmatpush1.xpose.msra.mxu0 0.0
      %1210 = vmatprep.subr.mxu0 0.0
      %1211 = vmatpush1.xpose.msra.mxu0 0.0
      %1212 = vmatprep.subr.mxu0 0.0
      %1213 = vmatpush1.xpose.msra.mxu0 0.0
      %1214 = vmatprep.subr.mxu0 0.0
      %1215 = vmatpush1.xpose.msra.mxu0 0.0
      %1216 = vmatprep.subr.mxu0 0.0
      %1217 = vmatpush1.xpose.msra.mxu0 0.0
      %1218 = vmatprep.subr.mxu0 0.0
      %1219 = vmatpush1.xpose.msra.mxu0 0.0
      %1220 = vmatprep.subr.mxu0 0.0
      %1221 = vmatpush1.xpose.msra.mxu0 0.0
      %1222 = vmatprep.subr.mxu0 0.0
      %1223 = vmatpush1.xpose.msra.mxu0 0.0
      %1224 = vmatprep.subr.mxu0 0.0
      %1225 = vmatpush1.xpose.msra.mxu0 0.0
      %1226 = vmatprep.subr.mxu0 0.0
      %1227 = vmatpush1.xpose.msra.mxu0 0.0
      %1228 = vmatprep.subr.mxu0 0.0
      %1229 = vmatpush1.xpose.msra.mxu0 %v1196
      %1230 = vmatprep.subr.mxu0 0.0
      %1231 = vmatpush2.xpose.msra.mxu0 0.0
      %1232 = vmatprep.subr.mxu0 0.0
      %1233 = vmatpush2.xpose.msra.mxu0 0.0
      %1234 = vmatprep.subr.mxu0 0.0
      %1235 = vmatpush2.xpose.msra.mxu0 0.0
      %1236 = vmatprep.subr.mxu0 0.0
      %1237 = vmatpush2.xpose.msra.mxu0 0.0
      %1238 = vmatprep.subr.mxu0 0.0
      %1239 = vmatpush2.xpose.msra.mxu0 0.0
      %1240 = vmatprep.subr.mxu0 0.0
      %1241 = vmatpush2.xpose.msra.mxu0 0.0
      %1242 = vmatprep.subr.mxu0 0.0
      %1243 = vmatpush2.xpose.msra.mxu0 0.0
      %1244 = vmatprep.subr.mxu0 0.0
      %1245 = vmatpush2.xpose.msra.mxu0 0.0
      %1246 = vmatprep.subr.mxu0 0.0
      %1247 = vmatpush2.xpose.msra.mxu0 0.0
      %1248 = vmatprep.subr.mxu0 0.0
      %1249 = vmatpush2.xpose.msra.mxu0 0.0
      %1250 = vmatprep.subr.mxu0 0.0
      %1251 = vmatpush2.xpose.msra.mxu0 0.0
      %1252 = vmatprep.subr.mxu0 0.0
      %1253 = vmatpush2.xpose.msra.mxu0 0.0
      %1254 = vmatprep.subr.mxu0 0.0
      %1255 = vmatpush2.xpose.msra.mxu0 0.0
      %1256 = vmatprep.subr.mxu0 0.0
      %1257 = vmatpush2.xpose.msra.mxu0 0.0
      %1258 = vmatprep.subr.mxu0 0.0
      %1259 = vmatpush2.xpose.msra.mxu0 0.0
      %1260 = vmatprep.subr.mxu0 0.0
      %1261 = vmatpush2.xpose.msra.mxu0 0.0
      %1262 = vmatprep.mubr.f32.mxu0 0.0
      %1263 = vmatmul.mubr.f32.gmra.mxu0 %v1194
      %v1264 = vpop.f32.mrf.mxu0
      %v1265 = vadd.f32 %v598, %v1264
      %v1266 = vpop.f32.mrf.mxu0
      %1267 = vdwg.mxu0
      %v1268 = vsel %vm685, %v1265, -inf
      %1269 = vmax.xlane.f32.xlu0 %v1268
      %v1270 = vpop.xlane.xlu0 %1269
      %v1271 = vsub.f32 %v1265, %v1270
      %v1272 = vmul.f32 %v1271, 1.442695
      %v1273 = vpow.pop %v1272
      %v1274 = vsel %vm685, %v1273, 0.0
      %1275 = vadd.xlane.f32.xlu0 %v1274
      %v1276 = vpop.xlane.xlu0 %1275
      %v1277 = vrcp.pop %v1276
      %v1278 = vmul.f32 %v1273, %v1277
      %1279 = vrot.lane.b32.xlu0 %v679, 40
      %v1280 = vpop.permute.xlu0 %1279
      %v1283 = vsel %vm685, %v1278, 0
      %1285 = vmatprep.subr.mxu0 0.0
      %1286 = vmatpush1.msra.mxu0 0.0
      %1287 = vmatprep.subr.mxu0 0.0
      %1288 = vmatpush1.msra.mxu0 0.0
      %1289 = vmatprep.subr.mxu0 0.0
      %1290 = vmatpush1.msra.mxu0 0.0
      %1291 = vmatprep.subr.mxu0 0.0
      %1292 = vmatpush1.msra.mxu0 0.0
      %1293 = vmatprep.subr.mxu0 0.0
      %1294 = vmatpush1.msra.mxu0 0.0
      %1295 = vmatprep.subr.mxu0 0.0
      %1296 = vmatpush1.msra.mxu0 0.0
      %1297 = vmatprep.subr.mxu0 0.0
      %1298 = vmatpush1.msra.mxu0 0.0
      %1299 = vmatprep.subr.mxu0 0.0
      %1300 = vmatpush1.msra.mxu0 0.0
      %1301 = vmatprep.subr.mxu0 0.0
      %1302 = vmatpush1.msra.mxu0 0.0
      %1303 = vmatprep.subr.mxu0 0.0
      %1304 = vmatpush1.msra.mxu0 0.0
      %1305 = vmatprep.subr.mxu0 0.0
      %1306 = vmatpush1.msra.mxu0 0.0
      %1307 = vmatprep.subr.mxu0 0.0
      %1308 = vmatpush1.msra.mxu0 0.0
      %1309 = vmatprep.subr.mxu0 0.0
      %1310 = vmatpush1.msra.mxu0 0.0
      %1311 = vmatprep.subr.mxu0 0.0
      %1312 = vmatpush1.msra.mxu0 0.0
      %1313 = vmatprep.subr.mxu0 0.0
      %1314 = vmatpush1.msra.mxu0 0.0
      %1315 = vmatprep.subr.mxu0 0.0
      %1316 = vmatpush1.msra.mxu0 %v1280
      %1317 = vmatprep.subr.mxu0 0.0
      %1318 = vmatpush2.msra.mxu0 0.0
      %1319 = vmatprep.subr.mxu0 0.0
      %1320 = vmatpush2.msra.mxu0 0.0
      %1321 = vmatprep.subr.mxu0 0.0
      %1322 = vmatpush2.msra.mxu0 0.0
      %1323 = vmatprep.subr.mxu0 0.0
      %1324 = vmatpush2.msra.mxu0 0.0
      %1325 = vmatprep.subr.mxu0 0.0
      %1326 = vmatpush2.msra.mxu0 0.0
      %1327 = vmatprep.subr.mxu0 0.0
      %1328 = vmatpush2.msra.mxu0 0.0
      %1329 = vmatprep.subr.mxu0 0.0
      %1330 = vmatpush2.msra.mxu0 0.0
      %1331 = vmatprep.subr.mxu0 0.0
      %1332 = vmatpush2.msra.mxu0 0.0
      %1333 = vmatprep.subr.mxu0 0.0
      %1334 = vmatpush2.msra.mxu0 0.0
      %1335 = vmatprep.subr.mxu0 0.0
      %1336 = vmatpush2.msra.mxu0 0.0
      %1337 = vmatprep.subr.mxu0 0.0
      %1338 = vmatpush2.msra.mxu0 0.0
      %1339 = vmatprep.subr.mxu0 0.0
      %1340 = vmatpush2.msra.mxu0 0.0
      %1341 = vmatprep.subr.mxu0 0.0
      %1342 = vmatpush2.msra.mxu0 0.0
      %1343 = vmatprep.subr.mxu0 0.0
      %1344 = vmatpush2.msra.mxu0 0.0
      %1345 = vmatprep.subr.mxu0 0.0
      %1346 = vmatpush2.msra.mxu0 0.0
      %1347 = vmatprep.subr.mxu0 0.0
      %1348 = vmatpush2.msra.mxu0 0.0
      %1349 = vmatprep.mubr.f32.mxu0 0.0
      %1350 = vmatmul.mubr.f32.gmra.mxu0 %v1283
      %v1351 = vpop.f32.mrf.mxu0
      %v1352 = vadd.f32 0.0, %v1351
      %v1353 = vpop.f32.mrf.mxu0
      %1354 = vdwg.mxu0
      %1356 = vrot.lane.b32.xlu0 %v1352, 24
      %v1357 = vpop.permute.xlu0 %1356
      %vm1359 = vcmask 261312
      %1360 = vst.msk [vmem:[#allocation2] sm:$0xff] %vm1359, %v1357
      %v1361 = vld [vmem:[#allocation2] sm:$0xff]
      %v1362 = vld [vmem:[%s7] sm:$0xff]
      %v1363 = vld [vmem:[%s7 + $0x8] sm:$0xff]
      %v1364 = vld [vmem:[%s7 + $0x10] sm:$0xff]
      %v1365 = vld [vmem:[%s7 + $0x18] sm:$0xff]
      %v1366 = vld [vmem:[%s8] sm:$0x1]
      %v1367 = vlaneseq
      %v1368 = vshrl.u32 %v1367, 7
      %v1369 = vsub.s32 0, %v1368
      %v1370 = vrot.slane %v1366, %v1369
      %v1372 = vsel %vm608, %v1361, 0
      %1374 = vmatprep.subr.mxu0 0.0
      %1375 = vmatpush1.msra.mxu0 0.0
      %1376 = vmatprep.subr.mxu0 0.0
      %1377 = vmatpush1.msra.mxu0 0.0
      %1378 = vmatprep.subr.mxu0 0.0
      %1379 = vmatpush1.msra.mxu0 0.0
      %1380 = vmatprep.subr.mxu0 0.0
      %1381 = vmatpush1.msra.mxu0 0.0
      %1382 = vmatprep.subr.mxu0 0.0
      %1383 = vmatpush1.msra.mxu0 0.0
      %1384 = vmatprep.subr.mxu0 0.0
      %1385 = vmatpush1.msra.mxu0 0.0
      %1386 = vmatprep.subr.mxu0 0.0
      %1387 = vmatpush1.msra.mxu0 0.0
      %1388 = vmatprep.subr.mxu0 0.0
      %1389 = vmatpush1.msra.mxu0 0.0
      %1390 = vmatprep.subr.mxu0 0.0
      %1391 = vmatpush1.msra.mxu0 0.0
      %1392 = vmatprep.subr.mxu0 0.0
      %1393 = vmatpush1.msra.mxu0 0.0
      %1394 = vmatprep.subr.mxu0 0.0
      %1395 = vmatpush1.msra.mxu0 0.0
      %1396 = vmatprep.subr.mxu0 0.0
      %1397 = vmatpush1.msra.mxu0 0.0
      %1398 = vmatprep.subr.mxu0 0.0
      %1399 = vmatpush1.msra.mxu0 %v1365
      %1400 = vmatprep.subr.mxu0 0.0
      %1401 = vmatpush1.msra.mxu0 %v1364
      %1402 = vmatprep.subr.mxu0 0.0
      %1403 = vmatpush1.msra.mxu0 %v1363
      %1404 = vmatprep.subr.mxu0 0.0
      %1405 = vmatpush1.msra.mxu0 %v1362
      %1406 = vmatprep.subr.mxu0 0.0
      %1407 = vmatpush2.msra.mxu0 0.0
      %1408 = vmatprep.subr.mxu0 0.0
      %1409 = vmatpush2.msra.mxu0 0.0
      %1410 = vmatprep.subr.mxu0 0.0
      %1411 = vmatpush2.msra.mxu0 0.0
      %1412 = vmatprep.subr.mxu0 0.0
      %1413 = vmatpush2.msra.mxu0 0.0
      %1414 = vmatprep.subr.mxu0 0.0
      %1415 = vmatpush2.msra.mxu0 0.0
      %1416 = vmatprep.subr.mxu0 0.0
      %1417 = vmatpush2.msra.mxu0 0.0
      %1418 = vmatprep.subr.mxu0 0.0
      %1419 = vmatpush2.msra.mxu0 0.0
      %1420 = vmatprep.subr.mxu0 0.0
      %1421 = vmatpush2.msra.mxu0 0.0
      %1422 = vmatprep.subr.mxu0 0.0
      %1423 = vmatpush2.msra.mxu0 0.0
      %1424 = vmatprep.subr.mxu0 0.0
      %1425 = vmatpush2.msra.mxu0 0.0
      %1426 = vmatprep.subr.mxu0 0.0
      %1427 = vmatpush2.msra.mxu0 0.0
      %1428 = vmatprep.subr.mxu0 0.0
      %1429 = vmatpush2.msra.mxu0 0.0
      %1430 = vmatprep.subr.mxu0 0.0
      %1431 = vmatpush2.msra.mxu0 0.0
      %1432 = vmatprep.subr.mxu0 0.0
      %1433 = vmatpush2.msra.mxu0 0.0
      %1434 = vmatprep.subr.mxu0 0.0
      %1435 = vmatpush2.msra.mxu0 0.0
      %1436 = vmatprep.subr.mxu0 0.0
      %1437 = vmatpush2.msra.mxu0 0.0
      %1438 = vmatprep.mubr.f32.mxu0 0.0
      %1439 = vmatmul.mubr.f32.gmra.mxu0 %v1372
      %v1440 = vpop.f32.mrf.mxu0
      %v1441 = vadd.f32 %v1370, %v1440
      %v1442 = vpop.f32.mrf.mxu0
      %1443 = vdwg.mxu0
      %v1444 = vld [vmem:[%s13] sm:$0xf]
      %v1445 = vadd.f32 %v597, %v1441
      %v1446 = vsel %vm608, %v1445, 0.0
      %1447 = vadd.xlane.f32.xlu0 %v1446
      %v1448 = vpop.xlane.xlu0 %1447
      %v1449 = vrcp.pop 32.0
      %v1450 = vmul.f32 %v1448, %v1449
      %v1451 = vsub.f32 %v1445, %v1450
      %v1452 = vmul.f32 %v1451, %v1451
      %v1453 = vsel %vm608, %v1452, 0.0
      %1454 = vadd.xlane.f32.xlu0 %v1453
      %v1455 = vpop.xlane.xlu0 %1454
      %v1456 = vmul.f32 %v1455, %v1449
      %v1457 = vadd.f32 %v1456, 1e-05
      %v1458 = vrsqrt.pop %v1457
      %v1459 = vmul.f32 %v1451, %v1458
      %v1460 = vlaneseq
      %v1461 = vshrl.u32 %v1460, 7
      %v1462 = vsub.s32 0, %v1461
      %v1463 = vrot.slane %v1444, %v1462
      %v1464 = vmul.f32 %v1459, %v1463
      %v1465 = vlaneseq
      %v1466 = vshrl.u32 %v1465, 7
      %v1467 = vsub.s32 1, %v1466
      %v1468 = vrot.slane %v1444, %v1467
      %v1469 = vadd.f32 %v1464, %v1468
      %v1470 = vld [vmem:[%s9] sm:$0xff]
      %v1471 = vld [vmem:[%s9 + $0x8] sm:$0xff]
      %v1472 = vld [vmem:[%s9 + $0x10] sm:$0xff]
      %v1473 = vld [vmem:[%s9 + $0x18] sm:$0xff]
      %v1474 = vld [vmem:[%s10] sm:$0x1]
      %v1475 = vlaneseq
      %v1476 = vshrl.u32 %v1475, 7
      %v1477 = vsub.s32 0, %v1476
      %v1478 = vrot.slane %v1474, %v1477
      %v1480 = vsel %vm608, %v1469, 0
      %1482 = vmatprep.subr.mxu0 0.0
      %1483 = vmatpush1.msra.mxu0 0.0
      %1484 = vmatprep.subr.mxu0 0.0
      %1485 = vmatpush1.msra.mxu0 0.0
      %1486 = vmatprep.subr.mxu0 0.0
      %1487 = vmatpush1.msra.mxu0 0.0
      %1488 = vmatprep.subr.mxu0 0.0
      %1489 = vmatpush1.msra.mxu0 0.0
      %1490 = vmatprep.subr.mxu0 0.0
      %1491 = vmatpush1.msra.mxu0 0.0
      %1492 = vmatprep.subr.mxu0 0.0
      %1493 = vmatpush1.msra.mxu0 0.0
      %1494 = vmatprep.subr.mxu0 0.0
      %1495 = vmatpush1.msra.mxu0 0.0
      %1496 = vmatprep.subr.mxu0 0.0
      %1497 = vmatpush1.msra.mxu0 0.0
      %1498 = vmatprep.subr.mxu0 0.0
      %1499 = vmatpush1.msra.mxu0 0.0
      %1500 = vmatprep.subr.mxu0 0.0
      %1501 = vmatpush1.msra.mxu0 0.0
      %1502 = vmatprep.subr.mxu0 0.0
      %1503 = vmatpush1.msra.mxu0 0.0
      %1504 = vmatprep.subr.mxu0 0.0
      %1505 = vmatpush1.msra.mxu0 0.0
      %1506 = vmatprep.subr.mxu0 0.0
      %1507 = vmatpush1.msra.mxu0 %v1473
      %1508 = vmatprep.subr.mxu0 0.0
      %1509 = vmatpush1.msra.mxu0 %v1472
      %1510 = vmatprep.subr.mxu0 0.0
      %1511 = vmatpush1.msra.mxu0 %v1471
      %1512 = vmatprep.subr.mxu0 0.0
      %1513 = vmatpush1.msra.mxu0 %v1470
      %1514 = vmatprep.subr.mxu0 0.0
      %1515 = vmatpush2.msra.mxu0 0.0
      %1516 = vmatprep.subr.mxu0 0.0
      %1517 = vmatpush2.msra.mxu0 0.0
      %1518 = vmatprep.subr.mxu0 0.0
      %1519 = vmatpush2.msra.mxu0 0.0
      %1520 = vmatprep.subr.mxu0 0.0
      %1521 = vmatpush2.msra.mxu0 0.0
      %1522 = vmatprep.subr.mxu0 0.0
      %1523 = vmatpush2.msra.mxu0 0.0
      %1524 = vmatprep.subr.mxu0 0.0
      %1525 = vmatpush2.msra.mxu0 0.0
      %1526 = vmatprep.subr.mxu0 0.0
      %1527 = vmatpush2.msra.mxu0 0.0
      %1528 = vmatprep.subr.mxu0 0.0
      %1529 = vmatpush2.msra.mxu0 0.0
      %1530 = vmatprep.subr.mxu0 0.0
      %1531 = vmatpush2.msra.mxu0 0.0
      %1532 = vmatprep.subr.mxu0 0.0
      %1533 = vmatpush2.msra.mxu0 0.0
      %1534 = vmatprep.subr.mxu0 0.0
      %1535 = vmatpush2.msra.mxu0 0.0
      %1536 = vmatprep.subr.mxu0 0.0
      %1537 = vmatpush2.msra.mxu0 0.0
      %1538 = vmatprep.subr.mxu0 0.0
      %1539 = vmatpush2.msra.mxu0 0.0
      %1540 = vmatprep.subr.mxu0 0.0
      %1541 = vmatpush2.msra.mxu0 0.0
      %1542 = vmatprep.subr.mxu0 0.0
      %1543 = vmatpush2.msra.mxu0 0.0
      %1544 = vmatprep.subr.mxu0 0.0
      %1545 = vmatpush2.msra.mxu0 0.0
      %1546 = vmatprep.mubr.f32.mxu0 0.0
      %1547 = vmatmul.mubr.f32.gmra.mxu0 %v1480
      %v1548 = vpop.f32.mrf.mxu0
      %v1549 = vadd.f32 %v1478, %v1548
      %v1550 = vpop.f32.mrf.mxu0
      %1551 = vdwg.mxu0
      %v1552 = vmul.f32 %v1549, 0.5
      %v1553 = vmul.f32 %v1549, 0.044715
      %v1554 = vmul.f32 %v1553, %v1549
      %v1555 = vmul.f32 %v1554, %v1549
      %v1556 = vadd.f32 %v1549, %v1555
      %v1557 = vmul.f32 %v1556, 0.7978846
      %v1558 = vtanh.pop %v1557
      %v1559 = vadd.f32 %v1558, 1.0
      %v1560 = vmul.f32 %v1552, %v1559
      %v1561 = vld [vmem:[%s11] sm:$0xff]
      %v1562 = vld [vmem:[%s11 + $0x8] sm:$0xff]
      %v1563 = vld [vmem:[%s11 + $0x10] sm:$0xff]
      %v1564 = vld [vmem:[%s11 + $0x18] sm:$0xff]
      %v1565 = vld [vmem:[%s11 + $0x20] sm:$0xff]
      %v1566 = vld [vmem:[%s11 + $0x28] sm:$0xff]
      %v1567 = vld [vmem:[%s11 + $0x30] sm:$0xff]
      %v1568 = vld [vmem:[%s11 + $0x38] sm:$0xff]
      %v1569 = vld [vmem:[%s12] sm:$0x1]
      %v1570 = vlaneseq
      %v1571 = vshrl.u32 %v1570, 7
      %v1572 = vsub.s32 0, %v1571
      %v1573 = vrot.slane %v1569, %v1572
      %vm1574 = vcmask 523264
      %v1576 = vsel %vm1574, %v1560, 0
      %1578 = vmatprep.subr.mxu0 0.0
      %1579 = vmatpush1.msra.mxu0 0.0
      %1580 = vmatprep.subr.mxu0 0.0
      %1581 = vmatpush1.msra.mxu0 0.0
      %1582 = vmatprep.subr.mxu0 0.0
      %1583 = vmatpush1.msra.mxu0 0.0
      %1584 = vmatprep.subr.mxu0 0.0
      %1585 = vmatpush1.msra.mxu0 0.0
      %1586 = vmatprep.subr.mxu0 0.0
      %1587 = vmatpush1.msra.mxu0 0.0
      %1588 = vmatprep.subr.mxu0 0.0
      %1589 = vmatpush1.msra.mxu0 0.0
      %1590 = vmatprep.subr.mxu0 0.0
      %1591 = vmatpush1.msra.mxu0 0.0
      %1592 = vmatprep.subr.mxu0 0.0
      %1593 = vmatpush1.msra.mxu0 0.0
      %1594 = vmatprep.subr.mxu0 0.0
      %1595 = vmatpush1.msra.mxu0 %v1568
      %1596 = vmatprep.subr.mxu0 0.0
      %1597 = vmatpush1.msra.mxu0 %v1567
      %1598 = vmatprep.subr.mxu0 0.0
      %1599 = vmatpush1.msra.mxu0 %v1566
      %1600 = vmatprep.subr.mxu0 0.0
      %1601 = vmatpush1.msra.mxu0 %v1565
      %1602 = vmatprep.subr.mxu0 0.0
      %1603 = vmatpush1.msra.mxu0 %v1564
      %1604 = vmatprep.subr.mxu0 0.0
      %1605 = vmatpush1.msra.mxu0 %v1563
      %1606 = vmatprep.subr.mxu0 0.0
      %1607 = vmatpush1.msra.mxu0 %v1562
      %1608 = vmatprep.subr.mxu0 0.0
      %1609 = vmatpush1.msra.mxu0 %v1561
      %1610 = vmatprep.subr.mxu0 0.0
      %1611 = vmatpush2.msra.mxu0 0.0
      %1612 = vmatprep.subr.mxu0 0.0
      %1613 = vmatpush2.msra.mxu0 0.0
      %1614 = vmatprep.subr.mxu0 0.0
      %1615 = vmatpush2.msra.mxu0 0.0
      %1616 = vmatprep.subr.mxu0 0.0
      %1617 = vmatpush2.msra.mxu0 0.0
      %1618 = vmatprep.subr.mxu0 0.0
      %1619 = vmatpush2.msra.mxu0 0.0
      %1620 = vmatprep.subr.mxu0 0.0
      %1621 = vmatpush2.msra.mxu0 0.0
      %1622 = vmatprep.subr.mxu0 0.0
      %1623 = vmatpush2.msra.mxu0 0.0
      %1624 = vmatprep.subr.mxu0 0.0
      %1625 = vmatpush2.msra.mxu0 0.0
      %1626 = vmatprep.subr.mxu0 0.0
      %1627 = vmatpush2.msra.mxu0 0.0
      %1628 = vmatprep.subr.mxu0 0.0
      %1629 = vmatpush2.msra.mxu0 0.0
      %1630 = vmatprep.subr.mxu0 0.0
      %1631 = vmatpush2.msra.mxu0 0.0
      %1632 = vmatprep.subr.mxu0 0.0
      %1633 = vmatpush2.msra.mxu0 0.0
      %1634 = vmatprep.subr.mxu0 0.0
      %1635 = vmatpush2.msra.mxu0 0.0
      %1636 = vmatprep.subr.mxu0 0.0
      %1637 = vmatpush2.msra.mxu0 0.0
      %1638 = vmatprep.subr.mxu0 0.0
      %1639 = vmatpush2.msra.mxu0 0.0
      %1640 = vmatprep.subr.mxu0 0.0
      %1641 = vmatpush2.msra.mxu0 0.0
      %1642 = vmatprep.mubr.f32.mxu0 0.0
      %1643 = vmatmul.mubr.f32.gmra.mxu0 %v1576
      %v1644 = vpop.f32.mrf.mxu0
      %v1645 = vadd.f32 %v1573, %v1644
      %v1646 = vpop.f32.mrf.mxu0
      %1647 = vdwg.mxu0
      %v1648 = vadd.f32 %v1469, %v1645
      %v1649 = vsel %vm608, %v1648, 0.0
      %1650 = vadd.xlane.f32.xlu0 %v1649
      %v1651 = vpop.xlane.xlu0 %1650
      %v1652 = vmul.f32 %v1651, %v1449
      %v1653 = vsub.f32 %v1648, %v1652
      %v1654 = vmul.f32 %v1653, %v1653
      %v1655 = vsel %vm608, %v1654, 0.0
      %1656 = vadd.xlane.f32.xlu0 %v1655
      %v1657 = vpop.xlane.xlu0 %1656
      %v1658 = vmul.f32 %v1657, %v1449
      %v1659 = vadd.f32 %v1658, 1e-05
      %v1660 = vrsqrt.pop %v1659
      %v1661 = vmul.f32 %v1653, %v1660
      %v1662 = vlaneseq
      %v1663 = vshrl.u32 %v1662, 7
      %v1664 = vsub.s32 2, %v1663
      %v1665 = vrot.slane %v1444, %v1664
      %v1666 = vmul.f32 %v1661, %v1665
      %v1667 = vlaneseq
      %v1668 = vshrl.u32 %v1667, 7
      %v1669 = vsub.s32 3, %v1668
      %v1670 = vrot.slane %v1444, %v1669
      %v1671 = vadd.f32 %v1666, %v1670
      %s1672 = scalar_lea.vmem %s5, 32
      %v1673 = vld [vmem:[%s1672] sm:$0xff]
      %v1674 = vld [vmem:[%s1672 + $0x8] sm:$0xff]
      %v1675 = vld [vmem:[%s1672 + $0x10] sm:$0xff]
      %v1676 = vld [vmem:[%s1672 + $0x18] sm:$0xff]
      %v1677 = vld [vmem:[%s6 + $0x1] sm:$0x1]
      %v1678 = vlaneseq
      %v1679 = vshrl.u32 %v1678, 7
      %v1680 = vsub.s32 0, %v1679
      %v1681 = vrot.slane %v1677, %v1680
      %v1683 = vsel %vm608, %v1671, 0
      %1685 = vmatprep.subr.mxu0 0.0
      %1686 = vmatpush1.msra.mxu0 0.0
      %1687 = vmatprep.subr.mxu0 0.0
      %1688 = vmatpush1.msra.mxu0 0.0
      %1689 = vmatprep.subr.mxu0 0.0
      %1690 = vmatpush1.msra.mxu0 0.0
      %1691 = vmatprep.subr.mxu0 0.0
      %1692 = vmatpush1.msra.mxu0 0.0
      %1693 = vmatprep.subr.mxu0 0.0
      %1694 = vmatpush1.msra.mxu0 0.0
      %1695 = vmatprep.subr.mxu0 0.0
      %1696 = vmatpush1.msra.mxu0 0.0
      %1697 = vmatprep.subr.mxu0 0.0
      %1698 = vmatpush1.msra.mxu0 0.0
      %1699 = vmatprep.subr.mxu0 0.0
      %1700 = vmatpush1.msra.mxu0 0.0
      %1701 = vmatprep.subr.mxu0 0.0
      %1702 = vmatpush1.msra.mxu0 0.0
      %1703 = vmatprep.subr.mxu0 0.0
      %1704 = vmatpush1.msra.mxu0 0.0
      %1705 = vmatprep.subr.mxu0 0.0
      %1706 = vmatpush1.msra.mxu0 0.0
      %1707 = vmatprep.subr.mxu0 0.0
      %1708 = vmatpush1.msra.mxu0 0.0
      %1709 = vmatprep.subr.mxu0 0.0
      %1710 = vmatpush1.msra.mxu0 %v1676
      %1711 = vmatprep.subr.mxu0 0.0
      %1712 = vmatpush1.msra.mxu0 %v1675
      %1713 = vmatprep.subr.mxu0 0.0
      %1714 = vmatpush1.msra.mxu0 %v1674
      %1715 = vmatprep.subr.mxu0 0.0
      %1716 = vmatpush1.msra.mxu0 %v1673
      %1717 = vmatprep.subr.mxu0 0.0
      %1718 = vmatpush2.msra.mxu0 0.0
      %1719 = vmatprep.subr.mxu0 0.0
      %1720 = vmatpush2.msra.mxu0 0.0
      %1721 = vmatprep.subr.mxu0 0.0
      %1722 = vmatpush2.msra.mxu0 0.0
      %1723 = vmatprep.subr.mxu0 0.0
      %1724 = vmatpush2.msra.mxu0 0.0
      %1725 = vmatprep.subr.mxu0 0.0
      %1726 = vmatpush2.msra.mxu0 0.0
      %1727 = vmatprep.subr.mxu0 0.0
      %1728 = vmatpush2.msra.mxu0 0.0
      %1729 = vmatprep.subr.mxu0 0.0
      %1730 = vmatpush2.msra.mxu0 0.0
      %1731 = vmatprep.subr.mxu0 0.0
      %1732 = vmatpush2.msra.mxu0 0.0
      %1733 = vmatprep.subr.mxu0 0.0
      %1734 = vmatpush2.msra.mxu0 0.0
      %1735 = vmatprep.subr.mxu0 0.0
      %1736 = vmatpush2.msra.mxu0 0.0
      %1737 = vmatprep.subr.mxu0 0.0
      %1738 = vmatpush2.msra.mxu0 0.0
      %1739 = vmatprep.subr.mxu0 0.0
      %1740 = vmatpush2.msra.mxu0 0.0
      %1741 = vmatprep.subr.mxu0 0.0
      %1742 = vmatpush2.msra.mxu0 0.0
      %1743 = vmatprep.subr.mxu0 0.0
      %1744 = vmatpush2.msra.mxu0 0.0
      %1745 = vmatprep.subr.mxu0 0.0
      %1746 = vmatpush2.msra.mxu0 0.0
      %1747 = vmatprep.subr.mxu0 0.0
      %1748 = vmatpush2.msra.mxu0 0.0
      %1749 = vmatprep.mubr.f32.mxu0 0.0
      %1750 = vmatmul.mubr.f32.gmra.mxu0 %v1683
      %v1751 = vpop.f32.mrf.mxu0
      %v1752 = vadd.f32 %v1681, %v1751
      %v1753 = vpop.f32.mrf.mxu0
      %1754 = vdwg.mxu0
      %1756 = vrot.lane.b32.xlu0 %v1752, 96
      %v1757 = vpop.permute.xlu0 %1756
      %v1758 = vsel %vm685, %v1752, 0
      %v1760 = vsel %vm685, %v1757, 0
      %1762 = vmatprep.subr.mxu0 0.0
      %1763 = vmatpush1.xpose.msra.mxu0 0.0
      %1764 = vmatprep.subr.mxu0 0.0
      %1765 = vmatpush1.xpose.msra.mxu0 0.0
      %1766 = vmatprep.subr.mxu0 0.0
      %1767 = vmatpush1.xpose.msra.mxu0 0.0
      %1768 = vmatprep.subr.mxu0 0.0
      %1769 = vmatpush1.xpose.msra.mxu0 0.0
      %1770 = vmatprep.subr.mxu0 0.0
      %1771 = vmatpush1.xpose.msra.mxu0 0.0
      %1772 = vmatprep.subr.mxu0 0.0
      %1773 = vmatpush1.xpose.msra.mxu0 0.0
      %1774 = vmatprep.subr.mxu0 0.0
      %1775 = vmatpush1.xpose.msra.mxu0 0.0
      %1776 = vmatprep.subr.mxu0 0.0
      %1777 = vmatpush1.xpose.msra.mxu0 0.0
      %1778 = vmatprep.subr.mxu0 0.0
      %1779 = vmatpush1.xpose.msra.mxu0 0.0
      %1780 = vmatprep.subr.mxu0 0.0
      %1781 = vmatpush1.xpose.msra.mxu0 0.0
      %1782 = vmatprep.subr.mxu0 0.0
      %1783 = vmatpush1.xpose.msra.mxu0 0.0
      %1784 = vmatprep.subr.mxu0 0.0
      %1785 = vmatpush1.xpose.msra.mxu0 0.0
      %1786 = vmatprep.subr.mxu0 0.0
      %1787 = vmatpush1.xpose.msra.mxu0 0.0
      %1788 = vmatprep.subr.mxu0 0.0
      %1789 = vmatpush1.xpose.msra.mxu0 0.0
      %1790 = vmatprep.subr.mxu0 0.0
      %1791 = vmatpush1.xpose.msra.mxu0 0.0
      %1792 = vmatprep.subr.mxu0 0.0
      %1793 = vmatpush1.xpose.msra.mxu0 %v1760
      %1794 = vmatprep.subr.mxu0 0.0
      %1795 = vmatpush2.xpose.msra.mxu0 0.0
      %1796 = vmatprep.subr.mxu0 0.0
      %1797 = vmatpush2.xpose.msra.mxu0 0.0
      %1798 = vmatprep.subr.mxu0 0.0
      %1799 = vmatpush2.xpose.msra.mxu0 0.0
      %1800 = vmatprep.subr.mxu0 0.0
      %1801 = vmatpush2.xpose.msra.mxu0 0.0
      %1802 = vmatprep.subr.mxu0 0.0
      %1803 = vmatpush2.xpose.msra.mxu0 0.0
      %1804 = vmatprep.subr.mxu0 0.0
      %1805 = vmatpush2.xpose.msra.mxu0 0.0
      %1806 = vmatprep.subr.mxu0 0.0
      %1807 = vmatpush2.xpose.msra.mxu0 0.0
      %1808 = vmatprep.subr.mxu0 0.0
      %1809 = vmatpush2.xpose.msra.mxu0 0.0
      %1810 = vmatprep.subr.mxu0 0.0
      %1811 = vmatpush2.xpose.msra.mxu0 0.0
      %1812 = vmatprep.subr.mxu0 0.0
      %1813 = vmatpush2.xpose.msra.mxu0 0.0
      %1814 = vmatprep.subr.mxu0 0.0
      %1815 = vmatpush2.xpose.msra.mxu0 0.0
      %1816 = vmatprep.subr.mxu0 0.0
      %1817 = vmatpush2.xpose.msra.mxu0 0.0
      %1818 = vmatprep.subr.mxu0 0.0
      %1819 = vmatpush2.xpose.msra.mxu0 0.0
      %1820 = vmatprep.subr.mxu0 0.0
      %1821 = vmatpush2.xpose.msra.mxu0 0.0
      %1822 = vmatprep.subr.mxu0 0.0
      %1823 = vmatpush2.xpose.msra.mxu0 0.0
      %1824 = vmatprep.subr.mxu0 0.0
      %1825 = vmatpush2.xpose.msra.mxu0 0.0
      %1826 = vmatprep.mubr.f32.mxu0 0.0
      %1827 = vmatmul.mubr.f32.gmra.mxu0 %v1758
      %v1828 = vpop.f32.mrf.mxu0
      %v1829 = vadd.f32 %v598, %v1828
      %v1830 = vpop.f32.mrf.mxu0
      %1831 = vdwg.mxu0
      %v1832 = vsel %vm685, %v1829, -inf
      %1833 = vmax.xlane.f32.xlu0 %v1832
      %v1834 = vpop.xlane.xlu0 %1833
      %v1835 = vsub.f32 %v1829, %v1834
      %v1836 = vmul.f32 %v1835, 1.442695
      %v1837 = vpow.pop %v1836
      %v1838 = vsel %vm685, %v1837, 0.0
      %1839 = vadd.xlane.f32.xlu0 %v1838
      %v1840 = vpop.xlane.xlu0 %1839
      %v1841 = vrcp.pop %v1840
      %v1842 = vmul.f32 %v1837, %v1841
      %1843 = vrot.lane.b32.xlu0 %v1752, 64
      %v1844 = vpop.permute.xlu0 %1843
      %v1847 = vsel %vm685, %v1842, 0
      %1849 = vmatprep.subr.mxu0 0.0
      %1850 = vmatpush1.msra.mxu0 0.0
      %1851 = vmatprep.subr.mxu0 0.0
      %1852 = vmatpush1.msra.mxu0 0.0
      %1853 = vmatprep.subr.mxu0 0.0
      %1854 = vmatpush1.msra.mxu0 0.0
      %1855 = vmatprep.subr.mxu0 0.0
      %1856 = vmatpush1.msra.mxu0 0.0
      %1857 = vmatprep.subr.mxu0 0.0
      %1858 = vmatpush1.msra.mxu0 0.0
      %1859 = vmatprep.subr.mxu0 0.0
      %1860 = vmatpush1.msra.mxu0 0.0
      %1861 = vmatprep.subr.mxu0 0.0
      %1862 = vmatpush1.msra.mxu0 0.0
      %1863 = vmatprep.subr.mxu0 0.0
      %1864 = vmatpush1.msra.mxu0 0.0
      %1865 = vmatprep.subr.mxu0 0.0
      %1866 = vmatpush1.msra.mxu0 0.0
      %1867 = vmatprep.subr.mxu0 0.0
      %1868 = vmatpush1.msra.mxu0 0.0
      %1869 = vmatprep.subr.mxu0 0.0
      %1870 = vmatpush1.msra.mxu0 0.0
      %1871 = vmatprep.subr.mxu0 0.0
      %1872 = vmatpush1.msra.mxu0 0.0
      %1873 = vmatprep.subr.mxu0 0.0
      %1874 = vmatpush1.msra.mxu0 0.0
      %1875 = vmatprep.subr.mxu0 0.0
      %1876 = vmatpush1.msra.mxu0 0.0
      %1877 = vmatprep.subr.mxu0 0.0
      %1878 = vmatpush1.msra.mxu0 0.0
      %1879 = vmatprep.subr.mxu0 0.0
      %1880 = vmatpush1.msra.mxu0 %v1844
      %1881 = vmatprep.subr.mxu0 0.0
      %1882 = vmatpush2.msra.mxu0 0.0
      %1883 = vmatprep.subr.mxu0 0.0
      %1884 = vmatpush2.msra.mxu0 0.0
      %1885 = vmatprep.subr.mxu0 0.0
      %1886 = vmatpush2.msra.mxu0 0.0
      %1887 = vmatprep.subr.mxu0 0.0
      %1888 = vmatpush2.msra.mxu0 0.0
      %1889 = vmatprep.subr.mxu0 0.0
      %1890 = vmatpush2.msra.mxu0 0.0
      %1891 = vmatprep.subr.mxu0 0.0
      %1892 = vmatpush2.msra.mxu0 0.0
      %1893 = vmatprep.subr.mxu0 0.0
      %1894 = vmatpush2.msra.mxu0 0.0
      %1895 = vmatprep.subr.mxu0 0.0
      %1896 = vmatpush2.msra.mxu0 0.0
      %1897 = vmatprep.subr.mxu0 0.0
      %1898 = vmatpush2.msra.mxu0 0.0
      %1899 = vmatprep.subr.mxu0 0.0
      %1900 = vmatpush2.msra.mxu0 0.0
      %1901 = vmatprep.subr.mxu0 0.0
      %1902 = vmatpush2.msra.mxu0 0.0
      %1903 = vmatprep.subr.mxu0 0.0
      %1904 = vmatpush2.msra.mxu0 0.0
      %1905 = vmatprep.subr.mxu0 0.0
      %1906 = vmatpush2.msra.mxu0 0.0
      %1907 = vmatprep.subr.mxu0 0.0
      %1908 = vmatpush2.msra.mxu0 0.0
      %1909 = vmatprep.subr.mxu0 0.0
      %1910 = vmatpush2.msra.mxu0 0.0
      %1911 = vmatprep.subr.mxu0 0.0
      %1912 = vmatpush2.msra.mxu0 0.0
      %1913 = vmatprep.mubr.f32.mxu0 0.0
      %1914 = vmatmul.mubr.f32.gmra.mxu0 %v1847
      %v1915 = vpop.f32.mrf.mxu0
      %v1916 = vadd.f32 0.0, %v1915
      %v1917 = vpop.f32.mrf.mxu0
      %1918 = vdwg.mxu0
      %1919 = vst.msk [vmem:[#allocation2] sm:$0xff] %vm685, %v1916
      %1920 = vrot.lane.b32.xlu0 %v1752, 120
      %v1921 = vpop.permute.xlu0 %1920
      %1922 = vrot.lane.b32.xlu0 %v1752, 88
      %v1923 = vpop.permute.xlu0 %1922
      %v1924 = vsel %vm685, %v1921, 0
      %v1926 = vsel %vm685, %v1923, 0
      %1928 = vmatprep.subr.mxu0 0.0
      %1929 = vmatpush1.xpose.msra.mxu0 0.0
      %1930 = vmatprep.subr.mxu0 0.0
      %1931 = vmatpush1.xpose.msra.mxu0 0.0
      %1932 = vmatprep.subr.mxu0 0.0
      %1933 = vmatpush1.xpose.msra.mxu0 0.0
      %1934 = vmatprep.subr.mxu0 0.0
      %1935 = vmatpush1.xpose.msra.mxu0 0.0
      %1936 = vmatprep.subr.mxu0 0.0
      %1937 = vmatpush1.xpose.msra.mxu0 0.0
      %1938 = vmatprep.subr.mxu0 0.0
      %1939 = vmatpush1.xpose.msra.mxu0 0.0
      %1940 = vmatprep.subr.mxu0 0.0
      %1941 = vmatpush1.xpose.msra.mxu0 0.0
      %1942 = vmatprep.subr.mxu0 0.0
      %1943 = vmatpush1.xpose.msra.mxu0 0.0
      %1944 = vmatprep.subr.mxu0 0.0
      %1945 = vmatpush1.xpose.msra.mxu0 0.0
      %1946 = vmatprep.subr.mxu0 0.0
      %1947 = vmatpush1.xpose.msra.mxu0 0.0
      %1948 = vmatprep.subr.mxu0 0.0
      %1949 = vmatpush1.xpose.msra.mxu0 0.0
      %1950 = vmatprep.subr.mxu0 0.0
      %1951 = vmatpush1.xpose.msra.mxu0 0.0
      %1952 = vmatprep.subr.mxu0 0.0
      %1953 = vmatpush1.xpose.msra.mxu0 0.0
      %1954 = vmatprep.subr.mxu0 0.0
      %1955 = vmatpush1.xpose.msra.mxu0 0.0
      %1956 = vmatprep.subr.mxu0 0.0
      %1957 = vmatpush1.xpose.msra.mxu0 0.0
      %1958 = vmatprep.subr.mxu0 0.0
      %1959 = vmatpush1.xpose.msra.mxu0 %v1926
      %1960 = vmatprep.subr.mxu0 0.0
      %1961 = vmatpush2.xpose.msra.mxu0 0.0
      %1962 = vmatprep.subr.mxu0 0.0
      %1963 = vmatpush2.xpose.msra.mxu0 0.0
      %1964 = vmatprep.subr.mxu0 0.0
      %1965 = vmatpush2.xpose.msra.mxu0 0.0
      %1966 = vmatprep.subr.mxu0 0.0
      %1967 = vmatpush2.xpose.msra.mxu0 0.0
      %1968 = vmatprep.subr.mxu0 0.0
      %1969 = vmatpush2.xpose.msra.mxu0 0.0
      %1970 = vmatprep.subr.mxu0 0.0
      %1971 = vmatpush2.xpose.msra.mxu0 0.0
      %1972 = vmatprep.subr.mxu0 0.0
      %1973 = vmatpush2.xpose.msra.mxu0 0.0
      %1974 = vmatprep.subr.mxu0 0.0
      %1975 = vmatpush2.xpose.msra.mxu0 0.0
      %1976 = vmatprep.subr.mxu0 0.0
      %1977 = vmatpush2.xpose.msra.mxu0 0.0
      %1978 = vmatprep.subr.mxu0 0.0
      %1979 = vmatpush2.xpose.msra.mxu0 0.0
      %1980 = vmatprep.subr.mxu0 0.0
      %1981 = vmatpush2.xpose.msra.mxu0 0.0
      %1982 = vmatprep.subr.mxu0 0.0
      %1983 = vmatpush2.xpose.msra.mxu0 0.0
      %1984 = vmatprep.subr.mxu0 0.0
      %1985 = vmatpush2.xpose.msra.mxu0 0.0
      %1986 = vmatprep.subr.mxu0 0.0
      %1987 = vmatpush2.xpose.msra.mxu0 0.0
      %1988 = vmatprep.subr.mxu0 0.0
      %1989 = vmatpush2.xpose.msra.mxu0 0.0
      %1990 = vmatprep.subr.mxu0 0.0
      %1991 = vmatpush2.xpose.msra.mxu0 0.0
      %1992 = vmatprep.mubr.f32.mxu0 0.0
      %1993 = vmatmul.mubr.f32.gmra.mxu0 %v1924
      %v1994 = vpop.f32.mrf.mxu0
      %v1995 = vadd.f32 %v598, %v1994
      %v1996 = vpop.f32.mrf.mxu0
      %1997 = vdwg.mxu0
      %v1998 = vsel %vm685, %v1995, -inf
      %1999 = vmax.xlane.f32.xlu0 %v1998
      %v2000 = vpop.xlane.xlu0 %1999
      %v2001 = vsub.f32 %v1995, %v2000
      %v2002 = vmul.f32 %v2001, 1.442695
      %v2003 = vpow.pop %v2002
      %v2004 = vsel %vm685, %v2003, 0.0
      %2005 = vadd.xlane.f32.xlu0 %v2004
      %v2006 = vpop.xlane.xlu0 %2005
      %v2007 = vrcp.pop %v2006
      %v2008 = vmul.f32 %v2003, %v2007
      %2009 = vrot.lane.b32.xlu0 %v1752, 56
      %v2010 = vpop.permute.xlu0 %2009
      %v2013 = vsel %vm685, %v2008, 0
      %2015 = vmatprep.subr.mxu0 0.0
      %2016 = vmatpush1.msra.mxu0 0.0
      %2017 = vmatprep.subr.mxu0 0.0
      %2018 = vmatpush1.msra.mxu0 0.0
      %2019 = vmatprep.subr.mxu0 0.0
      %2020 = vmatpush1.msra.mxu0 0.0
      %2021 = vmatprep.subr.mxu0 0.0
      %2022 = vmatpush1.msra.mxu0 0.0
      %2023 = vmatprep.subr.mxu0 0.0
      %2024 = vmatpush1.msra.mxu0 0.0
      %2025 = vmatprep.subr.mxu0 0.0
      %2026 = vmatpush1.msra.mxu0 0.0
      %2027 = vmatprep.subr.mxu0 0.0
      %2028 = vmatpush1.msra.mxu0 0.0
      %2029 = vmatprep.subr.mxu0 0.0
      %2030 = vmatpush1.msra.mxu0 0.0
      %2031 = vmatprep.subr.mxu0 0.0
      %2032 = vmatpush1.msra.mxu0 0.0
      %2033 = vmatprep.subr.mxu0 0.0
      %2034 = vmatpush1.msra.mxu0 0.0
      %2035 = vmatprep.subr.mxu0 0.0
      %2036 = vmatpush1.msra.mxu0 0.0
      %2037 = vmatprep.subr.mxu0 0.0
      %2038 = vmatpush1.msra.mxu0 0.0
      %2039 = vmatprep.subr.mxu0 0.0
      %2040 = vmatpush1.msra.mxu0 0.0
      %2041 = vmatprep.subr.mxu0 0.0
      %2042 = vmatpush1.msra.mxu0 0.0
      %2043 = vmatprep.subr.mxu0 0.0
      %2044 = vmatpush1.msra.mxu0 0.0
      %2045 = vmatprep.subr.mxu0 0.0
      %2046 = vmatpush1.msra.mxu0 %v2010
      %2047 = vmatprep.subr.mxu0 0.0
      %2048 = vmatpush2.msra.mxu0 0.0
      %2049 = vmatprep.subr.mxu0 0.0
      %2050 = vmatpush2.msra.mxu0 0.0
      %2051 = vmatprep.subr.mxu0 0.0
      %2052 = vmatpush2.msra.mxu0 0.0
      %2053 = vmatprep.subr.mxu0 0.0
      %2054 = vmatpush2.msra.mxu0 0.0
      %2055 = vmatprep.subr.mxu0 0.0
      %2056 = vmatpush2.msra.mxu0 0.0
      %2057 = vmatprep.subr.mxu0 0.0
      %2058 = vmatpush2.msra.mxu0 0.0
      %2059 = vmatprep.subr.mxu0 0.0
      %2060 = vmatpush2.msra.mxu0 0.0
      %2061 = vmatprep.subr.mxu0 0.0
      %2062 = vmatpush2.msra.mxu0 0.0
      %2063 = vmatprep.subr.mxu0 0.0
      %2064 = vmatpush2.msra.mxu0 0.0
      %2065 = vmatprep.subr.mxu0 0.0
      %2066 = vmatpush2.msra.mxu0 0.0
      %2067 = vmatprep.subr.mxu0 0.0
      %2068 = vmatpush2.msra.mxu0 0.0
      %2069 = vmatprep.subr.mxu0 0.0
      %2070 = vmatpush2.msra.mxu0 0.0
      %2071 = vmatprep.subr.mxu0 0.0
      %2072 = vmatpush2.msra.mxu0 0.0
      %2073 = vmatprep.subr.mxu0 0.0
      %2074 = vmatpush2.msra.mxu0 0.0
      %2075 = vmatprep.subr.mxu0 0.0
      %2076 = vmatpush2.msra.mxu0 0.0
      %2077 = vmatprep.subr.mxu0 0.0
      %2078 = vmatpush2.msra.mxu0 0.0
      %2079 = vmatprep.mubr.f32.mxu0 0.0
      %2080 = vmatmul.mubr.f32.gmra.mxu0 %v2013
      %v2081 = vpop.f32.mrf.mxu0
      %v2082 = vadd.f32 0.0, %v2081
      %v2083 = vpop.f32.mrf.mxu0
      %2084 = vdwg.mxu0
      %2086 = vrot.lane.b32.xlu0 %v2082, 8
      %v2087 = vpop.permute.xlu0 %2086
      %2089 = vst.msk [vmem:[#allocation2] sm:$0xff] %vm1017, %v2087
      %2090 = vrot.lane.b32.xlu0 %v1752, 112
      %v2091 = vpop.permute.xlu0 %2090
      %2092 = vrot.lane.b32.xlu0 %v1752, 80
      %v2093 = vpop.permute.xlu0 %2092
      %v2094 = vsel %vm685, %v2091, 0
      %v2096 = vsel %vm685, %v2093, 0
      %2098 = vmatprep.subr.mxu0 0.0
      %2099 = vmatpush1.xpose.msra.mxu0 0.0
      %2100 = vmatprep.subr.mxu0 0.0
      %2101 = vmatpush1.xpose.msra.mxu0 0.0
      %2102 = vmatprep.subr.mxu0 0.0
      %2103 = vmatpush1.xpose.msra.mxu0 0.0
      %2104 = vmatprep.subr.mxu0 0.0
      %2105 = vmatpush1.xpose.msra.mxu0 0.0
      %2106 = vmatprep.subr.mxu0 0.0
      %2107 = vmatpush1.xpose.msra.mxu0 0.0
      %2108 = vmatprep.subr.mxu0 0.0
      %2109 = vmatpush1.xpose.msra.mxu0 0.0
      %2110 = vmatprep.subr.mxu0 0.0
      %2111 = vmatpush1.xpose.msra.mxu0 0.0
      %2112 = vmatprep.subr.mxu0 0.0
      %2113 = vmatpush1.xpose.msra.mxu0 0.0
      %2114 = vmatprep.subr.mxu0 0.0
      %2115 = vmatpush1.xpose.msra.mxu0 0.0
      %2116 = vmatprep.subr.mxu0 0.0
      %2117 = vmatpush1.xpose.msra.mxu0 0.0
      %2118 = vmatprep.subr.mxu0 0.0
      %2119 = vmatpush1.xpose.msra.mxu0 0.0
      %2120 = vmatprep.subr.mxu0 0.0
      %2121 = vmatpush1.xpose.msra.mxu0 0.0
      %2122 = vmatprep.subr.mxu0 0.0
      %2123 = vmatpush1.xpose.msra.mxu0 0.0
      %2124 = vmatprep.subr.mxu0 0.0
      %2125 = vmatpush1.xpose.msra.mxu0 0.0
      %2126 = vmatprep.subr.mxu0 0.0
      %2127 = vmatpush1.xpose.msra.mxu0 0.0
      %2128 = vmatprep.subr.mxu0 0.0
      %2129 = vmatpush1.xpose.msra.mxu0 %v2096
      %2130 = vmatprep.subr.mxu0 0.0
      %2131 = vmatpush2.xpose.msra.mxu0 0.0
      %2132 = vmatprep.subr.mxu0 0.0
      %2133 = vmatpush2.xpose.msra.mxu0 0.0
      %2134 = vmatprep.subr.mxu0 0.0
      %2135 = vmatpush2.xpose.msra.mxu0 0.0
      %2136 = vmatprep.subr.mxu0 0.0
      %2137 = vmatpush2.xpose.msra.mxu0 0.0
      %2138 = vmatprep.subr.mxu0 0.0
      %2139 = vmatpush2.xpose.msra.mxu0 0.0
      %2140 = vmatprep.subr.mxu0 0.0
      %2141 = vmatpush2.xpose.msra.mxu0 0.0
      %2142 = vmatprep.subr.mxu0 0.0
      %2143 = vmatpush2.xpose.msra.mxu0 0.0
      %2144 = vmatprep.subr.mxu0 0.0
      %2145 = vmatpush2.xpose.msra.mxu0 0.0
      %2146 = vmatprep.subr.mxu0 0.0
      %2147 = vmatpush2.xpose.msra.mxu0 0.0
      %2148 = vmatprep.subr.mxu0 0.0
      %2149 = vmatpush2.xpose.msra.mxu0 0.0
      %2150 = vmatprep.subr.mxu0 0.0
      %2151 = vmatpush2.xpose.msra.mxu0 0.0
      %2152 = vmatprep.subr.mxu0 0.0
      %2153 = vmatpush2.xpose.msra.mxu0 0.0
      %2154 = vmatprep.subr.mxu0 0.0
      %2155 = vmatpush2.xpose.msra.mxu0 0.0
      %2156 = vmatprep.subr.mxu0 0.0
      %2157 = vmatpush2.xpose.msra.mxu0 0.0
      %2158 = vmatprep.subr.mxu0 0.0
      %2159 = vmatpush2.xpose.msra.mxu0 0.0
      %2160 = vmatprep.subr.mxu0 0.0
      %2161 = vmatpush2.xpose.msra.mxu0 0.0
      %2162 = vmatprep.mubr.f32.mxu0 0.0
      %2163 = vmatmul.mubr.f32.gmra.mxu0 %v2094
      %v2164 = vpop.f32.mrf.mxu0
      %v2165 = vadd.f32 %v598, %v2164
      %v2166 = vpop.f32.mrf.mxu0
      %2167 = vdwg.mxu0
      %v2168 = vsel %vm685, %v2165, -inf
      %2169 = vmax.xlane.f32.xlu0 %v2168
      %v2170 = vpop.xlane.xlu0 %2169
      %v2171 = vsub.f32 %v2165, %v2170
      %v2172 = vmul.f32 %v2171, 1.442695
      %v2173 = vpow.pop %v2172
      %v2174 = vsel %vm685, %v2173, 0.0
      %2175 = vadd.xlane.f32.xlu0 %v2174
      %v2176 = vpop.xlane.xlu0 %2175
      %v2177 = vrcp.pop %v2176
      %v2178 = vmul.f32 %v2173, %v2177
      %2179 = vrot.lane.b32.xlu0 %v1752, 48
      %v2180 = vpop.permute.xlu0 %2179
      %v2183 = vsel %vm685, %v2178, 0
      %2185 = vmatprep.subr.mxu0 0.0
      %2186 = vmatpush1.msra.mxu0 0.0
      %2187 = vmatprep.subr.mxu0 0.0
      %2188 = vmatpush1.msra.mxu0 0.0
      %2189 = vmatprep.subr.mxu0 0.0
      %2190 = vmatpush1.msra.mxu0 0.0
      %2191 = vmatprep.subr.mxu0 0.0
      %2192 = vmatpush1.msra.mxu0 0.0
      %2193 = vmatprep.subr.mxu0 0.0
      %2194 = vmatpush1.msra.mxu0 0.0
      %2195 = vmatprep.subr.mxu0 0.0
      %2196 = vmatpush1.msra.mxu0 0.0
      %2197 = vmatprep.subr.mxu0 0.0
      %2198 = vmatpush1.msra.mxu0 0.0
      %2199 = vmatprep.subr.mxu0 0.0
      %2200 = vmatpush1.msra.mxu0 0.0
      %2201 = vmatprep.subr.mxu0 0.0
      %2202 = vmatpush1.msra.mxu0 0.0
      %2203 = vmatprep.subr.mxu0 0.0
      %2204 = vmatpush1.msra.mxu0 0.0
      %2205 = vmatprep.subr.mxu0 0.0
      %2206 = vmatpush1.msra.mxu0 0.0
      %2207 = vmatprep.subr.mxu0 0.0
      %2208 = vmatpush1.msra.mxu0 0.0
      %2209 = vmatprep.subr.mxu0 0.0
      %2210 = vmatpush1.msra.mxu0 0.0
      %2211 = vmatprep.subr.mxu0 0.0
      %2212 = vmatpush1.msra.mxu0 0.0
      %2213 = vmatprep.subr.mxu0 0.0
      %2214 = vmatpush1.msra.mxu0 0.0
      %2215 = vmatprep.subr.mxu0 0.0
      %2216 = vmatpush1.msra.mxu0 %v2180
      %2217 = vmatprep.subr.mxu0 0.0
      %2218 = vmatpush2.msra.mxu0 0.0
      %2219 = vmatprep.subr.mxu0 0.0
      %2220 = vmatpush2.msra.mxu0 0.0
      %2221 = vmatprep.subr.mxu0 0.0
      %2222 = vmatpush2.msra.mxu0 0.0
      %2223 = vmatprep.subr.mxu0 0.0
      %2224 = vmatpush2.msra.mxu0 0.0
      %2225 = vmatprep.subr.mxu0 0.0
      %2226 = vmatpush2.msra.mxu0 0.0
      %2227 = vmatprep.subr.mxu0 0.0
      %2228 = vmatpush2.msra.mxu0 0.0
      %2229 = vmatprep.subr.mxu0 0.0
      %2230 = vmatpush2.msra.mxu0 0.0
      %2231 = vmatprep.subr.mxu0 0.0
      %2232 = vmatpush2.msra.mxu0 0.0
      %2233 = vmatprep.subr.mxu0 0.0
      %2234 = vmatpush2.msra.mxu0 0.0
      %2235 = vmatprep.subr.mxu0 0.0
      %2236 = vmatpush2.msra.mxu0 0.0
      %2237 = vmatprep.subr.mxu0 0.0
      %2238 = vmatpush2.msra.mxu0 0.0
      %2239 = vmatprep.subr.mxu0 0.0
      %2240 = vmatpush2.msra.mxu0 0.0
      %2241 = vmatprep.subr.mxu0 0.0
      %2242 = vmatpush2.msra.mxu0 0.0
      %2243 = vmatprep.subr.mxu0 0.0
      %2244 = vmatpush2.msra.mxu0 0.0
      %2245 = vmatprep.subr.mxu0 0.0
      %2246 = vmatpush2.msra.mxu0 0.0
      %2247 = vmatprep.subr.mxu0 0.0
      %2248 = vmatpush2.msra.mxu0 0.0
      %2249 = vmatprep.mubr.f32.mxu0 0.0
      %2250 = vmatmul.mubr.f32.gmra.mxu0 %v2183
      %v2251 = vpop.f32.mrf.mxu0
      %v2252 = vadd.f32 0.0, %v2251
      %v2253 = vpop.f32.mrf.mxu0
      %2254 = vdwg.mxu0
      %2256 = vrot.lane.b32.xlu0 %v2252, 16
      %v2257 = vpop.permute.xlu0 %2256
      %2259 = vst.msk [vmem:[#allocation2] sm:$0xff] %vm1188, %v2257
      %2260 = vrot.lane.b32.xlu0 %v1752, 104
      %v2261 = vpop.permute.xlu0 %2260
      %2262 = vrot.lane.b32.xlu0 %v1752, 72
      %v2263 = vpop.permute.xlu0 %2262
      %v2264 = vsel %vm685, %v2261, 0
      %v2266 = vsel %vm685, %v2263, 0
      %2268 = vmatprep.subr.mxu0 0.0
      %2269 = vmatpush1.xpose.msra.mxu0 0.0
      %2270 = vmatprep.subr.mxu0 0.0
      %2271 = vmatpush1.xpose.msra.mxu0 0.0
      %2272 = vmatprep.subr.mxu0 0.0
      %2273 = vmatpush1.xpose.msra.mxu0 0.0
      %2274 = vmatprep.subr.mxu0 0.0
      %2275 = vmatpush1.xpose.msra.mxu0 0.0
      %2276 = vmatprep.subr.mxu0 0.0
      %2277 = vmatpush1.xpose.msra.mxu0 0.0
      %2278 = vmatprep.subr.mxu0 0.0
      %2279 = vmatpush1.xpose.msra.mxu0 0.0
      %2280 = vmatprep.subr.mxu0 0.0
      %2281 = vmatpush1.xpose.msra.mxu0 0.0
      %2282 = vmatprep.subr.mxu0 0.0
      %2283 = vmatpush1.xpose.msra.mxu0 0.0
      %2284 = vmatprep.subr.mxu0 0.0
      %2285 = vmatpush1.xpose.msra.mxu0 0.0
      %2286 = vmatprep.subr.mxu0 0.0
      %2287 = vmatpush1.xpose.msra.mxu0 0.0
      %2288 = vmatprep.subr.mxu0 0.0
      %2289 = vmatpush1.xpose.msra.mxu0 0.0
      %2290 = vmatprep.subr.mxu0 0.0
      %2291 = vmatpush1.xpose.msra.mxu0 0.0
      %2292 = vmatprep.subr.mxu0 0.0
      %2293 = vmatpush1.xpose.msra.mxu0 0.0
      %2294 = vmatprep.subr.mxu0 0.0
      %2295 = vmatpush1.xpose.msra.mxu0 0.0
      %2296 = vmatprep.subr.mxu0 0.0
      %2297 = vmatpush1.xpose.msra.mxu0 0.0
      %2298 = vmatprep.subr.mxu0 0.0
      %2299 = vmatpush1.xpose.msra.mxu0 %v2266
      %2300 = vmatprep.subr.mxu0 0.0
      %2301 = vmatpush2.xpose.msra.mxu0 0.0
      %2302 = vmatprep.subr.mxu0 0.0
      %2303 = vmatpush2.xpose.msra.mxu0 0.0
      %2304 = vmatprep.subr.mxu0 0.0
      %2305 = vmatpush2.xpose.msra.mxu0 0.0
      %2306 = vmatprep.subr.mxu0 0.0
      %2307 = vmatpush2.xpose.msra.mxu0 0.0
      %2308 = vmatprep.subr.mxu0 0.0
      %2309 = vmatpush2.xpose.msra.mxu0 0.0
      %2310 = vmatprep.subr.mxu0 0.0
      %2311 = vmatpush2.xpose.msra.mxu0 0.0
      %2312 = vmatprep.subr.mxu0 0.0
      %2313 = vmatpush2.xpose.msra.mxu0 0.0
      %2314 = vmatprep.subr.mxu0 0.0
      %2315 = vmatpush2.xpose.msra.mxu0 0.0
      %2316 = vmatprep.subr.mxu0 0.0
      %2317 = vmatpush2.xpose.msra.mxu0 0.0
      %2318 = vmatprep.subr.mxu0 0.0
      %2319 = vmatpush2.xpose.msra.mxu0 0.0
      %2320 = vmatprep.subr.mxu0 0.0
      %2321 = vmatpush2.xpose.msra.mxu0 0.0
      %2322 = vmatprep.subr.mxu0 0.0
      %2323 = vmatpush2.xpose.msra.mxu0 0.0
      %2324 = vmatprep.subr.mxu0 0.0
      %2325 = vmatpush2.xpose.msra.mxu0 0.0
      %2326 = vmatprep.subr.mxu0 0.0
      %2327 = vmatpush2.xpose.msra.mxu0 0.0
      %2328 = vmatprep.subr.mxu0 0.0
      %2329 = vmatpush2.xpose.msra.mxu0 0.0
      %2330 = vmatprep.subr.mxu0 0.0
      %2331 = vmatpush2.xpose.msra.mxu0 0.0
      %2332 = vmatprep.mubr.f32.mxu0 0.0
      %2333 = vmatmul.mubr.f32.gmra.mxu0 %v2264
      %v2334 = vpop.f32.mrf.mxu0
      %v2335 = vadd.f32 %v598, %v2334
      %v2336 = vpop.f32.mrf.mxu0
      %2337 = vdwg.mxu0
      %v2338 = vsel %vm685, %v2335, -inf
      %2339 = vmax.xlane.f32.xlu0 %v2338
      %v2340 = vpop.xlane.xlu0 %2339
      %v2341 = vsub.f32 %v2335, %v2340
      %v2342 = vmul.f32 %v2341, 1.442695
      %v2343 = vpow.pop %v2342
      %v2344 = vsel %vm685, %v2343, 0.0
      %2345 = vadd.xlane.f32.xlu0 %v2344
      %v2346 = vpop.xlane.xlu0 %2345
      %v2347 = vrcp.pop %v2346
      %v2348 = vmul.f32 %v2343, %v2347
      %2349 = vrot.lane.b32.xlu0 %v1752, 40
      %v2350 = vpop.permute.xlu0 %2349
      %v2353 = vsel %vm685, %v2348, 0
      %2355 = vmatprep.subr.mxu0 0.0
      %2356 = vmatpush1.msra.mxu0 0.0
      %2357 = vmatprep.subr.mxu0 0.0
      %2358 = vmatpush1.msra.mxu0 0.0
      %2359 = vmatprep.subr.mxu0 0.0
      %2360 = vmatpush1.msra.mxu0 0.0
      %2361 = vmatprep.subr.mxu0 0.0
      %2362 = vmatpush1.msra.mxu0 0.0
      %2363 = vmatprep.subr.mxu0 0.0
      %2364 = vmatpush1.msra.mxu0 0.0
      %2365 = vmatprep.subr.mxu0 0.0
      %2366 = vmatpush1.msra.mxu0 0.0
      %2367 = vmatprep.subr.mxu0 0.0
      %2368 = vmatpush1.msra.mxu0 0.0
      %2369 = vmatprep.subr.mxu0 0.0
      %2370 = vmatpush1.msra.mxu0 0.0
      %2371 = vmatprep.subr.mxu0 0.0
      %2372 = vmatpush1.msra.mxu0 0.0
      %2373 = vmatprep.subr.mxu0 0.0
      %2374 = vmatpush1.msra.mxu0 0.0
      %2375 = vmatprep.subr.mxu0 0.0
      %2376 = vmatpush1.msra.mxu0 0.0
      %2377 = vmatprep.subr.mxu0 0.0
      %2378 = vmatpush1.msra.mxu0 0.0
      %2379 = vmatprep.subr.mxu0 0.0
      %2380 = vmatpush1.msra.mxu0 0.0
      %2381 = vmatprep.subr.mxu0 0.0
      %2382 = vmatpush1.msra.mxu0 0.0
      %2383 = vmatprep.subr.mxu0 0.0
      %2384 = vmatpush1.msra.mxu0 0.0
      %2385 = vmatprep.subr.mxu0 0.0
      %2386 = vmatpush1.msra.mxu0 %v2350
      %2387 = vmatprep.subr.mxu0 0.0
      %2388 = vmatpush2.msra.mxu0 0.0
      %2389 = vmatprep.subr.mxu0 0.0
      %2390 = vmatpush2.msra.mxu0 0.0
      %2391 = vmatprep.subr.mxu0 0.0
      %2392 = vmatpush2.msra.mxu0 0.0
      %2393 = vmatprep.subr.mxu0 0.0
      %2394 = vmatpush2.msra.mxu0 0.0
      %2395 = vmatprep.subr.mxu0 0.0
      %2396 = vmatpush2.msra.mxu0 0.0
      %2397 = vmatprep.subr.mxu0 0.0
      %2398 = vmatpush2.msra.mxu0 0.0
      %2399 = vmatprep.subr.mxu0 0.0
      %2400 = vmatpush2.msra.mxu0 0.0
      %2401 = vmatprep.subr.mxu0 0.0
      %2402 = vmatpush2.msra.mxu0 0.0
      %2403 = vmatprep.subr.mxu0 0.0
      %2404 = vmatpush2.msra.mxu0 0.0
      %2405 = vmatprep.subr.mxu0 0.0
      %2406 = vmatpush2.msra.mxu0 0.0
      %2407 = vmatprep.subr.mxu0 0.0
      %2408 = vmatpush2.msra.mxu0 0.0
      %2409 = vmatprep.subr.mxu0 0.0
      %2410 = vmatpush2.msra.mxu0 0.0
      %2411 = vmatprep.subr.mxu0 0.0
      %2412 = vmatpush2.msra.mxu0 0.0
      %2413 = vmatprep.subr.mxu0 0.0
      %2414 = vmatpush2.msra.mxu0 0.0
      %2415 = vmatprep.subr.mxu0 0.0
      %2416 = vmatpush2.msra.mxu0 0.0
      %2417 = vmatprep.subr.mxu0 0.0
      %2418 = vmatpush2.msra.mxu0 0.0
      %2419 = vmatprep.mubr.f32.mxu0 0.0
      %2420 = vmatmul.mubr.f32.gmra.mxu0 %v2353
      %v2421 = vpop.f32.mrf.mxu0
      %v2422 = vadd.f32 0.0, %v2421
      %v2423 = vpop.f32.mrf.mxu0
      %2424 = vdwg.mxu0
      %2426 = vrot.lane.b32.xlu0 %v2422, 24
      %v2427 = vpop.permute.xlu0 %2426
      %2429 = vst.msk [vmem:[#allocation2] sm:$0xff] %vm1359, %v2427
      %v2430 = vld [vmem:[#allocation2] sm:$0xff]
      %s2431 = scalar_lea.vmem %s7, 32
      %v2432 = vld [vmem:[%s2431] sm:$0xff]
      %v2433 = vld [vmem:[%s2431 + $0x8] sm:$0xff]
      %v2434 = vld [vmem:[%s2431 + $0x10] sm:$0xff]
      %v2435 = vld [vmem:[%s2431 + $0x18] sm:$0xff]
      %v2436 = vld [vmem:[%s8 + $0x1] sm:$0x1]
      %v2437 = vlaneseq
      %v2438 = vshrl.u32 %v2437, 7
      %v2439 = vsub.s32 0, %v2438
      %v2440 = vrot.slane %v2436, %v2439
      %v2442 = vsel %vm608, %v2430, 0
      %2444 = vmatprep.subr.mxu0 0.0
      %2445 = vmatpush1.msra.mxu0 0.0
      %2446 = vmatprep.subr.mxu0 0.0
      %2447 = vmatpush1.msra.mxu0 0.0
      %2448 = vmatprep.subr.mxu0 0.0
      %2449 = vmatpush1.msra.mxu0 0.0
      %2450 = vmatprep.subr.mxu0 0.0
      %2451 = vmatpush1.msra.mxu0 0.0
      %2452 = vmatprep.subr.mxu0 0.0
      %2453 = vmatpush1.msra.mxu0 0.0
      %2454 = vmatprep.subr.mxu0 0.0
      %2455 = vmatpush1.msra.mxu0 0.0
      %2456 = vmatprep.subr.mxu0 0.0
      %2457 = vmatpush1.msra.mxu0 0.0
      %2458 = vmatprep.subr.mxu0 0.0
      %2459 = vmatpush1.msra.mxu0 0.0
      %2460 = vmatprep.subr.mxu0 0.0
      %2461 = vmatpush1.msra.mxu0 0.0
      %2462 = vmatprep.subr.mxu0 0.0
      %2463 = vmatpush1.msra.mxu0 0.0
      %2464 = vmatprep.subr.mxu0 0.0
      %2465 = vmatpush1.msra.mxu0 0.0
      %2466 = vmatprep.subr.mxu0 0.0
      %2467 = vmatpush1.msra.mxu0 0.0
      %2468 = vmatprep.subr.mxu0 0.0
      %2469 = vmatpush1.msra.mxu0 %v2435
      %2470 = vmatprep.subr.mxu0 0.0
      %2471 = vmatpush1.msra.mxu0 %v2434
      %2472 = vmatprep.subr.mxu0 0.0
      %2473 = vmatpush1.msra.mxu0 %v2433
      %2474 = vmatprep.subr.mxu0 0.0
      %2475 = vmatpush1.msra.mxu0 %v2432
      %2476 = vmatprep.subr.mxu0 0.0
      %2477 = vmatpush2.msra.mxu0 0.0
      %2478 = vmatprep.subr.mxu0 0.0
      %2479 = vmatpush2.msra.mxu0 0.0
      %2480 = vmatprep.subr.mxu0 0.0
      %2481 = vmatpush2.msra.mxu0 0.0
      %2482 = vmatprep.subr.mxu0 0.0
      %2483 = vmatpush2.msra.mxu0 0.0
      %2484 = vmatprep.subr.mxu0 0.0
      %2485 = vmatpush2.msra.mxu0 0.0
      %2486 = vmatprep.subr.mxu0 0.0
      %2487 = vmatpush2.msra.mxu0 0.0
      %2488 = vmatprep.subr.mxu0 0.0
      %2489 = vmatpush2.msra.mxu0 0.0
      %2490 = vmatprep.subr.mxu0 0.0
      %2491 = vmatpush2.msra.mxu0 0.0
      %2492 = vmatprep.subr.mxu0 0.0
      %2493 = vmatpush2.msra.mxu0 0.0
      %2494 = vmatprep.subr.mxu0 0.0
      %2495 = vmatpush2.msra.mxu0 0.0
      %2496 = vmatprep.subr.mxu0 0.0
      %2497 = vmatpush2.msra.mxu0 0.0
      %2498 = vmatprep.subr.mxu0 0.0
      %2499 = vmatpush2.msra.mxu0 0.0
      %2500 = vmatprep.subr.mxu0 0.0
      %2501 = vmatpush2.msra.mxu0 0.0
      %2502 = vmatprep.subr.mxu0 0.0
      %2503 = vmatpush2.msra.mxu0 0.0
      %2504 = vmatprep.subr.mxu0 0.0
      %2505 = vmatpush2.msra.mxu0 0.0
      %2506 = vmatprep.subr.mxu0 0.0
      %2507 = vmatpush2.msra.mxu0 0.0
      %2508 = vmatprep.mubr.f32.mxu0 0.0
      %2509 = vmatmul.mubr.f32.gmra.mxu0 %v2442
      %v2510 = vpop.f32.mrf.mxu0
      %v2511 = vadd.f32 %v2440, %v2510
      %v2512 = vpop.f32.mrf.mxu0
      %2513 = vdwg.mxu0
      %s2514 = scalar_lea.vmem %s13, 4
      %v2515 = vld [vmem:[%s2514] sm:$0xf]
      %v2516 = vadd.f32 %v1671, %v2511
      %v2517 = vsel %vm608, %v2516, 0.0
      %2518 = vadd.xlane.f32.xlu0 %v2517
      %v2519 = vpop.xlane.xlu0 %2518
      %v2520 = vmul.f32 %v2519, %v1449
      %v2521 = vsub.f32 %v2516, %v2520
      %v2522 = vmul.f32 %v2521, %v2521
      %v2523 = vsel %vm608, %v2522, 0.0
      %2524 = vadd.xlane.f32.xlu0 %v2523
      %v2525 = vpop.xlane.xlu0 %2524
      %v2526 = vmul.f32 %v2525, %v1449
      %v2527 = vadd.f32 %v2526, 1e-05
      %v2528 = vrsqrt.pop %v2527
      %v2529 = vmul.f32 %v2521, %v2528
      %v2530 = vlaneseq
      %v2531 = vshrl.u32 %v2530, 7
      %v2532 = vsub.s32 0, %v2531
      %v2533 = vrot.slane %v2515, %v2532
      %v2534 = vmul.f32 %v2529, %v2533
      %v2535 = vlaneseq
      %v2536 = vshrl.u32 %v2535, 7
      %v2537 = vsub.s32 1, %v2536
      %v2538 = vrot.slane %v2515, %v2537
      %v2539 = vadd.f32 %v2534, %v2538
      %s2540 = scalar_lea.vmem %s9, 32
      %v2541 = vld [vmem:[%s2540] sm:$0xff]
      %v2542 = vld [vmem:[%s2540 + $0x8] sm:$0xff]
      %v2543 = vld [vmem:[%s2540 + $0x10] sm:$0xff]
      %v2544 = vld [vmem:[%s2540 + $0x18] sm:$0xff]
      %v2545 = vld [vmem:[%s10 + $0x1] sm:$0x1]
      %v2546 = vlaneseq
      %v2547 = vshrl.u32 %v2546, 7
      %v2548 = vsub.s32 0, %v2547
      %v2549 = vrot.slane %v2545, %v2548
      %v2551 = vsel %vm608, %v2539, 0
      %2553 = vmatprep.subr.mxu0 0.0
      %2554 = vmatpush1.msra.mxu0 0.0
      %2555 = vmatprep.subr.mxu0 0.0
      %2556 = vmatpush1.msra.mxu0 0.0
      %2557 = vmatprep.subr.mxu0 0.0
      %2558 = vmatpush1.msra.mxu0 0.0
      %2559 = vmatprep.subr.mxu0 0.0
      %2560 = vmatpush1.msra.mxu0 0.0
      %2561 = vmatprep.subr.mxu0 0.0
      %2562 = vmatpush1.msra.mxu0 0.0
      %2563 = vmatprep.subr.mxu0 0.0
      %2564 = vmatpush1.msra.mxu0 0.0
      %2565 = vmatprep.subr.mxu0 0.0
      %2566 = vmatpush1.msra.mxu0 0.0
      %2567 = vmatprep.subr.mxu0 0.0
      %2568 = vmatpush1.msra.mxu0 0.0
      %2569 = vmatprep.subr.mxu0 0.0
      %2570 = vmatpush1.msra.mxu0 0.0
      %2571 = vmatprep.subr.mxu0 0.0
      %2572 = vmatpush1.msra.mxu0 0.0
      %2573 = vmatprep.subr.mxu0 0.0
      %2574 = vmatpush1.msra.mxu0 0.0
      %2575 = vmatprep.subr.mxu0 0.0
      %2576 = vmatpush1.msra.mxu0 0.0
      %2577 = vmatprep.subr.mxu0 0.0
      %2578 = vmatpush1.msra.mxu0 %v2544
      %2579 = vmatprep.subr.mxu0 0.0
      %2580 = vmatpush1.msra.mxu0 %v2543
      %2581 = vmatprep.subr.mxu0 0.0
      %2582 = vmatpush1.msra.mxu0 %v2542
      %2583 = vmatprep.subr.mxu0 0.0
      %2584 = vmatpush1.msra.mxu0 %v2541
      %2585 = vmatprep.subr.mxu0 0.0
      %2586 = vmatpush2.msra.mxu0 0.0
      %2587 = vmatprep.subr.mxu0 0.0
      %2588 = vmatpush2.msra.mxu0 0.0
      %2589 = vmatprep.subr.mxu0 0.0
      %2590 = vmatpush2.msra.mxu0 0.0
      %2591 = vmatprep.subr.mxu0 0.0
      %2592 = vmatpush2.msra.mxu0 0.0
      %2593 = vmatprep.subr.mxu0 0.0
      %2594 = vmatpush2.msra.mxu0 0.0
      %2595 = vmatprep.subr.mxu0 0.0
      %2596 = vmatpush2.msra.mxu0 0.0
      %2597 = vmatprep.subr.mxu0 0.0
      %2598 = vmatpush2.msra.mxu0 0.0
      %2599 = vmatprep.subr.mxu0 0.0
      %2600 = vmatpush2.msra.mxu0 0.0
      %2601 = vmatprep.subr.mxu0 0.0
      %2602 = vmatpush2.msra.mxu0 0.0
      %2603 = vmatprep.subr.mxu0 0.0
      %2604 = vmatpush2.msra.mxu0 0.0
      %2605 = vmatprep.subr.mxu0 0.0
      %2606 = vmatpush2.msra.mxu0 0.0
      %2607 = vmatprep.subr.mxu0 0.0
      %2608 = vmatpush2.msra.mxu0 0.0
      %2609 = vmatprep.subr.mxu0 0.0
      %2610 = vmatpush2.msra.mxu0 0.0
      %2611 = vmatprep.subr.mxu0 0.0
      %2612 = vmatpush2.msra.mxu0 0.0
      %2613 = vmatprep.subr.mxu0 0.0
      %2614 = vmatpush2.msra.mxu0 0.0
      %2615 = vmatprep.subr.mxu0 0.0
      %2616 = vmatpush2.msra.mxu0 0.0
      %2617 = vmatprep.mubr.f32.mxu0 0.0
      %2618 = vmatmul.mubr.f32.gmra.mxu0 %v2551
      %v2619 = vpop.f32.mrf.mxu0
      %v2620 = vadd.f32 %v2549, %v2619
      %v2621 = vpop.f32.mrf.mxu0
      %2622 = vdwg.mxu0
      %v2623 = vmul.f32 %v2620, 0.5
      %v2624 = vmul.f32 %v2620, 0.044715
      %v2625 = vmul.f32 %v2624, %v2620
      %v2626 = vmul.f32 %v2625, %v2620
      %v2627 = vadd.f32 %v2620, %v2626
      %v2628 = vmul.f32 %v2627, 0.7978846
      %v2629 = vtanh.pop %v2628
      %v2630 = vadd.f32 %v2629, 1.0
      %v2631 = vmul.f32 %v2623, %v2630
      %s2632 = scalar_lea.vmem %s11, 64
      %v2633 = vld [vmem:[%s2632] sm:$0xff]
      %v2634 = vld [vmem:[%s2632 + $0x8] sm:$0xff]
      %v2635 = vld [vmem:[%s2632 + $0x10] sm:$0xff]
      %v2636 = vld [vmem:[%s2632 + $0x18] sm:$0xff]
      %v2637 = vld [vmem:[%s2632 + $0x20] sm:$0xff]
      %v2638 = vld [vmem:[%s2632 + $0x28] sm:$0xff]
      %v2639 = vld [vmem:[%s2632 + $0x30] sm:$0xff]
      %v2640 = vld [vmem:[%s2632 + $0x38] sm:$0xff]
      %v2641 = vld [vmem:[%s12 + $0x1] sm:$0x1]
      %v2642 = vlaneseq
      %v2643 = vshrl.u32 %v2642, 7
      %v2644 = vsub.s32 0, %v2643
      %v2645 = vrot.slane %v2641, %v2644
      %v2647 = vsel %vm1574, %v2631, 0
      %2649 = vmatprep.subr.mxu0 0.0
      %2650 = vmatpush1.msra.mxu0 0.0
      %2651 = vmatprep.subr.mxu0 0.0
      %2652 = vmatpush1.msra.mxu0 0.0
      %2653 = vmatprep.subr.mxu0 0.0
      %2654 = vmatpush1.msra.mxu0 0.0
      %2655 = vmatprep.subr.mxu0 0.0
      %2656 = vmatpush1.msra.mxu0 0.0
      %2657 = vmatprep.subr.mxu0 0.0
      %2658 = vmatpush1.msra.mxu0 0.0
      %2659 = vmatprep.subr.mxu0 0.0
      %2660 = vmatpush1.msra.mxu0 0.0
      %2661 = vmatprep.subr.mxu0 0.0
      %2662 = vmatpush1.msra.mxu0 0.0
      %2663 = vmatprep.subr.mxu0 0.0
      %2664 = vmatpush1.msra.mxu0 0.0
      %2665 = vmatprep.subr.mxu0 0.0
      %2666 = vmatpush1.msra.mxu0 %v2640
      %2667 = vmatprep.subr.mxu0 0.0
      %2668 = vmatpush1.msra.mxu0 %v2639
      %2669 = vmatprep.subr.mxu0 0.0
      %2670 = vmatpush1.msra.mxu0 %v2638
      %2671 = vmatprep.subr.mxu0 0.0
      %2672 = vmatpush1.msra.mxu0 %v2637
      %2673 = vmatprep.subr.mxu0 0.0
      %2674 = vmatpush1.msra.mxu0 %v2636
      %2675 = vmatprep.subr.mxu0 0.0
      %2676 = vmatpush1.msra.mxu0 %v2635
      %2677 = vmatprep.subr.mxu0 0.0
      %2678 = vmatpush1.msra.mxu0 %v2634
      %2679 = vmatprep.subr.mxu0 0.0
      %2680 = vmatpush1.msra.mxu0 %v2633
      %2681 = vmatprep.subr.mxu0 0.0
      %2682 = vmatpush2.msra.mxu0 0.0
      %2683 = vmatprep.subr.mxu0 0.0
      %2684 = vmatpush2.msra.mxu0 0.0
      %2685 = vmatprep.subr.mxu0 0.0
      %2686 = vmatpush2.msra.mxu0 0.0
      %2687 = vmatprep.subr.mxu0 0.0
      %2688 = vmatpush2.msra.mxu0 0.0
      %2689 = vmatprep.subr.mxu0 0.0
      %2690 = vmatpush2.msra.mxu0 0.0
      %2691 = vmatprep.subr.mxu0 0.0
      %2692 = vmatpush2.msra.mxu0 0.0
      %2693 = vmatprep.subr.mxu0 0.0
      %2694 = vmatpush2.msra.mxu0 0.0
      %2695 = vmatprep.subr.mxu0 0.0
      %2696 = vmatpush2.msra.mxu0 0.0
      %2697 = vmatprep.subr.mxu0 0.0
      %2698 = vmatpush2.msra.mxu0 0.0
      %2699 = vmatprep.subr.mxu0 0.0
      %2700 = vmatpush2.msra.mxu0 0.0
      %2701 = vmatprep.subr.mxu0 0.0
      %2702 = vmatpush2.msra.mxu0 0.0
      %2703 = vmatprep.subr.mxu0 0.0
      %2704 = vmatpush2.msra.mxu0 0.0
      %2705 = vmatprep.subr.mxu0 0.0
      %2706 = vmatpush2.msra.mxu0 0.0
      %2707 = vmatprep.subr.mxu0 0.0
      %2708 = vmatpush2.msra.mxu0 0.0
      %2709 = vmatprep.subr.mxu0 0.0
      %2710 = vmatpush2.msra.mxu0 0.0
      %2711 = vmatprep.subr.mxu0 0.0
      %2712 = vmatpush2.msra.mxu0 0.0
      %2713 = vmatprep.mubr.f32.mxu0 0.0
      %2714 = vmatmul.mubr.f32.gmra.mxu0 %v2647
      %v2715 = vpop.f32.mrf.mxu0
      %v2716 = vadd.f32 %v2645, %v2715
      %v2717 = vpop.f32.mrf.mxu0
      %2718 = vdwg.mxu0
      %v2719 = vadd.f32 %v2539, %v2716
      %v2720 = vsel %vm608, %v2719, 0.0
      %2721 = vadd.xlane.f32.xlu0 %v2720
      %v2722 = vpop.xlane.xlu0 %2721
      %v2723 = vmul.f32 %v2722, %v1449
      %v2724 = vsub.f32 %v2719, %v2723
      %v2725 = vmul.f32 %v2724, %v2724
      %v2726 = vsel %vm608, %v2725, 0.0
      %2727 = vadd.xlane.f32.xlu0 %v2726
      %v2728 = vpop.xlane.xlu0 %2727
      %v2729 = vmul.f32 %v2728, %v1449
      %v2730 = vadd.f32 %v2729, 1e-05
      %v2731 = vrsqrt.pop %v2730
      %v2732 = vmul.f32 %v2724, %v2731
      %v2733 = vlaneseq
      %v2734 = vshrl.u32 %v2733, 7
      %v2735 = vsub.s32 2, %v2734
      %v2736 = vrot.slane %v2515, %v2735
      %v2737 = vmul.f32 %v2732, %v2736
      %v2738 = vlaneseq
      %v2739 = vshrl.u32 %v2738, 7
      %v2740 = vsub.s32 3, %v2739
      %v2741 = vrot.slane %v2515, %v2740
      %v2742 = vadd.f32 %v2737, %v2741
      %v2743 = vld [vmem:[%s14] sm:$0x3]
      %v2744 = vsel %vm608, %v2742, 0.0
      %2745 = vadd.xlane.f32.xlu0 %v2744
      %v2746 = vpop.xlane.xlu0 %2745
      %v2747 = vmul.f32 %v2746, %v1449
      %v2748 = vsub.f32 %v2742, %v2747
      %v2749 = vmul.f32 %v2748, %v2748
      %v2750 = vsel %vm608, %v2749, 0.0
      %2751 = vadd.xlane.f32.xlu0 %v2750
      %v2752 = vpop.xlane.xlu0 %2751
      %v2753 = vmul.f32 %v2752, %v1449
      %v2754 = vadd.f32 %v2753, 1e-05
      %v2755 = vrsqrt.pop %v2754
      %v2756 = vmul.f32 %v2748, %v2755
      %v2757 = vlaneseq
      %v2758 = vshrl.u32 %v2757, 7
      %v2759 = vsub.s32 0, %v2758
      %v2760 = vrot.slane %v2743, %v2759
      %v2761 = vmul.f32 %v2756, %v2760
      %v2762 = vlaneseq
      %v2763 = vshrl.u32 %v2762, 7
      %v2764 = vsub.s32 1, %v2763
      %v2765 = vrot.slane %v2743, %v2764
      %v2766 = vadd.f32 %v2761, %v2765
      %v2767 = vld [vmem:[%s15] sm:$0xf]
      %v2768 = vlaneseq
      %v2769 = vshrl.u32 %v2768, 7
      %v2770 = vsub.s32 0, %v2769
      %v2771 = vrot.slane %v2767, %v2770
      %v2772 = vmul.f32 %v2766, %v2771
      %v2773 = vld [vmem:[%s584] sm:$0xff]
      %v2774 = vlaneseq
      %v2775 = vshrl.u32 %v2774, 7
      %v2776 = vsub.s32 1, %v2775
      %v2777 = vrot.slane %v2767, %v2776
      %v2778 = vmul.f32 %v2773, %v2777
      %v2779 = vadd.f32 %v2772, %v2778
      %v2780 = vld [vmem:[%s588] sm:$0xff]
      %v2781 = vlaneseq
      %v2782 = vshrl.u32 %v2781, 7
      %v2783 = vsub.s32 2, %v2782
      %v2784 = vrot.slane %v2767, %v2783
      %v2785 = vmul.f32 %v2780, %v2784
      %v2786 = vadd.f32 %v2779, %v2785
      %v2787 = vld [vmem:[%s592] sm:$0xff]
      %v2788 = vlaneseq
      %v2789 = vshrl.u32 %v2788, 7
      %v2790 = vsub.s32 3, %v2789
      %v2791 = vrot.slane %v2767, %v2790
      %v2792 = vmul.f32 %v2787, %v2791
      %v2793 = vadd.f32 %v2786, %v2792
      %v2794 = vsel %vm608, %v2793, 0.0
      %2795 = vadd.xlane.f32.xlu0 %v2794
      %v2796 = vpop.xlane.xlu0 %2795
      %v2797 = vld [vmem:[#allocation3] sm:$0x1]
      %v2799 = vlaneseq
      %v2800 = vshrl.u32 %v2799, 7
      %v2801 = vsub.s32 0, %v2800
      %v2802 = vrot.slane %v2797, %v2801
      %v2804 = vadd.f32 %v2796, %v2802
      %2806 = vset.pattern.permute.xlu0 0
      %2807 = vperm.xlu0 %2806, %v2804
      %v2808 = vpop.permute.xlu0 %2807
      %2810 = vst [vmem:[%s596] sm:$0xff] %v2808
      %p2811 = scmp.lt.s32.totalorder %s30, 1
      %s2812 = scalar_select %p2811, %s30, 1
      %s2813 = smul.addr %s2812, 8
      %s2814 = scalar_lea.vmem %s17, %s2813
      // Predicated region
      $region89: #{student_initiative_discriminator.1} parent=87 // pred_check
        %p2815 = pneg %p425
      $region90: #{student_initiative_discriminator.1} parent=87 // pred_check_branch
        %2817 = sbr.rel (%p2815) target = $region92
      $region91: #{student_initiative_discriminator.1} parent=87 // pred_region
        _
      $region92: #{student_initiative_discriminator.1} parent=87 // pred_fallthru
        _
    $region88: #{student_initiative_discriminator.1} parent=5 // pred_fallthru
      _
    %p2818 = scmp.le.s32.totalorder 2, %s25
    // Predicated region
    $region93: #{student_initiative_discriminator.1} parent=5 // pred_check
      %p2819 = pneg %p2818
    $region94: #{student_initiative_discriminator.1} parent=5 // pred_check_branch
      %2821 = sbr.rel (%p2819) target = $region96
    $region95: #{student_initiative_discriminator.1} parent=5 // pred_region
      %s2822 = ssub.s32 %s25, 2
      // Predicated region
      $region97: #{student_initiative_discriminator.1} parent=95 // pred_check
        %p2823 = pneg %p431
      $region98: #{student_initiative_discriminator.1} parent=95 // pred_check_branch
        %2825 = sbr.rel (%p2823) target = $region100
      $region99: #{student_initiative_discriminator.1} parent=95 // pred_region
        %p2826 = scmp.lt.s32.totalorder %s31, 1
        %s2827 = scalar_select %p2826, %s31, 1
        %s2828 = smul.addr %s2827, 8
        %s2829 = scalar_lea.vmem %s17, %s2828
      $region100: #{student_initiative_discriminator.1} parent=95 // pred_fallthru
        _
    $region96: #{student_initiative_discriminator.1} parent=5 // pred_fallthru
      _
  $region6: #{student_initiative_discriminator.1} parent=0 // loop_footer
    %s29 = sadd.s32 1, %s25
  $region7: #{student_initiative_discriminator.1} parent=0 // loop_footer_branch
    %24 = sbr.rel target = $region3
  $region8: #{student_initiative_discriminator.1} parent=0 // loop_exit
    _

</llo_original>
